<compile_context>
chip_gen: v7x
topology: tpu7x:2x2x1
jax: 0.10.0
libtpu: 0.0.40
codegen_flags: <defaults>
</compile_context>

<pallas_src>
import jax
import jax.numpy as jnp
from jax import lax
from jax.experimental import pallas as pl
from jax.experimental.pallas import tpu as pltpu

N_TAPS = 25        # 5x5 conv kernel taps
N_CH = 5           # conv output channels
N_PIX = 196        # 14x14 conv output pixels
HIDDEN_PAD = 128   # fc1 hidden 100 -> 128 (lane-dense)
OUT_PAD = 128      # logits 10 -> 128 (lane-dense)


def _round_up(x, m):
    return (x + m - 1) // m * m


# --------------------------------------------------------------------------
# Pallas kernel: conv + square + fc1 + square + fc2 for TB images per step
# --------------------------------------------------------------------------
def ebasenet_kernel(p_ref, cw_ref, cb_ref, w1_ref, b1_ref, w2_ref, b2_ref, o_ref):
    # p_ref : [25, TB, 196]   im2col patches, tap-major (k = dh*5+dw)
    # cw_ref: [5, 25]  (SMEM) conv weight scalars
    # cb_ref: [5]      (SMEM) conv bias scalars
    # w1_ref: [5, 196, 128]   fc1 weight, channel-blocked, zero-padded 100->128
    # b1_ref: [1, 128]        fc1 bias (zero-padded)
    # w2_ref: [128, 128]      fc2 weight (zero-padded rows 100: and cols 10:)
    # b2_ref: [1, 128]        fc2 bias (zero-padded)
    # o_ref : [TB, 128]       padded logits
    tb = p_ref.shape[1]

    # fc1 bias, hoisted once (broadcast_in_dim is not CSE'd inside loops).
    h = jnp.broadcast_to(b1_ref[...], (tb, HIDDEN_PAD)).astype(jnp.float32)

    # Conv2d(1,5,5,2,2) + Square() + Linear(980,100), channel by channel.
    # Only one [TB,196] accumulator (32 vregs) is live at a time.
    for c in range(N_CH):                          # static, unrolled
        acc = cw_ref[c, 0] * p_ref[0]              # [TB, 196]
        for k in range(1, N_TAPS):                 # static, unrolled
            acc = acc + cw_ref[c, k] * p_ref[k]
        acc = acc + cb_ref[c]                      # conv bias
        acc = acc * acc                            # Square()
        # Batch on the MXU M dim, lane-dense N=128, f32 accumulation.
        h = h + jnp.dot(acc, w1_ref[c], preferred_element_type=jnp.float32)

    h = h * h                                      # Square()

    # Linear(100, 10), padded to 128 lanes -> single unmasked store.
    o_ref[...] = (jnp.dot(h, w2_ref[...], preferred_element_type=jnp.float32)
                  + b2_ref[...])


# --------------------------------------------------------------------------
# Wrapper: im2col + parameter padding/reshapes + pallas_call
# --------------------------------------------------------------------------
def ebasenet_forward(x, conv_w, conv_b, w1, b1, w2, b2, *, tb=128):
    """x: [B, 1, 28, 28] float32 (NCHW).  Returns logits [B, 10]."""
    B = x.shape[0]
    assert x.shape[1:] == (1, 28, 28)

    TB = min(tb, _round_up(B, 8))          # images per grid step (mult. of 8)
    Bp = _round_up(B, TB)                  # padded batch
    grid = (Bp // TB,)

    # ---- glue: im2col (pad=2, stride=2, k=5 -> 14x14 output), tap-major ----
    x_pad = jnp.pad(x, ((0, 0), (0, 0), (2, 2), (2, 2)))            # [B,1,32,32]
    cols = []
    for dh in range(5):
        for dw in range(5):
            sl = x_pad[:, 0, dh:dh + 28:2, dw:dw + 28:2]            # [B,14,14]
            cols.append(sl.reshape(B, N_PIX))
    patches = jnp.stack(cols, axis=0)                               # [25,B,196]
    patches = jnp.pad(patches, ((0, 0), (0, Bp - B), (0, 0)))       # [25,Bp,196]

    # ---- glue: parameter reshapes / lane padding ---------------------------
    cw = conv_w.reshape(N_CH, N_TAPS).astype(jnp.float32)           # [5,25]
    cb = conv_b.astype(jnp.float32)                                 # [5]
    w1p = jnp.pad(w1.reshape(N_CH, N_PIX, 100),
                  ((0, 0), (0, 0), (0, HIDDEN_PAD - 100)))          # [5,196,128]
    b1p = jnp.pad(b1, (0, HIDDEN_PAD - 100)).reshape(1, HIDDEN_PAD)
    w2p = jnp.pad(w2, ((0, HIDDEN_PAD - 100), (0, OUT_PAD - 10)))   # [128,128]
    b2p = jnp.pad(b2, (0, OUT_PAD - 10)).reshape(1, OUT_PAD)

    out_pad = pl.pallas_call(
        ebasenet_kernel,
        out_shape=jax.ShapeDtypeStruct((Bp, OUT_PAD), jnp.float32),
        grid_spec=pltpu.PrefetchScalarGridSpec(
            num_scalar_prefetch=0,
            grid=grid,
            in_specs=[
                # batch-tiled patches (only per-step streaming input)
                pl.BlockSpec((N_TAPS, TB, N_PIX), lambda i: (0, i, 0)),
                # conv scalars live in SMEM
                pl.BlockSpec(memory_space=pltpu.MemorySpace.SMEM),   # cw
                pl.BlockSpec(memory_space=pltpu.MemorySpace.SMEM),   # cb
                # weights: constant index maps -> fetched once, stay resident
                pl.BlockSpec((N_CH, N_PIX, HIDDEN_PAD), lambda i: (0, 0, 0)),
                pl.BlockSpec((1, HIDDEN_PAD), lambda i: (0, 0)),
                pl.BlockSpec((HIDDEN_PAD, OUT_PAD), lambda i: (0, 0)),
                pl.BlockSpec((1, OUT_PAD), lambda i: (0, 0)),
            ],
            out_specs=pl.BlockSpec((TB, OUT_PAD), lambda i: (i, 0)),
        ),
        compiler_params=pltpu.CompilerParams(
            dimension_semantics=("parallel",)),   # megacore-shards the batch
    )(patches, cw, cb, w1p, b1p, w2p, b2p)

    return out_pad[:B, :10]


# --------------------------------------------------------------------------
# Pure-JAX reference (independent path via lax.conv) for correctness check
# --------------------------------------------------------------------------
def ebasenet_reference(x, conv_w, conv_b, w1, b1, w2, b2):
    conv = lax.conv_general_dilated(
        x, conv_w, window_strides=(2, 2), padding=((2, 2), (2, 2)),
        dimension_numbers=("NCHW", "OIHW", "NCHW"))
    conv = conv + conv_b.reshape(1, 5, 1, 1)
    conv = conv * conv
    flat = conv.reshape(x.shape[0], 980)
    h = flat @ w1 + b1
    h = h * h
    return h @ w2 + b2


if __name__ == "__main__":
    key = jax.random.PRNGKey(0)
    k_x, k_cw, k_cb, k_w1, k_b1, k_w2, k_b2 = jax.random.split(key, 7)

    B = 20   # small batch; TB=8 -> grid of 3 tiles, exercises batch padding
    x = jax.random.normal(k_x, (B, 1, 28, 28), dtype=jnp.float32)

    # Deterministic synthetic parameters (shapes from the PyTorch __init__).
    conv_w = jax.random.normal(k_cw, (5, 1, 5, 5), dtype=jnp.float32) * 0.2
    conv_b = jax.random.normal(k_cb, (5,), dtype=jnp.float32) * 0.1
    w1 = jax.random.normal(k_w1, (980, 100), dtype=jnp.float32) * 0.03  # Linear(980,100).weight.T
    b1 = jax.random.normal(k_b1, (100,), dtype=jnp.float32) * 0.03
    w2 = jax.random.normal(k_w2, (100, 10), dtype=jnp.float32) * 0.1    # Linear(100,10).weight.T
    b2 = jax.random.normal(k_b2, (10,), dtype=jnp.float32) * 0.1

    # jit the wrapper so the im2col / padding glue fuses into one HBM pass.
    fwd = jax.jit(lambda *a: ebasenet_forward(*a, tb=8))
    out = fwd(x, conv_w, conv_b, w1, b1, w2, b2)
    out = jax.block_until_ready(out)

    ref = ebasenet_reference(x, conv_w, conv_b, w1, b1, w2, b2)
    assert out.shape == (B, 10)
    assert jnp.allclose(out, ref, atol=1e-3, rtol=1e-3), (out, ref)

    print("KERNEL_OK")
</pallas_src>

<mosaic_0001>
module attributes {stable_mosaic.version = 11 : i64} {
  func.func @ebasenet_kernel(%arg0: i32, %arg1: memref<25x8x196xf32, #tpu.memory_space<vmem>>, %arg2: memref<5x25xf32, #tpu.memory_space<smem>>, %arg3: memref<5xf32, #tpu.memory_space<smem>>, %arg4: memref<5x196x128xf32, #tpu.memory_space<vmem>>, %arg5: memref<1x128xf32, #tpu.memory_space<vmem>>, %arg6: memref<128x128xf32, #tpu.memory_space<vmem>>, %arg7: memref<1x128xf32, #tpu.memory_space<vmem>>, %arg8: memref<8x128xf32, #tpu.memory_space<vmem>>) attributes {dimension_semantics = [#tpu.dimension_semantics<parallel>], iteration_bounds = array<i64: 3>, scalar_prefetch = 0 : i64, scratch_operands = 0 : i64, tpu.core_type = #tpu.core_type<tc>, window_params = [{transform_indices = @transform_0, window_bounds = array<i64: 25, 8, 196>}, {transform_indices = @transform_1, window_bounds = array<i64: 5, 25>}, {transform_indices = @transform_2, window_bounds = array<i64: 5>}, {pipeline_mode = #tpu.pipeline_mode<synchronous>, transform_indices = @transform_3, window_bounds = array<i64: 5, 196, 128>}, {pipeline_mode = #tpu.pipeline_mode<synchronous>, transform_indices = @transform_4, window_bounds = array<i64: 1, 128>}, {pipeline_mode = #tpu.pipeline_mode<synchronous>, transform_indices = @transform_5, window_bounds = array<i64: 128, 128>}, {pipeline_mode = #tpu.pipeline_mode<synchronous>, transform_indices = @transform_6, window_bounds = array<i64: 1, 128>}, {transform_indices = @transform_7, window_bounds = array<i64: 8, 128>}]} {
    %c0 = arith.constant 0 : index
    %c0_0 = arith.constant 0 : index
    %0 = vector.load %arg5[%c0, %c0_0] : memref<1x128xf32, #tpu.memory_space<vmem>>, vector<1x128xf32>
    %1 = vector.shape_cast %0 : vector<1x128xf32> to vector<1x128xf32>
    %2 = vector.broadcast %1 : vector<1x128xf32> to vector<8x128xf32>
    %c0_1 = arith.constant 0 : index
    %c0_2 = arith.constant 0 : index
    %3 = memref.load %arg2[%c0_1, %c0_2] : memref<5x25xf32, #tpu.memory_space<smem>>
    %c0_3 = arith.constant 0 : index
    %c0_4 = arith.constant 0 : index
    %c0_5 = arith.constant 0 : index
    %4 = vector.load %arg1[%c0_3, %c0_4, %c0_5] : memref<25x8x196xf32, #tpu.memory_space<vmem>>, vector<1x8x196xf32>
    %5 = vector.shape_cast %4 : vector<1x8x196xf32> to vector<8x196xf32>
    %6 = vector.broadcast %3 : f32 to vector<8x196xf32>
    %7 = arith.mulf %6, %5 : vector<8x196xf32>
    %c0_6 = arith.constant 0 : index
    %c1 = arith.constant 1 : index
    %8 = memref.load %arg2[%c0_6, %c1] : memref<5x25xf32, #tpu.memory_space<smem>>
    %c1_7 = arith.constant 1 : index
    %c0_8 = arith.constant 0 : index
    %c0_9 = arith.constant 0 : index
    %9 = vector.load %arg1[%c1_7, %c0_8, %c0_9] : memref<25x8x196xf32, #tpu.memory_space<vmem>>, vector<1x8x196xf32>
    %10 = vector.shape_cast %9 : vector<1x8x196xf32> to vector<8x196xf32>
    %11 = vector.broadcast %8 : f32 to vector<8x196xf32>
    %12 = arith.mulf %11, %10 : vector<8x196xf32>
    %13 = arith.addf %7, %12 : vector<8x196xf32>
    %c0_10 = arith.constant 0 : index
    %c2 = arith.constant 2 : index
    %14 = memref.load %arg2[%c0_10, %c2] : memref<5x25xf32, #tpu.memory_space<smem>>
    %c2_11 = arith.constant 2 : index
    %c0_12 = arith.constant 0 : index
    %c0_13 = arith.constant 0 : index
    %15 = vector.load %arg1[%c2_11, %c0_12, %c0_13] : memref<25x8x196xf32, #tpu.memory_space<vmem>>, vector<1x8x196xf32>
    %16 = vector.shape_cast %15 : vector<1x8x196xf32> to vector<8x196xf32>
    %17 = vector.broadcast %14 : f32 to vector<8x196xf32>
    %18 = arith.mulf %17, %16 : vector<8x196xf32>
    %19 = arith.addf %13, %18 : vector<8x196xf32>
    %c0_14 = arith.constant 0 : index
    %c3 = arith.constant 3 : index
    %20 = memref.load %arg2[%c0_14, %c3] : memref<5x25xf32, #tpu.memory_space<smem>>
    %c3_15 = arith.constant 3 : index
    %c0_16 = arith.constant 0 : index
    %c0_17 = arith.constant 0 : index
    %21 = vector.load %arg1[%c3_15, %c0_16, %c0_17] : memref<25x8x196xf32, #tpu.memory_space<vmem>>, vector<1x8x196xf32>
    %22 = vector.shape_cast %21 : vector<1x8x196xf32> to vector<8x196xf32>
    %23 = vector.broadcast %20 : f32 to vector<8x196xf32>
    %24 = arith.mulf %23, %22 : vector<8x196xf32>
    %25 = arith.addf %19, %24 : vector<8x196xf32>
    %c0_18 = arith.constant 0 : index
    %c4 = arith.constant 4 : index
    %26 = memref.load %arg2[%c0_18, %c4] : memref<5x25xf32, #tpu.memory_space<smem>>
    %c4_19 = arith.constant 4 : index
    %c0_20 = arith.constant 0 : index
    %c0_21 = arith.constant 0 : index
    %27 = vector.load %arg1[%c4_19, %c0_20, %c0_21] : memref<25x8x196xf32, #tpu.memory_space<vmem>>, vector<1x8x196xf32>
    %28 = vector.shape_cast %27 : vector<1x8x196xf32> to vector<8x196xf32>
    %29 = vector.broadcast %26 : f32 to vector<8x196xf32>
    %30 = arith.mulf %29, %28 : vector<8x196xf32>
    %31 = arith.addf %25, %30 : vector<8x196xf32>
    %c0_22 = arith.constant 0 : index
    %c5 = arith.constant 5 : index
    %32 = memref.load %arg2[%c0_22, %c5] : memref<5x25xf32, #tpu.memory_space<smem>>
    %c5_23 = arith.constant 5 : index
    %c0_24 = arith.constant 0 : index
    %c0_25 = arith.constant 0 : index
    %33 = vector.load %arg1[%c5_23, %c0_24, %c0_25] : memref<25x8x196xf32, #tpu.memory_space<vmem>>, vector<1x8x196xf32>
    %34 = vector.shape_cast %33 : vector<1x8x196xf32> to vector<8x196xf32>
    %35 = vector.broadcast %32 : f32 to vector<8x196xf32>
    %36 = arith.mulf %35, %34 : vector<8x196xf32>
    %37 = arith.addf %31, %36 : vector<8x196xf32>
    %c0_26 = arith.constant 0 : index
    %c6 = arith.constant 6 : index
    %38 = memref.load %arg2[%c0_26, %c6] : memref<5x25xf32, #tpu.memory_space<smem>>
    %c6_27 = arith.constant 6 : index
    %c0_28 = arith.constant 0 : index
    %c0_29 = arith.constant 0 : index
    %39 = vector.load %arg1[%c6_27, %c0_28, %c0_29] : memref<25x8x196xf32, #tpu.memory_space<vmem>>, vector<1x8x196xf32>
    %40 = vector.shape_cast %39 : vector<1x8x196xf32> to vector<8x196xf32>
    %41 = vector.broadcast %38 : f32 to vector<8x196xf32>
    %42 = arith.mulf %41, %40 : vector<8x196xf32>
    %43 = arith.addf %37, %42 : vector<8x196xf32>
    %c0_30 = arith.constant 0 : index
    %c7 = arith.constant 7 : index
    %44 = memref.load %arg2[%c0_30, %c7] : memref<5x25xf32, #tpu.memory_space<smem>>
    %c7_31 = arith.constant 7 : index
    %c0_32 = arith.constant 0 : index
    %c0_33 = arith.constant 0 : index
    %45 = vector.load %arg1[%c7_31, %c0_32, %c0_33] : memref<25x8x196xf32, #tpu.memory_space<vmem>>, vector<1x8x196xf32>
    %46 = vector.shape_cast %45 : vector<1x8x196xf32> to vector<8x196xf32>
    %47 = vector.broadcast %44 : f32 to vector<8x196xf32>
    %48 = arith.mulf %47, %46 : vector<8x196xf32>
    %49 = arith.addf %43, %48 : vector<8x196xf32>
    %c0_34 = arith.constant 0 : index
    %c8 = arith.constant 8 : index
    %50 = memref.load %arg2[%c0_34, %c8] : memref<5x25xf32, #tpu.memory_space<smem>>
    %c8_35 = arith.constant 8 : index
    %c0_36 = arith.constant 0 : index
    %c0_37 = arith.constant 0 : index
    %51 = vector.load %arg1[%c8_35, %c0_36, %c0_37] : memref<25x8x196xf32, #tpu.memory_space<vmem>>, vector<1x8x196xf32>
    %52 = vector.shape_cast %51 : vector<1x8x196xf32> to vector<8x196xf32>
    %53 = vector.broadcast %50 : f32 to vector<8x196xf32>
    %54 = arith.mulf %53, %52 : vector<8x196xf32>
    %55 = arith.addf %49, %54 : vector<8x196xf32>
    %c0_38 = arith.constant 0 : index
    %c9 = arith.constant 9 : index
    %56 = memref.load %arg2[%c0_38, %c9] : memref<5x25xf32, #tpu.memory_space<smem>>
    %c9_39 = arith.constant 9 : index
    %c0_40 = arith.constant 0 : index
    %c0_41 = arith.constant 0 : index
    %57 = vector.load %arg1[%c9_39, %c0_40, %c0_41] : memref<25x8x196xf32, #tpu.memory_space<vmem>>, vector<1x8x196xf32>
    %58 = vector.shape_cast %57 : vector<1x8x196xf32> to vector<8x196xf32>
    %59 = vector.broadcast %56 : f32 to vector<8x196xf32>
    %60 = arith.mulf %59, %58 : vector<8x196xf32>
    %61 = arith.addf %55, %60 : vector<8x196xf32>
    %c0_42 = arith.constant 0 : index
    %c10 = arith.constant 10 : index
    %62 = memref.load %arg2[%c0_42, %c10] : memref<5x25xf32, #tpu.memory_space<smem>>
    %c10_43 = arith.constant 10 : index
    %c0_44 = arith.constant 0 : index
    %c0_45 = arith.constant 0 : index
    %63 = vector.load %arg1[%c10_43, %c0_44, %c0_45] : memref<25x8x196xf32, #tpu.memory_space<vmem>>, vector<1x8x196xf32>
    %64 = vector.shape_cast %63 : vector<1x8x196xf32> to vector<8x196xf32>
    %65 = vector.broadcast %62 : f32 to vector<8x196xf32>
    %66 = arith.mulf %65, %64 : vector<8x196xf32>
    %67 = arith.addf %61, %66 : vector<8x196xf32>
    %c0_46 = arith.constant 0 : index
    %c11 = arith.constant 11 : index
    %68 = memref.load %arg2[%c0_46, %c11] : memref<5x25xf32, #tpu.memory_space<smem>>
    %c11_47 = arith.constant 11 : index
    %c0_48 = arith.constant 0 : index
    %c0_49 = arith.constant 0 : index
    %69 = vector.load %arg1[%c11_47, %c0_48, %c0_49] : memref<25x8x196xf32, #tpu.memory_space<vmem>>, vector<1x8x196xf32>
    %70 = vector.shape_cast %69 : vector<1x8x196xf32> to vector<8x196xf32>
    %71 = vector.broadcast %68 : f32 to vector<8x196xf32>
    %72 = arith.mulf %71, %70 : vector<8x196xf32>
    %73 = arith.addf %67, %72 : vector<8x196xf32>
    %c0_50 = arith.constant 0 : index
    %c12 = arith.constant 12 : index
    %74 = memref.load %arg2[%c0_50, %c12] : memref<5x25xf32, #tpu.memory_space<smem>>
    %c12_51 = arith.constant 12 : index
    %c0_52 = arith.constant 0 : index
    %c0_53 = arith.constant 0 : index
    %75 = vector.load %arg1[%c12_51, %c0_52, %c0_53] : memref<25x8x196xf32, #tpu.memory_space<vmem>>, vector<1x8x196xf32>
    %76 = vector.shape_cast %75 : vector<1x8x196xf32> to vector<8x196xf32>
    %77 = vector.broadcast %74 : f32 to vector<8x196xf32>
    %78 = arith.mulf %77, %76 : vector<8x196xf32>
    %79 = arith.addf %73, %78 : vector<8x196xf32>
    %c0_54 = arith.constant 0 : index
    %c13 = arith.constant 13 : index
    %80 = memref.load %arg2[%c0_54, %c13] : memref<5x25xf32, #tpu.memory_space<smem>>
    %c13_55 = arith.constant 13 : index
    %c0_56 = arith.constant 0 : index
    %c0_57 = arith.constant 0 : index
    %81 = vector.load %arg1[%c13_55, %c0_56, %c0_57] : memref<25x8x196xf32, #tpu.memory_space<vmem>>, vector<1x8x196xf32>
    %82 = vector.shape_cast %81 : vector<1x8x196xf32> to vector<8x196xf32>
    %83 = vector.broadcast %80 : f32 to vector<8x196xf32>
    %84 = arith.mulf %83, %82 : vector<8x196xf32>
    %85 = arith.addf %79, %84 : vector<8x196xf32>
    %c0_58 = arith.constant 0 : index
    %c14 = arith.constant 14 : index
    %86 = memref.load %arg2[%c0_58, %c14] : memref<5x25xf32, #tpu.memory_space<smem>>
    %c14_59 = arith.constant 14 : index
    %c0_60 = arith.constant 0 : index
    %c0_61 = arith.constant 0 : index
    %87 = vector.load %arg1[%c14_59, %c0_60, %c0_61] : memref<25x8x196xf32, #tpu.memory_space<vmem>>, vector<1x8x196xf32>
    %88 = vector.shape_cast %87 : vector<1x8x196xf32> to vector<8x196xf32>
    %89 = vector.broadcast %86 : f32 to vector<8x196xf32>
    %90 = arith.mulf %89, %88 : vector<8x196xf32>
    %91 = arith.addf %85, %90 : vector<8x196xf32>
    %c0_62 = arith.constant 0 : index
    %c15 = arith.constant 15 : index
    %92 = memref.load %arg2[%c0_62, %c15] : memref<5x25xf32, #tpu.memory_space<smem>>
    %c15_63 = arith.constant 15 : index
    %c0_64 = arith.constant 0 : index
    %c0_65 = arith.constant 0 : index
    %93 = vector.load %arg1[%c15_63, %c0_64, %c0_65] : memref<25x8x196xf32, #tpu.memory_space<vmem>>, vector<1x8x196xf32>
    %94 = vector.shape_cast %93 : vector<1x8x196xf32> to vector<8x196xf32>
    %95 = vector.broadcast %92 : f32 to vector<8x196xf32>
    %96 = arith.mulf %95, %94 : vector<8x196xf32>
    %97 = arith.addf %91, %96 : vector<8x196xf32>
    %c0_66 = arith.constant 0 : index
    %c16 = arith.constant 16 : index
    %98 = memref.load %arg2[%c0_66, %c16] : memref<5x25xf32, #tpu.memory_space<smem>>
    %c16_67 = arith.constant 16 : index
    %c0_68 = arith.constant 0 : index
    %c0_69 = arith.constant 0 : index
    %99 = vector.load %arg1[%c16_67, %c0_68, %c0_69] : memref<25x8x196xf32, #tpu.memory_space<vmem>>, vector<1x8x196xf32>
    %100 = vector.shape_cast %99 : vector<1x8x196xf32> to vector<8x196xf32>
    %101 = vector.broadcast %98 : f32 to vector<8x196xf32>
    %102 = arith.mulf %101, %100 : vector<8x196xf32>
    %103 = arith.addf %97, %102 : vector<8x196xf32>
    %c0_70 = arith.constant 0 : index
    %c17 = arith.constant 17 : index
    %104 = memref.load %arg2[%c0_70, %c17] : memref<5x25xf32, #tpu.memory_space<smem>>
    %c17_71 = arith.constant 17 : index
    %c0_72 = arith.constant 0 : index
    %c0_73 = arith.constant 0 : index
    %105 = vector.load %arg1[%c17_71, %c0_72, %c0_73] : memref<25x8x196xf32, #tpu.memory_space<vmem>>, vector<1x8x196xf32>
    %106 = vector.shape_cast %105 : vector<1x8x196xf32> to vector<8x196xf32>
    %107 = vector.broadcast %104 : f32 to vector<8x196xf32>
    %108 = arith.mulf %107, %106 : vector<8x196xf32>
    %109 = arith.addf %103, %108 : vector<8x196xf32>
    %c0_74 = arith.constant 0 : index
    %c18 = arith.constant 18 : index
    %110 = memref.load %arg2[%c0_74, %c18] : memref<5x25xf32, #tpu.memory_space<smem>>
    %c18_75 = arith.constant 18 : index
    %c0_76 = arith.constant 0 : index
    %c0_77 = arith.constant 0 : index
    %111 = vector.load %arg1[%c18_75, %c0_76, %c0_77] : memref<25x8x196xf32, #tpu.memory_space<vmem>>, vector<1x8x196xf32>
    %112 = vector.shape_cast %111 : vector<1x8x196xf32> to vector<8x196xf32>
    %113 = vector.broadcast %110 : f32 to vector<8x196xf32>
    %114 = arith.mulf %113, %112 : vector<8x196xf32>
    %115 = arith.addf %109, %114 : vector<8x196xf32>
    %c0_78 = arith.constant 0 : index
    %c19 = arith.constant 19 : index
    %116 = memref.load %arg2[%c0_78, %c19] : memref<5x25xf32, #tpu.memory_space<smem>>
    %c19_79 = arith.constant 19 : index
    %c0_80 = arith.constant 0 : index
    %c0_81 = arith.constant 0 : index
    %117 = vector.load %arg1[%c19_79, %c0_80, %c0_81] : memref<25x8x196xf32, #tpu.memory_space<vmem>>, vector<1x8x196xf32>
    %118 = vector.shape_cast %117 : vector<1x8x196xf32> to vector<8x196xf32>
    %119 = vector.broadcast %116 : f32 to vector<8x196xf32>
    %120 = arith.mulf %119, %118 : vector<8x196xf32>
    %121 = arith.addf %115, %120 : vector<8x196xf32>
    %c0_82 = arith.constant 0 : index
    %c20 = arith.constant 20 : index
    %122 = memref.load %arg2[%c0_82, %c20] : memref<5x25xf32, #tpu.memory_space<smem>>
    %c20_83 = arith.constant 20 : index
    %c0_84 = arith.constant 0 : index
    %c0_85 = arith.constant 0 : index
    %123 = vector.load %arg1[%c20_83, %c0_84, %c0_85] : memref<25x8x196xf32, #tpu.memory_space<vmem>>, vector<1x8x196xf32>
    %124 = vector.shape_cast %123 : vector<1x8x196xf32> to vector<8x196xf32>
    %125 = vector.broadcast %122 : f32 to vector<8x196xf32>
    %126 = arith.mulf %125, %124 : vector<8x196xf32>
    %127 = arith.addf %121, %126 : vector<8x196xf32>
    %c0_86 = arith.constant 0 : index
    %c21 = arith.constant 21 : index
    %128 = memref.load %arg2[%c0_86, %c21] : memref<5x25xf32, #tpu.memory_space<smem>>
    %c21_87 = arith.constant 21 : index
    %c0_88 = arith.constant 0 : index
    %c0_89 = arith.constant 0 : index
    %129 = vector.load %arg1[%c21_87, %c0_88, %c0_89] : memref<25x8x196xf32, #tpu.memory_space<vmem>>, vector<1x8x196xf32>
    %130 = vector.shape_cast %129 : vector<1x8x196xf32> to vector<8x196xf32>
    %131 = vector.broadcast %128 : f32 to vector<8x196xf32>
    %132 = arith.mulf %131, %130 : vector<8x196xf32>
    %133 = arith.addf %127, %132 : vector<8x196xf32>
    %c0_90 = arith.constant 0 : index
    %c22 = arith.constant 22 : index
    %134 = memref.load %arg2[%c0_90, %c22] : memref<5x25xf32, #tpu.memory_space<smem>>
    %c22_91 = arith.constant 22 : index
    %c0_92 = arith.constant 0 : index
    %c0_93 = arith.constant 0 : index
    %135 = vector.load %arg1[%c22_91, %c0_92, %c0_93] : memref<25x8x196xf32, #tpu.memory_space<vmem>>, vector<1x8x196xf32>
    %136 = vector.shape_cast %135 : vector<1x8x196xf32> to vector<8x196xf32>
    %137 = vector.broadcast %134 : f32 to vector<8x196xf32>
    %138 = arith.mulf %137, %136 : vector<8x196xf32>
    %139 = arith.addf %133, %138 : vector<8x196xf32>
    %c0_94 = arith.constant 0 : index
    %c23 = arith.constant 23 : index
    %140 = memref.load %arg2[%c0_94, %c23] : memref<5x25xf32, #tpu.memory_space<smem>>
    %c23_95 = arith.constant 23 : index
    %c0_96 = arith.constant 0 : index
    %c0_97 = arith.constant 0 : index
    %141 = vector.load %arg1[%c23_95, %c0_96, %c0_97] : memref<25x8x196xf32, #tpu.memory_space<vmem>>, vector<1x8x196xf32>
    %142 = vector.shape_cast %141 : vector<1x8x196xf32> to vector<8x196xf32>
    %143 = vector.broadcast %140 : f32 to vector<8x196xf32>
    %144 = arith.mulf %143, %142 : vector<8x196xf32>
    %145 = arith.addf %139, %144 : vector<8x196xf32>
    %c0_98 = arith.constant 0 : index
    %c24 = arith.constant 24 : index
    %146 = memref.load %arg2[%c0_98, %c24] : memref<5x25xf32, #tpu.memory_space<smem>>
    %c24_99 = arith.constant 24 : index
    %c0_100 = arith.constant 0 : index
    %c0_101 = arith.constant 0 : index
    %147 = vector.load %arg1[%c24_99, %c0_100, %c0_101] : memref<25x8x196xf32, #tpu.memory_space<vmem>>, vector<1x8x196xf32>
    %148 = vector.shape_cast %147 : vector<1x8x196xf32> to vector<8x196xf32>
    %149 = vector.broadcast %146 : f32 to vector<8x196xf32>
    %150 = arith.mulf %149, %148 : vector<8x196xf32>
    %151 = arith.addf %145, %150 : vector<8x196xf32>
    %c0_102 = arith.constant 0 : index
    %152 = memref.load %arg3[%c0_102] : memref<5xf32, #tpu.memory_space<smem>>
    %153 = vector.broadcast %152 : f32 to vector<8x196xf32>
    %154 = arith.addf %151, %153 : vector<8x196xf32>
    %155 = arith.mulf %154, %154 : vector<8x196xf32>
    %c0_103 = arith.constant 0 : index
    %c0_104 = arith.constant 0 : index
    %c0_105 = arith.constant 0 : index
    %156 = vector.load %arg4[%c0_103, %c0_104, %c0_105] : memref<5x196x128xf32, #tpu.memory_space<vmem>>, vector<1x196x128xf32>
    %157 = vector.shape_cast %156 : vector<1x196x128xf32> to vector<196x128xf32>
    %cst = arith.constant dense<0.000000e+00> : vector<8x128xf32>
    %158 = tpu.matmul %155, %157, %cst {dimension_numbers = #tpu.dot_dimension_numbers<[1], [0], [0], [1], [0, 0, 1, 1], [], []>} : vector<8x196xf32>, vector<196x128xf32>, vector<8x128xf32> -> vector<8x128xf32>
    %159 = arith.addf %2, %158 : vector<8x128xf32>
    %c1_106 = arith.constant 1 : index
    %c0_107 = arith.constant 0 : index
    %160 = memref.load %arg2[%c1_106, %c0_107] : memref<5x25xf32, #tpu.memory_space<smem>>
    %c0_108 = arith.constant 0 : index
    %c0_109 = arith.constant 0 : index
    %c0_110 = arith.constant 0 : index
    %161 = vector.load %arg1[%c0_108, %c0_109, %c0_110] : memref<25x8x196xf32, #tpu.memory_space<vmem>>, vector<1x8x196xf32>
    %162 = vector.shape_cast %161 : vector<1x8x196xf32> to vector<8x196xf32>
    %163 = vector.broadcast %160 : f32 to vector<8x196xf32>
    %164 = arith.mulf %163, %162 : vector<8x196xf32>
    %c1_111 = arith.constant 1 : index
    %c1_112 = arith.constant 1 : index
    %165 = memref.load %arg2[%c1_111, %c1_112] : memref<5x25xf32, #tpu.memory_space<smem>>
    %c1_113 = arith.constant 1 : index
    %c0_114 = arith.constant 0 : index
    %c0_115 = arith.constant 0 : index
    %166 = vector.load %arg1[%c1_113, %c0_114, %c0_115] : memref<25x8x196xf32, #tpu.memory_space<vmem>>, vector<1x8x196xf32>
    %167 = vector.shape_cast %166 : vector<1x8x196xf32> to vector<8x196xf32>
    %168 = vector.broadcast %165 : f32 to vector<8x196xf32>
    %169 = arith.mulf %168, %167 : vector<8x196xf32>
    %170 = arith.addf %164, %169 : vector<8x196xf32>
    %c1_116 = arith.constant 1 : index
    %c2_117 = arith.constant 2 : index
    %171 = memref.load %arg2[%c1_116, %c2_117] : memref<5x25xf32, #tpu.memory_space<smem>>
    %c2_118 = arith.constant 2 : index
    %c0_119 = arith.constant 0 : index
    %c0_120 = arith.constant 0 : index
    %172 = vector.load %arg1[%c2_118, %c0_119, %c0_120] : memref<25x8x196xf32, #tpu.memory_space<vmem>>, vector<1x8x196xf32>
    %173 = vector.shape_cast %172 : vector<1x8x196xf32> to vector<8x196xf32>
    %174 = vector.broadcast %171 : f32 to vector<8x196xf32>
    %175 = arith.mulf %174, %173 : vector<8x196xf32>
    %176 = arith.addf %170, %175 : vector<8x196xf32>
    %c1_121 = arith.constant 1 : index
    %c3_122 = arith.constant 3 : index
    %177 = memref.load %arg2[%c1_121, %c3_122] : memref<5x25xf32, #tpu.memory_space<smem>>
    %c3_123 = arith.constant 3 : index
    %c0_124 = arith.constant 0 : index
    %c0_125 = arith.constant 0 : index
    %178 = vector.load %arg1[%c3_123, %c0_124, %c0_125] : memref<25x8x196xf32, #tpu.memory_space<vmem>>, vector<1x8x196xf32>
    %179 = vector.shape_cast %178 : vector<1x8x196xf32> to vector<8x196xf32>
    %180 = vector.broadcast %177 : f32 to vector<8x196xf32>
    %181 = arith.mulf %180, %179 : vector<8x196xf32>
    %182 = arith.addf %176, %181 : vector<8x196xf32>
    %c1_126 = arith.constant 1 : index
    %c4_127 = arith.constant 4 : index
    %183 = memref.load %arg2[%c1_126, %c4_127] : memref<5x25xf32, #tpu.memory_space<smem>>
    %c4_128 = arith.constant 4 : index
    %c0_129 = arith.constant 0 : index
    %c0_130 = arith.constant 0 : index
    %184 = vector.load %arg1[%c4_128, %c0_129, %c0_130] : memref<25x8x196xf32, #tpu.memory_space<vmem>>, vector<1x8x196xf32>
    %185 = vector.shape_cast %184 : vector<1x8x196xf32> to vector<8x196xf32>
    %186 = vector.broadcast %183 : f32 to vector<8x196xf32>
    %187 = arith.mulf %186, %185 : vector<8x196xf32>
    %188 = arith.addf %182, %187 : vector<8x196xf32>
    %c1_131 = arith.constant 1 : index
    %c5_132 = arith.constant 5 : index
    %189 = memref.load %arg2[%c1_131, %c5_132] : memref<5x25xf32, #tpu.memory_space<smem>>
    %c5_133 = arith.constant 5 : index
    %c0_134 = arith.constant 0 : index
    %c0_135 = arith.constant 0 : index
    %190 = vector.load %arg1[%c5_133, %c0_134, %c0_135] : memref<25x8x196xf32, #tpu.memory_space<vmem>>, vector<1x8x196xf32>
    %191 = vector.shape_cast %190 : vector<1x8x196xf32> to vector<8x196xf32>
    %192 = vector.broadcast %189 : f32 to vector<8x196xf32>
    %193 = arith.mulf %192, %191 : vector<8x196xf32>
    %194 = arith.addf %188, %193 : vector<8x196xf32>
    %c1_136 = arith.constant 1 : index
    %c6_137 = arith.constant 6 : index
    %195 = memref.load %arg2[%c1_136, %c6_137] : memref<5x25xf32, #tpu.memory_space<smem>>
    %c6_138 = arith.constant 6 : index
    %c0_139 = arith.constant 0 : index
    %c0_140 = arith.constant 0 : index
    %196 = vector.load %arg1[%c6_138, %c0_139, %c0_140] : memref<25x8x196xf32, #tpu.memory_space<vmem>>, vector<1x8x196xf32>
    %197 = vector.shape_cast %196 : vector<1x8x196xf32> to vector<8x196xf32>
    %198 = vector.broadcast %195 : f32 to vector<8x196xf32>
    %199 = arith.mulf %198, %197 : vector<8x196xf32>
    %200 = arith.addf %194, %199 : vector<8x196xf32>
    %c1_141 = arith.constant 1 : index
    %c7_142 = arith.constant 7 : index
    %201 = memref.load %arg2[%c1_141, %c7_142] : memref<5x25xf32, #tpu.memory_space<smem>>
    %c7_143 = arith.constant 7 : index
    %c0_144 = arith.constant 0 : index
    %c0_145 = arith.constant 0 : index
    %202 = vector.load %arg1[%c7_143, %c0_144, %c0_145] : memref<25x8x196xf32, #tpu.memory_space<vmem>>, vector<1x8x196xf32>
    %203 = vector.shape_cast %202 : vector<1x8x196xf32> to vector<8x196xf32>
    %204 = vector.broadcast %201 : f32 to vector<8x196xf32>
    %205 = arith.mulf %204, %203 : vector<8x196xf32>
    %206 = arith.addf %200, %205 : vector<8x196xf32>
    %c1_146 = arith.constant 1 : index
    %c8_147 = arith.constant 8 : index
    %207 = memref.load %arg2[%c1_146, %c8_147] : memref<5x25xf32, #tpu.memory_space<smem>>
    %c8_148 = arith.constant 8 : index
    %c0_149 = arith.constant 0 : index
    %c0_150 = arith.constant 0 : index
    %208 = vector.load %arg1[%c8_148, %c0_149, %c0_150] : memref<25x8x196xf32, #tpu.memory_space<vmem>>, vector<1x8x196xf32>
    %209 = vector.shape_cast %208 : vector<1x8x196xf32> to vector<8x196xf32>
    %210 = vector.broadcast %207 : f32 to vector<8x196xf32>
    %211 = arith.mulf %210, %209 : vector<8x196xf32>
    %212 = arith.addf %206, %211 : vector<8x196xf32>
    %c1_151 = arith.constant 1 : index
    %c9_152 = arith.constant 9 : index
    %213 = memref.load %arg2[%c1_151, %c9_152] : memref<5x25xf32, #tpu.memory_space<smem>>
    %c9_153 = arith.constant 9 : index
    %c0_154 = arith.constant 0 : index
    %c0_155 = arith.constant 0 : index
    %214 = vector.load %arg1[%c9_153, %c0_154, %c0_155] : memref<25x8x196xf32, #tpu.memory_space<vmem>>, vector<1x8x196xf32>
    %215 = vector.shape_cast %214 : vector<1x8x196xf32> to vector<8x196xf32>
    %216 = vector.broadcast %213 : f32 to vector<8x196xf32>
    %217 = arith.mulf %216, %215 : vector<8x196xf32>
    %218 = arith.addf %212, %217 : vector<8x196xf32>
    %c1_156 = arith.constant 1 : index
    %c10_157 = arith.constant 10 : index
    %219 = memref.load %arg2[%c1_156, %c10_157] : memref<5x25xf32, #tpu.memory_space<smem>>
    %c10_158 = arith.constant 10 : index
    %c0_159 = arith.constant 0 : index
    %c0_160 = arith.constant 0 : index
    %220 = vector.load %arg1[%c10_158, %c0_159, %c0_160] : memref<25x8x196xf32, #tpu.memory_space<vmem>>, vector<1x8x196xf32>
    %221 = vector.shape_cast %220 : vector<1x8x196xf32> to vector<8x196xf32>
    %222 = vector.broadcast %219 : f32 to vector<8x196xf32>
    %223 = arith.mulf %222, %221 : vector<8x196xf32>
    %224 = arith.addf %218, %223 : vector<8x196xf32>
    %c1_161 = arith.constant 1 : index
    %c11_162 = arith.constant 11 : index
    %225 = memref.load %arg2[%c1_161, %c11_162] : memref<5x25xf32, #tpu.memory_space<smem>>
    %c11_163 = arith.constant 11 : index
    %c0_164 = arith.constant 0 : index
    %c0_165 = arith.constant 0 : index
    %226 = vector.load %arg1[%c11_163, %c0_164, %c0_165] : memref<25x8x196xf32, #tpu.memory_space<vmem>>, vector<1x8x196xf32>
    %227 = vector.shape_cast %226 : vector<1x8x196xf32> to vector<8x196xf32>
    %228 = vector.broadcast %225 : f32 to vector<8x196xf32>
    %229 = arith.mulf %228, %227 : vector<8x196xf32>
    %230 = arith.addf %224, %229 : vector<8x196xf32>
    %c1_166 = arith.constant 1 : index
    %c12_167 = arith.constant 12 : index
    %231 = memref.load %arg2[%c1_166, %c12_167] : memref<5x25xf32, #tpu.memory_space<smem>>
    %c12_168 = arith.constant 12 : index
    %c0_169 = arith.constant 0 : index
    %c0_170 = arith.constant 0 : index
    %232 = vector.load %arg1[%c12_168, %c0_169, %c0_170] : memref<25x8x196xf32, #tpu.memory_space<vmem>>, vector<1x8x196xf32>
    %233 = vector.shape_cast %232 : vector<1x8x196xf32> to vector<8x196xf32>
    %234 = vector.broadcast %231 : f32 to vector<8x196xf32>
    %235 = arith.mulf %234, %233 : vector<8x196xf32>
    %236 = arith.addf %230, %235 : vector<8x196xf32>
    %c1_171 = arith.constant 1 : index
    %c13_172 = arith.constant 13 : index
    %237 = memref.load %arg2[%c1_171, %c13_172] : memref<5x25xf32, #tpu.memory_space<smem>>
    %c13_173 = arith.constant 13 : index
    %c0_174 = arith.constant 0 : index
    %c0_175 = arith.constant 0 : index
    %238 = vector.load %arg1[%c13_173, %c0_174, %c0_175] : memref<25x8x196xf32, #tpu.memory_space<vmem>>, vector<1x8x196xf32>
    %239 = vector.shape_cast %238 : vector<1x8x196xf32> to vector<8x196xf32>
    %240 = vector.broadcast %237 : f32 to vector<8x196xf32>
    %241 = arith.mulf %240, %239 : vector<8x196xf32>
    %242 = arith.addf %236, %241 : vector<8x196xf32>
    %c1_176 = arith.constant 1 : index
    %c14_177 = arith.constant 14 : index
    %243 = memref.load %arg2[%c1_176, %c14_177] : memref<5x25xf32, #tpu.memory_space<smem>>
    %c14_178 = arith.constant 14 : index
    %c0_179 = arith.constant 0 : index
    %c0_180 = arith.constant 0 : index
    %244 = vector.load %arg1[%c14_178, %c0_179, %c0_180] : memref<25x8x196xf32, #tpu.memory_space<vmem>>, vector<1x8x196xf32>
    %245 = vector.shape_cast %244 : vector<1x8x196xf32> to vector<8x196xf32>
    %246 = vector.broadcast %243 : f32 to vector<8x196xf32>
    %247 = arith.mulf %246, %245 : vector<8x196xf32>
    %248 = arith.addf %242, %247 : vector<8x196xf32>
    %c1_181 = arith.constant 1 : index
    %c15_182 = arith.constant 15 : index
    %249 = memref.load %arg2[%c1_181, %c15_182] : memref<5x25xf32, #tpu.memory_space<smem>>
    %c15_183 = arith.constant 15 : index
    %c0_184 = arith.constant 0 : index
    %c0_185 = arith.constant 0 : index
    %250 = vector.load %arg1[%c15_183, %c0_184, %c0_185] : memref<25x8x196xf32, #tpu.memory_space<vmem>>, vector<1x8x196xf32>
    %251 = vector.shape_cast %250 : vector<1x8x196xf32> to vector<8x196xf32>
    %252 = vector.broadcast %249 : f32 to vector<8x196xf32>
    %253 = arith.mulf %252, %251 : vector<8x196xf32>
    %254 = arith.addf %248, %253 : vector<8x196xf32>
    %c1_186 = arith.constant 1 : index
    %c16_187 = arith.constant 16 : index
    %255 = memref.load %arg2[%c1_186, %c16_187] : memref<5x25xf32, #tpu.memory_space<smem>>
    %c16_188 = arith.constant 16 : index
    %c0_189 = arith.constant 0 : index
    %c0_190 = arith.constant 0 : index
    %256 = vector.load %arg1[%c16_188, %c0_189, %c0_190] : memref<25x8x196xf32, #tpu.memory_space<vmem>>, vector<1x8x196xf32>
    %257 = vector.shape_cast %256 : vector<1x8x196xf32> to vector<8x196xf32>
    %258 = vector.broadcast %255 : f32 to vector<8x196xf32>
    %259 = arith.mulf %258, %257 : vector<8x196xf32>
    %260 = arith.addf %254, %259 : vector<8x196xf32>
    %c1_191 = arith.constant 1 : index
    %c17_192 = arith.constant 17 : index
    %261 = memref.load %arg2[%c1_191, %c17_192] : memref<5x25xf32, #tpu.memory_space<smem>>
    %c17_193 = arith.constant 17 : index
    %c0_194 = arith.constant 0 : index
    %c0_195 = arith.constant 0 : index
    %262 = vector.load %arg1[%c17_193, %c0_194, %c0_195] : memref<25x8x196xf32, #tpu.memory_space<vmem>>, vector<1x8x196xf32>
    %263 = vector.shape_cast %262 : vector<1x8x196xf32> to vector<8x196xf32>
    %264 = vector.broadcast %261 : f32 to vector<8x196xf32>
    %265 = arith.mulf %264, %263 : vector<8x196xf32>
    %266 = arith.addf %260, %265 : vector<8x196xf32>
    %c1_196 = arith.constant 1 : index
    %c18_197 = arith.constant 18 : index
    %267 = memref.load %arg2[%c1_196, %c18_197] : memref<5x25xf32, #tpu.memory_space<smem>>
    %c18_198 = arith.constant 18 : index
    %c0_199 = arith.constant 0 : index
    %c0_200 = arith.constant 0 : index
    %268 = vector.load %arg1[%c18_198, %c0_199, %c0_200] : memref<25x8x196xf32, #tpu.memory_space<vmem>>, vector<1x8x196xf32>
    %269 = vector.shape_cast %268 : vector<1x8x196xf32> to vector<8x196xf32>
    %270 = vector.broadcast %267 : f32 to vector<8x196xf32>
    %271 = arith.mulf %270, %269 : vector<8x196xf32>
    %272 = arith.addf %266, %271 : vector<8x196xf32>
    %c1_201 = arith.constant 1 : index
    %c19_202 = arith.constant 19 : index
    %273 = memref.load %arg2[%c1_201, %c19_202] : memref<5x25xf32, #tpu.memory_space<smem>>
    %c19_203 = arith.constant 19 : index
    %c0_204 = arith.constant 0 : index
    %c0_205 = arith.constant 0 : index
    %274 = vector.load %arg1[%c19_203, %c0_204, %c0_205] : memref<25x8x196xf32, #tpu.memory_space<vmem>>, vector<1x8x196xf32>
    %275 = vector.shape_cast %274 : vector<1x8x196xf32> to vector<8x196xf32>
    %276 = vector.broadcast %273 : f32 to vector<8x196xf32>
    %277 = arith.mulf %276, %275 : vector<8x196xf32>
    %278 = arith.addf %272, %277 : vector<8x196xf32>
    %c1_206 = arith.constant 1 : index
    %c20_207 = arith.constant 20 : index
    %279 = memref.load %arg2[%c1_206, %c20_207] : memref<5x25xf32, #tpu.memory_space<smem>>
    %c20_208 = arith.constant 20 : index
    %c0_209 = arith.constant 0 : index
    %c0_210 = arith.constant 0 : index
    %280 = vector.load %arg1[%c20_208, %c0_209, %c0_210] : memref<25x8x196xf32, #tpu.memory_space<vmem>>, vector<1x8x196xf32>
    %281 = vector.shape_cast %280 : vector<1x8x196xf32> to vector<8x196xf32>
    %282 = vector.broadcast %279 : f32 to vector<8x196xf32>
    %283 = arith.mulf %282, %281 : vector<8x196xf32>
    %284 = arith.addf %278, %283 : vector<8x196xf32>
    %c1_211 = arith.constant 1 : index
    %c21_212 = arith.constant 21 : index
    %285 = memref.load %arg2[%c1_211, %c21_212] : memref<5x25xf32, #tpu.memory_space<smem>>
    %c21_213 = arith.constant 21 : index
    %c0_214 = arith.constant 0 : index
    %c0_215 = arith.constant 0 : index
    %286 = vector.load %arg1[%c21_213, %c0_214, %c0_215] : memref<25x8x196xf32, #tpu.memory_space<vmem>>, vector<1x8x196xf32>
    %287 = vector.shape_cast %286 : vector<1x8x196xf32> to vector<8x196xf32>
    %288 = vector.broadcast %285 : f32 to vector<8x196xf32>
    %289 = arith.mulf %288, %287 : vector<8x196xf32>
    %290 = arith.addf %284, %289 : vector<8x196xf32>
    %c1_216 = arith.constant 1 : index
    %c22_217 = arith.constant 22 : index
    %291 = memref.load %arg2[%c1_216, %c22_217] : memref<5x25xf32, #tpu.memory_space<smem>>
    %c22_218 = arith.constant 22 : index
    %c0_219 = arith.constant 0 : index
    %c0_220 = arith.constant 0 : index
    %292 = vector.load %arg1[%c22_218, %c0_219, %c0_220] : memref<25x8x196xf32, #tpu.memory_space<vmem>>, vector<1x8x196xf32>
    %293 = vector.shape_cast %292 : vector<1x8x196xf32> to vector<8x196xf32>
    %294 = vector.broadcast %291 : f32 to vector<8x196xf32>
    %295 = arith.mulf %294, %293 : vector<8x196xf32>
    %296 = arith.addf %290, %295 : vector<8x196xf32>
    %c1_221 = arith.constant 1 : index
    %c23_222 = arith.constant 23 : index
    %297 = memref.load %arg2[%c1_221, %c23_222] : memref<5x25xf32, #tpu.memory_space<smem>>
    %c23_223 = arith.constant 23 : index
    %c0_224 = arith.constant 0 : index
    %c0_225 = arith.constant 0 : index
    %298 = vector.load %arg1[%c23_223, %c0_224, %c0_225] : memref<25x8x196xf32, #tpu.memory_space<vmem>>, vector<1x8x196xf32>
    %299 = vector.shape_cast %298 : vector<1x8x196xf32> to vector<8x196xf32>
    %300 = vector.broadcast %297 : f32 to vector<8x196xf32>
    %301 = arith.mulf %300, %299 : vector<8x196xf32>
    %302 = arith.addf %296, %301 : vector<8x196xf32>
    %c1_226 = arith.constant 1 : index
    %c24_227 = arith.constant 24 : index
    %303 = memref.load %arg2[%c1_226, %c24_227] : memref<5x25xf32, #tpu.memory_space<smem>>
    %c24_228 = arith.constant 24 : index
    %c0_229 = arith.constant 0 : index
    %c0_230 = arith.constant 0 : index
    %304 = vector.load %arg1[%c24_228, %c0_229, %c0_230] : memref<25x8x196xf32, #tpu.memory_space<vmem>>, vector<1x8x196xf32>
    %305 = vector.shape_cast %304 : vector<1x8x196xf32> to vector<8x196xf32>
    %306 = vector.broadcast %303 : f32 to vector<8x196xf32>
    %307 = arith.mulf %306, %305 : vector<8x196xf32>
    %308 = arith.addf %302, %307 : vector<8x196xf32>
    %c1_231 = arith.constant 1 : index
    %309 = memref.load %arg3[%c1_231] : memref<5xf32, #tpu.memory_space<smem>>
    %310 = vector.broadcast %309 : f32 to vector<8x196xf32>
    %311 = arith.addf %308, %310 : vector<8x196xf32>
    %312 = arith.mulf %311, %311 : vector<8x196xf32>
    %c1_232 = arith.constant 1 : index
    %c0_233 = arith.constant 0 : index
    %c0_234 = arith.constant 0 : index
    %313 = vector.load %arg4[%c1_232, %c0_233, %c0_234] : memref<5x196x128xf32, #tpu.memory_space<vmem>>, vector<1x196x128xf32>
    %314 = vector.shape_cast %313 : vector<1x196x128xf32> to vector<196x128xf32>
    %cst_235 = arith.constant dense<0.000000e+00> : vector<8x128xf32>
    %315 = tpu.matmul %312, %314, %cst_235 {dimension_numbers = #tpu.dot_dimension_numbers<[1], [0], [0], [1], [0, 0, 1, 1], [], []>} : vector<8x196xf32>, vector<196x128xf32>, vector<8x128xf32> -> vector<8x128xf32>
    %316 = arith.addf %159, %315 : vector<8x128xf32>
    %c2_236 = arith.constant 2 : index
    %c0_237 = arith.constant 0 : index
    %317 = memref.load %arg2[%c2_236, %c0_237] : memref<5x25xf32, #tpu.memory_space<smem>>
    %c0_238 = arith.constant 0 : index
    %c0_239 = arith.constant 0 : index
    %c0_240 = arith.constant 0 : index
    %318 = vector.load %arg1[%c0_238, %c0_239, %c0_240] : memref<25x8x196xf32, #tpu.memory_space<vmem>>, vector<1x8x196xf32>
    %319 = vector.shape_cast %318 : vector<1x8x196xf32> to vector<8x196xf32>
    %320 = vector.broadcast %317 : f32 to vector<8x196xf32>
    %321 = arith.mulf %320, %319 : vector<8x196xf32>
    %c2_241 = arith.constant 2 : index
    %c1_242 = arith.constant 1 : index
    %322 = memref.load %arg2[%c2_241, %c1_242] : memref<5x25xf32, #tpu.memory_space<smem>>
    %c1_243 = arith.constant 1 : index
    %c0_244 = arith.constant 0 : index
    %c0_245 = arith.constant 0 : index
    %323 = vector.load %arg1[%c1_243, %c0_244, %c0_245] : memref<25x8x196xf32, #tpu.memory_space<vmem>>, vector<1x8x196xf32>
    %324 = vector.shape_cast %323 : vector<1x8x196xf32> to vector<8x196xf32>
    %325 = vector.broadcast %322 : f32 to vector<8x196xf32>
    %326 = arith.mulf %325, %324 : vector<8x196xf32>
    %327 = arith.addf %321, %326 : vector<8x196xf32>
    %c2_246 = arith.constant 2 : index
    %c2_247 = arith.constant 2 : index
    %328 = memref.load %arg2[%c2_246, %c2_247] : memref<5x25xf32, #tpu.memory_space<smem>>
    %c2_248 = arith.constant 2 : index
    %c0_249 = arith.constant 0 : index
    %c0_250 = arith.constant 0 : index
    %329 = vector.load %arg1[%c2_248, %c0_249, %c0_250] : memref<25x8x196xf32, #tpu.memory_space<vmem>>, vector<1x8x196xf32>
    %330 = vector.shape_cast %329 : vector<1x8x196xf32> to vector<8x196xf32>
    %331 = vector.broadcast %328 : f32 to vector<8x196xf32>
    %332 = arith.mulf %331, %330 : vector<8x196xf32>
    %333 = arith.addf %327, %332 : vector<8x196xf32>
    %c2_251 = arith.constant 2 : index
    %c3_252 = arith.constant 3 : index
    %334 = memref.load %arg2[%c2_251, %c3_252] : memref<5x25xf32, #tpu.memory_space<smem>>
    %c3_253 = arith.constant 3 : index
    %c0_254 = arith.constant 0 : index
    %c0_255 = arith.constant 0 : index
    %335 = vector.load %arg1[%c3_253, %c0_254, %c0_255] : memref<25x8x196xf32, #tpu.memory_space<vmem>>, vector<1x8x196xf32>
    %336 = vector.shape_cast %335 : vector<1x8x196xf32> to vector<8x196xf32>
    %337 = vector.broadcast %334 : f32 to vector<8x196xf32>
    %338 = arith.mulf %337, %336 : vector<8x196xf32>
    %339 = arith.addf %333, %338 : vector<8x196xf32>
    %c2_256 = arith.constant 2 : index
    %c4_257 = arith.constant 4 : index
    %340 = memref.load %arg2[%c2_256, %c4_257] : memref<5x25xf32, #tpu.memory_space<smem>>
    %c4_258 = arith.constant 4 : index
    %c0_259 = arith.constant 0 : index
    %c0_260 = arith.constant 0 : index
    %341 = vector.load %arg1[%c4_258, %c0_259, %c0_260] : memref<25x8x196xf32, #tpu.memory_space<vmem>>, vector<1x8x196xf32>
    %342 = vector.shape_cast %341 : vector<1x8x196xf32> to vector<8x196xf32>
    %343 = vector.broadcast %340 : f32 to vector<8x196xf32>
    %344 = arith.mulf %343, %342 : vector<8x196xf32>
    %345 = arith.addf %339, %344 : vector<8x196xf32>
    %c2_261 = arith.constant 2 : index
    %c5_262 = arith.constant 5 : index
    %346 = memref.load %arg2[%c2_261, %c5_262] : memref<5x25xf32, #tpu.memory_space<smem>>
    %c5_263 = arith.constant 5 : index
    %c0_264 = arith.constant 0 : index
    %c0_265 = arith.constant 0 : index
    %347 = vector.load %arg1[%c5_263, %c0_264, %c0_265] : memref<25x8x196xf32, #tpu.memory_space<vmem>>, vector<1x8x196xf32>
    %348 = vector.shape_cast %347 : vector<1x8x196xf32> to vector<8x196xf32>
    %349 = vector.broadcast %346 : f32 to vector<8x196xf32>
    %350 = arith.mulf %349, %348 : vector<8x196xf32>
    %351 = arith.addf %345, %350 : vector<8x196xf32>
    %c2_266 = arith.constant 2 : index
    %c6_267 = arith.constant 6 : index
    %352 = memref.load %arg2[%c2_266, %c6_267] : memref<5x25xf32, #tpu.memory_space<smem>>
    %c6_268 = arith.constant 6 : index
    %c0_269 = arith.constant 0 : index
    %c0_270 = arith.constant 0 : index
    %353 = vector.load %arg1[%c6_268, %c0_269, %c0_270] : memref<25x8x196xf32, #tpu.memory_space<vmem>>, vector<1x8x196xf32>
    %354 = vector.shape_cast %353 : vector<1x8x196xf32> to vector<8x196xf32>
    %355 = vector.broadcast %352 : f32 to vector<8x196xf32>
    %356 = arith.mulf %355, %354 : vector<8x196xf32>
    %357 = arith.addf %351, %356 : vector<8x196xf32>
    %c2_271 = arith.constant 2 : index
    %c7_272 = arith.constant 7 : index
    %358 = memref.load %arg2[%c2_271, %c7_272] : memref<5x25xf32, #tpu.memory_space<smem>>
    %c7_273 = arith.constant 7 : index
    %c0_274 = arith.constant 0 : index
    %c0_275 = arith.constant 0 : index
    %359 = vector.load %arg1[%c7_273, %c0_274, %c0_275] : memref<25x8x196xf32, #tpu.memory_space<vmem>>, vector<1x8x196xf32>
    %360 = vector.shape_cast %359 : vector<1x8x196xf32> to vector<8x196xf32>
    %361 = vector.broadcast %358 : f32 to vector<8x196xf32>
    %362 = arith.mulf %361, %360 : vector<8x196xf32>
    %363 = arith.addf %357, %362 : vector<8x196xf32>
    %c2_276 = arith.constant 2 : index
    %c8_277 = arith.constant 8 : index
    %364 = memref.load %arg2[%c2_276, %c8_277] : memref<5x25xf32, #tpu.memory_space<smem>>
    %c8_278 = arith.constant 8 : index
    %c0_279 = arith.constant 0 : index
    %c0_280 = arith.constant 0 : index
    %365 = vector.load %arg1[%c8_278, %c0_279, %c0_280] : memref<25x8x196xf32, #tpu.memory_space<vmem>>, vector<1x8x196xf32>
    %366 = vector.shape_cast %365 : vector<1x8x196xf32> to vector<8x196xf32>
    %367 = vector.broadcast %364 : f32 to vector<8x196xf32>
    %368 = arith.mulf %367, %366 : vector<8x196xf32>
    %369 = arith.addf %363, %368 : vector<8x196xf32>
    %c2_281 = arith.constant 2 : index
    %c9_282 = arith.constant 9 : index
    %370 = memref.load %arg2[%c2_281, %c9_282] : memref<5x25xf32, #tpu.memory_space<smem>>
    %c9_283 = arith.constant 9 : index
    %c0_284 = arith.constant 0 : index
    %c0_285 = arith.constant 0 : index
    %371 = vector.load %arg1[%c9_283, %c0_284, %c0_285] : memref<25x8x196xf32, #tpu.memory_space<vmem>>, vector<1x8x196xf32>
    %372 = vector.shape_cast %371 : vector<1x8x196xf32> to vector<8x196xf32>
    %373 = vector.broadcast %370 : f32 to vector<8x196xf32>
    %374 = arith.mulf %373, %372 : vector<8x196xf32>
    %375 = arith.addf %369, %374 : vector<8x196xf32>
    %c2_286 = arith.constant 2 : index
    %c10_287 = arith.constant 10 : index
    %376 = memref.load %arg2[%c2_286, %c10_287] : memref<5x25xf32, #tpu.memory_space<smem>>
    %c10_288 = arith.constant 10 : index
    %c0_289 = arith.constant 0 : index
    %c0_290 = arith.constant 0 : index
    %377 = vector.load %arg1[%c10_288, %c0_289, %c0_290] : memref<25x8x196xf32, #tpu.memory_space<vmem>>, vector<1x8x196xf32>
    %378 = vector.shape_cast %377 : vector<1x8x196xf32> to vector<8x196xf32>
    %379 = vector.broadcast %376 : f32 to vector<8x196xf32>
    %380 = arith.mulf %379, %378 : vector<8x196xf32>
    %381 = arith.addf %375, %380 : vector<8x196xf32>
    %c2_291 = arith.constant 2 : index
    %c11_292 = arith.constant 11 : index
    %382 = memref.load %arg2[%c2_291, %c11_292] : memref<5x25xf32, #tpu.memory_space<smem>>
    %c11_293 = arith.constant 11 : index
    %c0_294 = arith.constant 0 : index
    %c0_295 = arith.constant 0 : index
    %383 = vector.load %arg1[%c11_293, %c0_294, %c0_295] : memref<25x8x196xf32, #tpu.memory_space<vmem>>, vector<1x8x196xf32>
    %384 = vector.shape_cast %383 : vector<1x8x196xf32> to vector<8x196xf32>
    %385 = vector.broadcast %382 : f32 to vector<8x196xf32>
    %386 = arith.mulf %385, %384 : vector<8x196xf32>
    %387 = arith.addf %381, %386 : vector<8x196xf32>
    %c2_296 = arith.constant 2 : index
    %c12_297 = arith.constant 12 : index
    %388 = memref.load %arg2[%c2_296, %c12_297] : memref<5x25xf32, #tpu.memory_space<smem>>
    %c12_298 = arith.constant 12 : index
    %c0_299 = arith.constant 0 : index
    %c0_300 = arith.constant 0 : index
    %389 = vector.load %arg1[%c12_298, %c0_299, %c0_300] : memref<25x8x196xf32, #tpu.memory_space<vmem>>, vector<1x8x196xf32>
    %390 = vector.shape_cast %389 : vector<1x8x196xf32> to vector<8x196xf32>
    %391 = vector.broadcast %388 : f32 to vector<8x196xf32>
    %392 = arith.mulf %391, %390 : vector<8x196xf32>
    %393 = arith.addf %387, %392 : vector<8x196xf32>
    %c2_301 = arith.constant 2 : index
    %c13_302 = arith.constant 13 : index
    %394 = memref.load %arg2[%c2_301, %c13_302] : memref<5x25xf32, #tpu.memory_space<smem>>
    %c13_303 = arith.constant 13 : index
    %c0_304 = arith.constant 0 : index
    %c0_305 = arith.constant 0 : index
    %395 = vector.load %arg1[%c13_303, %c0_304, %c0_305] : memref<25x8x196xf32, #tpu.memory_space<vmem>>, vector<1x8x196xf32>
    %396 = vector.shape_cast %395 : vector<1x8x196xf32> to vector<8x196xf32>
    %397 = vector.broadcast %394 : f32 to vector<8x196xf32>
    %398 = arith.mulf %397, %396 : vector<8x196xf32>
    %399 = arith.addf %393, %398 : vector<8x196xf32>
    %c2_306 = arith.constant 2 : index
    %c14_307 = arith.constant 14 : index
    %400 = memref.load %arg2[%c2_306, %c14_307] : memref<5x25xf32, #tpu.memory_space<smem>>
    %c14_308 = arith.constant 14 : index
    %c0_309 = arith.constant 0 : index
    %c0_310 = arith.constant 0 : index
    %401 = vector.load %arg1[%c14_308, %c0_309, %c0_310] : memref<25x8x196xf32, #tpu.memory_space<vmem>>, vector<1x8x196xf32>
    %402 = vector.shape_cast %401 : vector<1x8x196xf32> to vector<8x196xf32>
    %403 = vector.broadcast %400 : f32 to vector<8x196xf32>
    %404 = arith.mulf %403, %402 : vector<8x196xf32>
    %405 = arith.addf %399, %404 : vector<8x196xf32>
    %c2_311 = arith.constant 2 : index
    %c15_312 = arith.constant 15 : index
    %406 = memref.load %arg2[%c2_311, %c15_312] : memref<5x25xf32, #tpu.memory_space<smem>>
    %c15_313 = arith.constant 15 : index
    %c0_314 = arith.constant 0 : index
    %c0_315 = arith.constant 0 : index
    %407 = vector.load %arg1[%c15_313, %c0_314, %c0_315] : memref<25x8x196xf32, #tpu.memory_space<vmem>>, vector<1x8x196xf32>
    %408 = vector.shape_cast %407 : vector<1x8x196xf32> to vector<8x196xf32>
    %409 = vector.broadcast %406 : f32 to vector<8x196xf32>
    %410 = arith.mulf %409, %408 : vector<8x196xf32>
    %411 = arith.addf %405, %410 : vector<8x196xf32>
    %c2_316 = arith.constant 2 : index
    %c16_317 = arith.constant 16 : index
    %412 = memref.load %arg2[%c2_316, %c16_317] : memref<5x25xf32, #tpu.memory_space<smem>>
    %c16_318 = arith.constant 16 : index
    %c0_319 = arith.constant 0 : index
    %c0_320 = arith.constant 0 : index
    %413 = vector.load %arg1[%c16_318, %c0_319, %c0_320] : memref<25x8x196xf32, #tpu.memory_space<vmem>>, vector<1x8x196xf32>
    %414 = vector.shape_cast %413 : vector<1x8x196xf32> to vector<8x196xf32>
    %415 = vector.broadcast %412 : f32 to vector<8x196xf32>
    %416 = arith.mulf %415, %414 : vector<8x196xf32>
    %417 = arith.addf %411, %416 : vector<8x196xf32>
    %c2_321 = arith.constant 2 : index
    %c17_322 = arith.constant 17 : index
    %418 = memref.load %arg2[%c2_321, %c17_322] : memref<5x25xf32, #tpu.memory_space<smem>>
    %c17_323 = arith.constant 17 : index
    %c0_324 = arith.constant 0 : index
    %c0_325 = arith.constant 0 : index
    %419 = vector.load %arg1[%c17_323, %c0_324, %c0_325] : memref<25x8x196xf32, #tpu.memory_space<vmem>>, vector<1x8x196xf32>
    %420 = vector.shape_cast %419 : vector<1x8x196xf32> to vector<8x196xf32>
    %421 = vector.broadcast %418 : f32 to vector<8x196xf32>
    %422 = arith.mulf %421, %420 : vector<8x196xf32>
    %423 = arith.addf %417, %422 : vector<8x196xf32>
    %c2_326 = arith.constant 2 : index
    %c18_327 = arith.constant 18 : index
    %424 = memref.load %arg2[%c2_326, %c18_327] : memref<5x25xf32, #tpu.memory_space<smem>>
    %c18_328 = arith.constant 18 : index
    %c0_329 = arith.constant 0 : index
    %c0_330 = arith.constant 0 : index
    %425 = vector.load %arg1[%c18_328, %c0_329, %c0_330] : memref<25x8x196xf32, #tpu.memory_space<vmem>>, vector<1x8x196xf32>
    %426 = vector.shape_cast %425 : vector<1x8x196xf32> to vector<8x196xf32>
    %427 = vector.broadcast %424 : f32 to vector<8x196xf32>
    %428 = arith.mulf %427, %426 : vector<8x196xf32>
    %429 = arith.addf %423, %428 : vector<8x196xf32>
    %c2_331 = arith.constant 2 : index
    %c19_332 = arith.constant 19 : index
    %430 = memref.load %arg2[%c2_331, %c19_332] : memref<5x25xf32, #tpu.memory_space<smem>>
    %c19_333 = arith.constant 19 : index
    %c0_334 = arith.constant 0 : index
    %c0_335 = arith.constant 0 : index
    %431 = vector.load %arg1[%c19_333, %c0_334, %c0_335] : memref<25x8x196xf32, #tpu.memory_space<vmem>>, vector<1x8x196xf32>
    %432 = vector.shape_cast %431 : vector<1x8x196xf32> to vector<8x196xf32>
    %433 = vector.broadcast %430 : f32 to vector<8x196xf32>
    %434 = arith.mulf %433, %432 : vector<8x196xf32>
    %435 = arith.addf %429, %434 : vector<8x196xf32>
    %c2_336 = arith.constant 2 : index
    %c20_337 = arith.constant 20 : index
    %436 = memref.load %arg2[%c2_336, %c20_337] : memref<5x25xf32, #tpu.memory_space<smem>>
    %c20_338 = arith.constant 20 : index
    %c0_339 = arith.constant 0 : index
    %c0_340 = arith.constant 0 : index
    %437 = vector.load %arg1[%c20_338, %c0_339, %c0_340] : memref<25x8x196xf32, #tpu.memory_space<vmem>>, vector<1x8x196xf32>
    %438 = vector.shape_cast %437 : vector<1x8x196xf32> to vector<8x196xf32>
    %439 = vector.broadcast %436 : f32 to vector<8x196xf32>
    %440 = arith.mulf %439, %438 : vector<8x196xf32>
    %441 = arith.addf %435, %440 : vector<8x196xf32>
    %c2_341 = arith.constant 2 : index
    %c21_342 = arith.constant 21 : index
    %442 = memref.load %arg2[%c2_341, %c21_342] : memref<5x25xf32, #tpu.memory_space<smem>>
    %c21_343 = arith.constant 21 : index
    %c0_344 = arith.constant 0 : index
    %c0_345 = arith.constant 0 : index
    %443 = vector.load %arg1[%c21_343, %c0_344, %c0_345] : memref<25x8x196xf32, #tpu.memory_space<vmem>>, vector<1x8x196xf32>
    %444 = vector.shape_cast %443 : vector<1x8x196xf32> to vector<8x196xf32>
    %445 = vector.broadcast %442 : f32 to vector<8x196xf32>
    %446 = arith.mulf %445, %444 : vector<8x196xf32>
    %447 = arith.addf %441, %446 : vector<8x196xf32>
    %c2_346 = arith.constant 2 : index
    %c22_347 = arith.constant 22 : index
    %448 = memref.load %arg2[%c2_346, %c22_347] : memref<5x25xf32, #tpu.memory_space<smem>>
    %c22_348 = arith.constant 22 : index
    %c0_349 = arith.constant 0 : index
    %c0_350 = arith.constant 0 : index
    %449 = vector.load %arg1[%c22_348, %c0_349, %c0_350] : memref<25x8x196xf32, #tpu.memory_space<vmem>>, vector<1x8x196xf32>
    %450 = vector.shape_cast %449 : vector<1x8x196xf32> to vector<8x196xf32>
    %451 = vector.broadcast %448 : f32 to vector<8x196xf32>
    %452 = arith.mulf %451, %450 : vector<8x196xf32>
    %453 = arith.addf %447, %452 : vector<8x196xf32>
    %c2_351 = arith.constant 2 : index
    %c23_352 = arith.constant 23 : index
    %454 = memref.load %arg2[%c2_351, %c23_352] : memref<5x25xf32, #tpu.memory_space<smem>>
    %c23_353 = arith.constant 23 : index
    %c0_354 = arith.constant 0 : index
    %c0_355 = arith.constant 0 : index
    %455 = vector.load %arg1[%c23_353, %c0_354, %c0_355] : memref<25x8x196xf32, #tpu.memory_space<vmem>>, vector<1x8x196xf32>
    %456 = vector.shape_cast %455 : vector<1x8x196xf32> to vector<8x196xf32>
    %457 = vector.broadcast %454 : f32 to vector<8x196xf32>
    %458 = arith.mulf %457, %456 : vector<8x196xf32>
    %459 = arith.addf %453, %458 : vector<8x196xf32>
    %c2_356 = arith.constant 2 : index
    %c24_357 = arith.constant 24 : index
    %460 = memref.load %arg2[%c2_356, %c24_357] : memref<5x25xf32, #tpu.memory_space<smem>>
    %c24_358 = arith.constant 24 : index
    %c0_359 = arith.constant 0 : index
    %c0_360 = arith.constant 0 : index
    %461 = vector.load %arg1[%c24_358, %c0_359, %c0_360] : memref<25x8x196xf32, #tpu.memory_space<vmem>>, vector<1x8x196xf32>
    %462 = vector.shape_cast %461 : vector<1x8x196xf32> to vector<8x196xf32>
    %463 = vector.broadcast %460 : f32 to vector<8x196xf32>
    %464 = arith.mulf %463, %462 : vector<8x196xf32>
    %465 = arith.addf %459, %464 : vector<8x196xf32>
    %c2_361 = arith.constant 2 : index
    %466 = memref.load %arg3[%c2_361] : memref<5xf32, #tpu.memory_space<smem>>
    %467 = vector.broadcast %466 : f32 to vector<8x196xf32>
    %468 = arith.addf %465, %467 : vector<8x196xf32>
    %469 = arith.mulf %468, %468 : vector<8x196xf32>
    %c2_362 = arith.constant 2 : index
    %c0_363 = arith.constant 0 : index
    %c0_364 = arith.constant 0 : index
    %470 = vector.load %arg4[%c2_362, %c0_363, %c0_364] : memref<5x196x128xf32, #tpu.memory_space<vmem>>, vector<1x196x128xf32>
    %471 = vector.shape_cast %470 : vector<1x196x128xf32> to vector<196x128xf32>
    %cst_365 = arith.constant dense<0.000000e+00> : vector<8x128xf32>
    %472 = tpu.matmul %469, %471, %cst_365 {dimension_numbers = #tpu.dot_dimension_numbers<[1], [0], [0], [1], [0, 0, 1, 1], [], []>} : vector<8x196xf32>, vector<196x128xf32>, vector<8x128xf32> -> vector<8x128xf32>
    %473 = arith.addf %316, %472 : vector<8x128xf32>
    %c3_366 = arith.constant 3 : index
    %c0_367 = arith.constant 0 : index
    %474 = memref.load %arg2[%c3_366, %c0_367] : memref<5x25xf32, #tpu.memory_space<smem>>
    %c0_368 = arith.constant 0 : index
    %c0_369 = arith.constant 0 : index
    %c0_370 = arith.constant 0 : index
    %475 = vector.load %arg1[%c0_368, %c0_369, %c0_370] : memref<25x8x196xf32, #tpu.memory_space<vmem>>, vector<1x8x196xf32>
    %476 = vector.shape_cast %475 : vector<1x8x196xf32> to vector<8x196xf32>
    %477 = vector.broadcast %474 : f32 to vector<8x196xf32>
    %478 = arith.mulf %477, %476 : vector<8x196xf32>
    %c3_371 = arith.constant 3 : index
    %c1_372 = arith.constant 1 : index
    %479 = memref.load %arg2[%c3_371, %c1_372] : memref<5x25xf32, #tpu.memory_space<smem>>
    %c1_373 = arith.constant 1 : index
    %c0_374 = arith.constant 0 : index
    %c0_375 = arith.constant 0 : index
    %480 = vector.load %arg1[%c1_373, %c0_374, %c0_375] : memref<25x8x196xf32, #tpu.memory_space<vmem>>, vector<1x8x196xf32>
    %481 = vector.shape_cast %480 : vector<1x8x196xf32> to vector<8x196xf32>
    %482 = vector.broadcast %479 : f32 to vector<8x196xf32>
    %483 = arith.mulf %482, %481 : vector<8x196xf32>
    %484 = arith.addf %478, %483 : vector<8x196xf32>
    %c3_376 = arith.constant 3 : index
    %c2_377 = arith.constant 2 : index
    %485 = memref.load %arg2[%c3_376, %c2_377] : memref<5x25xf32, #tpu.memory_space<smem>>
    %c2_378 = arith.constant 2 : index
    %c0_379 = arith.constant 0 : index
    %c0_380 = arith.constant 0 : index
    %486 = vector.load %arg1[%c2_378, %c0_379, %c0_380] : memref<25x8x196xf32, #tpu.memory_space<vmem>>, vector<1x8x196xf32>
    %487 = vector.shape_cast %486 : vector<1x8x196xf32> to vector<8x196xf32>
    %488 = vector.broadcast %485 : f32 to vector<8x196xf32>
    %489 = arith.mulf %488, %487 : vector<8x196xf32>
    %490 = arith.addf %484, %489 : vector<8x196xf32>
    %c3_381 = arith.constant 3 : index
    %c3_382 = arith.constant 3 : index
    %491 = memref.load %arg2[%c3_381, %c3_382] : memref<5x25xf32, #tpu.memory_space<smem>>
    %c3_383 = arith.constant 3 : index
    %c0_384 = arith.constant 0 : index
    %c0_385 = arith.constant 0 : index
    %492 = vector.load %arg1[%c3_383, %c0_384, %c0_385] : memref<25x8x196xf32, #tpu.memory_space<vmem>>, vector<1x8x196xf32>
    %493 = vector.shape_cast %492 : vector<1x8x196xf32> to vector<8x196xf32>
    %494 = vector.broadcast %491 : f32 to vector<8x196xf32>
    %495 = arith.mulf %494, %493 : vector<8x196xf32>
    %496 = arith.addf %490, %495 : vector<8x196xf32>
    %c3_386 = arith.constant 3 : index
    %c4_387 = arith.constant 4 : index
    %497 = memref.load %arg2[%c3_386, %c4_387] : memref<5x25xf32, #tpu.memory_space<smem>>
    %c4_388 = arith.constant 4 : index
    %c0_389 = arith.constant 0 : index
    %c0_390 = arith.constant 0 : index
    %498 = vector.load %arg1[%c4_388, %c0_389, %c0_390] : memref<25x8x196xf32, #tpu.memory_space<vmem>>, vector<1x8x196xf32>
    %499 = vector.shape_cast %498 : vector<1x8x196xf32> to vector<8x196xf32>
    %500 = vector.broadcast %497 : f32 to vector<8x196xf32>
    %501 = arith.mulf %500, %499 : vector<8x196xf32>
    %502 = arith.addf %496, %501 : vector<8x196xf32>
    %c3_391 = arith.constant 3 : index
    %c5_392 = arith.constant 5 : index
    %503 = memref.load %arg2[%c3_391, %c5_392] : memref<5x25xf32, #tpu.memory_space<smem>>
    %c5_393 = arith.constant 5 : index
    %c0_394 = arith.constant 0 : index
    %c0_395 = arith.constant 0 : index
    %504 = vector.load %arg1[%c5_393, %c0_394, %c0_395] : memref<25x8x196xf32, #tpu.memory_space<vmem>>, vector<1x8x196xf32>
    %505 = vector.shape_cast %504 : vector<1x8x196xf32> to vector<8x196xf32>
    %506 = vector.broadcast %503 : f32 to vector<8x196xf32>
    %507 = arith.mulf %506, %505 : vector<8x196xf32>
    %508 = arith.addf %502, %507 : vector<8x196xf32>
    %c3_396 = arith.constant 3 : index
    %c6_397 = arith.constant 6 : index
    %509 = memref.load %arg2[%c3_396, %c6_397] : memref<5x25xf32, #tpu.memory_space<smem>>
    %c6_398 = arith.constant 6 : index
    %c0_399 = arith.constant 0 : index
    %c0_400 = arith.constant 0 : index
    %510 = vector.load %arg1[%c6_398, %c0_399, %c0_400] : memref<25x8x196xf32, #tpu.memory_space<vmem>>, vector<1x8x196xf32>
    %511 = vector.shape_cast %510 : vector<1x8x196xf32> to vector<8x196xf32>
    %512 = vector.broadcast %509 : f32 to vector<8x196xf32>
    %513 = arith.mulf %512, %511 : vector<8x196xf32>
    %514 = arith.addf %508, %513 : vector<8x196xf32>
    %c3_401 = arith.constant 3 : index
    %c7_402 = arith.constant 7 : index
    %515 = memref.load %arg2[%c3_401, %c7_402] : memref<5x25xf32, #tpu.memory_space<smem>>
    %c7_403 = arith.constant 7 : index
    %c0_404 = arith.constant 0 : index
    %c0_405 = arith.constant 0 : index
    %516 = vector.load %arg1[%c7_403, %c0_404, %c0_405] : memref<25x8x196xf32, #tpu.memory_space<vmem>>, vector<1x8x196xf32>
    %517 = vector.shape_cast %516 : vector<1x8x196xf32> to vector<8x196xf32>
    %518 = vector.broadcast %515 : f32 to vector<8x196xf32>
    %519 = arith.mulf %518, %517 : vector<8x196xf32>
    %520 = arith.addf %514, %519 : vector<8x196xf32>
    %c3_406 = arith.constant 3 : index
    %c8_407 = arith.constant 8 : index
    %521 = memref.load %arg2[%c3_406, %c8_407] : memref<5x25xf32, #tpu.memory_space<smem>>
    %c8_408 = arith.constant 8 : index
    %c0_409 = arith.constant 0 : index
    %c0_410 = arith.constant 0 : index
    %522 = vector.load %arg1[%c8_408, %c0_409, %c0_410] : memref<25x8x196xf32, #tpu.memory_space<vmem>>, vector<1x8x196xf32>
    %523 = vector.shape_cast %522 : vector<1x8x196xf32> to vector<8x196xf32>
    %524 = vector.broadcast %521 : f32 to vector<8x196xf32>
    %525 = arith.mulf %524, %523 : vector<8x196xf32>
    %526 = arith.addf %520, %525 : vector<8x196xf32>
    %c3_411 = arith.constant 3 : index
    %c9_412 = arith.constant 9 : index
    %527 = memref.load %arg2[%c3_411, %c9_412] : memref<5x25xf32, #tpu.memory_space<smem>>
    %c9_413 = arith.constant 9 : index
    %c0_414 = arith.constant 0 : index
    %c0_415 = arith.constant 0 : index
    %528 = vector.load %arg1[%c9_413, %c0_414, %c0_415] : memref<25x8x196xf32, #tpu.memory_space<vmem>>, vector<1x8x196xf32>
    %529 = vector.shape_cast %528 : vector<1x8x196xf32> to vector<8x196xf32>
    %530 = vector.broadcast %527 : f32 to vector<8x196xf32>
    %531 = arith.mulf %530, %529 : vector<8x196xf32>
    %532 = arith.addf %526, %531 : vector<8x196xf32>
    %c3_416 = arith.constant 3 : index
    %c10_417 = arith.constant 10 : index
    %533 = memref.load %arg2[%c3_416, %c10_417] : memref<5x25xf32, #tpu.memory_space<smem>>
    %c10_418 = arith.constant 10 : index
    %c0_419 = arith.constant 0 : index
    %c0_420 = arith.constant 0 : index
    %534 = vector.load %arg1[%c10_418, %c0_419, %c0_420] : memref<25x8x196xf32, #tpu.memory_space<vmem>>, vector<1x8x196xf32>
    %535 = vector.shape_cast %534 : vector<1x8x196xf32> to vector<8x196xf32>
    %536 = vector.broadcast %533 : f32 to vector<8x196xf32>
    %537 = arith.mulf %536, %535 : vector<8x196xf32>
    %538 = arith.addf %532, %537 : vector<8x196xf32>
    %c3_421 = arith.constant 3 : index
    %c11_422 = arith.constant 11 : index
    %539 = memref.load %arg2[%c3_421, %c11_422] : memref<5x25xf32, #tpu.memory_space<smem>>
    %c11_423 = arith.constant 11 : index
    %c0_424 = arith.constant 0 : index
    %c0_425 = arith.constant 0 : index
    %540 = vector.load %arg1[%c11_423, %c0_424, %c0_425] : memref<25x8x196xf32, #tpu.memory_space<vmem>>, vector<1x8x196xf32>
    %541 = vector.shape_cast %540 : vector<1x8x196xf32> to vector<8x196xf32>
    %542 = vector.broadcast %539 : f32 to vector<8x196xf32>
    %543 = arith.mulf %542, %541 : vector<8x196xf32>
    %544 = arith.addf %538, %543 : vector<8x196xf32>
    %c3_426 = arith.constant 3 : index
    %c12_427 = arith.constant 12 : index
    %545 = memref.load %arg2[%c3_426, %c12_427] : memref<5x25xf32, #tpu.memory_space<smem>>
    %c12_428 = arith.constant 12 : index
    %c0_429 = arith.constant 0 : index
    %c0_430 = arith.constant 0 : index
    %546 = vector.load %arg1[%c12_428, %c0_429, %c0_430] : memref<25x8x196xf32, #tpu.memory_space<vmem>>, vector<1x8x196xf32>
    %547 = vector.shape_cast %546 : vector<1x8x196xf32> to vector<8x196xf32>
    %548 = vector.broadcast %545 : f32 to vector<8x196xf32>
    %549 = arith.mulf %548, %547 : vector<8x196xf32>
    %550 = arith.addf %544, %549 : vector<8x196xf32>
    %c3_431 = arith.constant 3 : index
    %c13_432 = arith.constant 13 : index
    %551 = memref.load %arg2[%c3_431, %c13_432] : memref<5x25xf32, #tpu.memory_space<smem>>
    %c13_433 = arith.constant 13 : index
    %c0_434 = arith.constant 0 : index
    %c0_435 = arith.constant 0 : index
    %552 = vector.load %arg1[%c13_433, %c0_434, %c0_435] : memref<25x8x196xf32, #tpu.memory_space<vmem>>, vector<1x8x196xf32>
    %553 = vector.shape_cast %552 : vector<1x8x196xf32> to vector<8x196xf32>
    %554 = vector.broadcast %551 : f32 to vector<8x196xf32>
    %555 = arith.mulf %554, %553 : vector<8x196xf32>
    %556 = arith.addf %550, %555 : vector<8x196xf32>
    %c3_436 = arith.constant 3 : index
    %c14_437 = arith.constant 14 : index
    %557 = memref.load %arg2[%c3_436, %c14_437] : memref<5x25xf32, #tpu.memory_space<smem>>
    %c14_438 = arith.constant 14 : index
    %c0_439 = arith.constant 0 : index
    %c0_440 = arith.constant 0 : index
    %558 = vector.load %arg1[%c14_438, %c0_439, %c0_440] : memref<25x8x196xf32, #tpu.memory_space<vmem>>, vector<1x8x196xf32>
    %559 = vector.shape_cast %558 : vector<1x8x196xf32> to vector<8x196xf32>
    %560 = vector.broadcast %557 : f32 to vector<8x196xf32>
    %561 = arith.mulf %560, %559 : vector<8x196xf32>
    %562 = arith.addf %556, %561 : vector<8x196xf32>
    %c3_441 = arith.constant 3 : index
    %c15_442 = arith.constant 15 : index
    %563 = memref.load %arg2[%c3_441, %c15_442] : memref<5x25xf32, #tpu.memory_space<smem>>
    %c15_443 = arith.constant 15 : index
    %c0_444 = arith.constant 0 : index
    %c0_445 = arith.constant 0 : index
    %564 = vector.load %arg1[%c15_443, %c0_444, %c0_445] : memref<25x8x196xf32, #tpu.memory_space<vmem>>, vector<1x8x196xf32>
    %565 = vector.shape_cast %564 : vector<1x8x196xf32> to vector<8x196xf32>
    %566 = vector.broadcast %563 : f32 to vector<8x196xf32>
    %567 = arith.mulf %566, %565 : vector<8x196xf32>
    %568 = arith.addf %562, %567 : vector<8x196xf32>
    %c3_446 = arith.constant 3 : index
    %c16_447 = arith.constant 16 : index
    %569 = memref.load %arg2[%c3_446, %c16_447] : memref<5x25xf32, #tpu.memory_space<smem>>
    %c16_448 = arith.constant 16 : index
    %c0_449 = arith.constant 0 : index
    %c0_450 = arith.constant 0 : index
    %570 = vector.load %arg1[%c16_448, %c0_449, %c0_450] : memref<25x8x196xf32, #tpu.memory_space<vmem>>, vector<1x8x196xf32>
    %571 = vector.shape_cast %570 : vector<1x8x196xf32> to vector<8x196xf32>
    %572 = vector.broadcast %569 : f32 to vector<8x196xf32>
    %573 = arith.mulf %572, %571 : vector<8x196xf32>
    %574 = arith.addf %568, %573 : vector<8x196xf32>
    %c3_451 = arith.constant 3 : index
    %c17_452 = arith.constant 17 : index
    %575 = memref.load %arg2[%c3_451, %c17_452] : memref<5x25xf32, #tpu.memory_space<smem>>
    %c17_453 = arith.constant 17 : index
    %c0_454 = arith.constant 0 : index
    %c0_455 = arith.constant 0 : index
    %576 = vector.load %arg1[%c17_453, %c0_454, %c0_455] : memref<25x8x196xf32, #tpu.memory_space<vmem>>, vector<1x8x196xf32>
    %577 = vector.shape_cast %576 : vector<1x8x196xf32> to vector<8x196xf32>
    %578 = vector.broadcast %575 : f32 to vector<8x196xf32>
    %579 = arith.mulf %578, %577 : vector<8x196xf32>
    %580 = arith.addf %574, %579 : vector<8x196xf32>
    %c3_456 = arith.constant 3 : index
    %c18_457 = arith.constant 18 : index
    %581 = memref.load %arg2[%c3_456, %c18_457] : memref<5x25xf32, #tpu.memory_space<smem>>
    %c18_458 = arith.constant 18 : index
    %c0_459 = arith.constant 0 : index
    %c0_460 = arith.constant 0 : index
    %582 = vector.load %arg1[%c18_458, %c0_459, %c0_460] : memref<25x8x196xf32, #tpu.memory_space<vmem>>, vector<1x8x196xf32>
    %583 = vector.shape_cast %582 : vector<1x8x196xf32> to vector<8x196xf32>
    %584 = vector.broadcast %581 : f32 to vector<8x196xf32>
    %585 = arith.mulf %584, %583 : vector<8x196xf32>
    %586 = arith.addf %580, %585 : vector<8x196xf32>
    %c3_461 = arith.constant 3 : index
    %c19_462 = arith.constant 19 : index
    %587 = memref.load %arg2[%c3_461, %c19_462] : memref<5x25xf32, #tpu.memory_space<smem>>
    %c19_463 = arith.constant 19 : index
    %c0_464 = arith.constant 0 : index
    %c0_465 = arith.constant 0 : index
    %588 = vector.load %arg1[%c19_463, %c0_464, %c0_465] : memref<25x8x196xf32, #tpu.memory_space<vmem>>, vector<1x8x196xf32>
    %589 = vector.shape_cast %588 : vector<1x8x196xf32> to vector<8x196xf32>
    %590 = vector.broadcast %587 : f32 to vector<8x196xf32>
    %591 = arith.mulf %590, %589 : vector<8x196xf32>
    %592 = arith.addf %586, %591 : vector<8x196xf32>
    %c3_466 = arith.constant 3 : index
    %c20_467 = arith.constant 20 : index
    %593 = memref.load %arg2[%c3_466, %c20_467] : memref<5x25xf32, #tpu.memory_space<smem>>
    %c20_468 = arith.constant 20 : index
    %c0_469 = arith.constant 0 : index
    %c0_470 = arith.constant 0 : index
    %594 = vector.load %arg1[%c20_468, %c0_469, %c0_470] : memref<25x8x196xf32, #tpu.memory_space<vmem>>, vector<1x8x196xf32>
    %595 = vector.shape_cast %594 : vector<1x8x196xf32> to vector<8x196xf32>
    %596 = vector.broadcast %593 : f32 to vector<8x196xf32>
    %597 = arith.mulf %596, %595 : vector<8x196xf32>
    %598 = arith.addf %592, %597 : vector<8x196xf32>
    %c3_471 = arith.constant 3 : index
    %c21_472 = arith.constant 21 : index
    %599 = memref.load %arg2[%c3_471, %c21_472] : memref<5x25xf32, #tpu.memory_space<smem>>
    %c21_473 = arith.constant 21 : index
    %c0_474 = arith.constant 0 : index
    %c0_475 = arith.constant 0 : index
    %600 = vector.load %arg1[%c21_473, %c0_474, %c0_475] : memref<25x8x196xf32, #tpu.memory_space<vmem>>, vector<1x8x196xf32>
    %601 = vector.shape_cast %600 : vector<1x8x196xf32> to vector<8x196xf32>
    %602 = vector.broadcast %599 : f32 to vector<8x196xf32>
    %603 = arith.mulf %602, %601 : vector<8x196xf32>
    %604 = arith.addf %598, %603 : vector<8x196xf32>
    %c3_476 = arith.constant 3 : index
    %c22_477 = arith.constant 22 : index
    %605 = memref.load %arg2[%c3_476, %c22_477] : memref<5x25xf32, #tpu.memory_space<smem>>
    %c22_478 = arith.constant 22 : index
    %c0_479 = arith.constant 0 : index
    %c0_480 = arith.constant 0 : index
    %606 = vector.load %arg1[%c22_478, %c0_479, %c0_480] : memref<25x8x196xf32, #tpu.memory_space<vmem>>, vector<1x8x196xf32>
    %607 = vector.shape_cast %606 : vector<1x8x196xf32> to vector<8x196xf32>
    %608 = vector.broadcast %605 : f32 to vector<8x196xf32>
    %609 = arith.mulf %608, %607 : vector<8x196xf32>
    %610 = arith.addf %604, %609 : vector<8x196xf32>
    %c3_481 = arith.constant 3 : index
    %c23_482 = arith.constant 23 : index
    %611 = memref.load %arg2[%c3_481, %c23_482] : memref<5x25xf32, #tpu.memory_space<smem>>
    %c23_483 = arith.constant 23 : index
    %c0_484 = arith.constant 0 : index
    %c0_485 = arith.constant 0 : index
    %612 = vector.load %arg1[%c23_483, %c0_484, %c0_485] : memref<25x8x196xf32, #tpu.memory_space<vmem>>, vector<1x8x196xf32>
    %613 = vector.shape_cast %612 : vector<1x8x196xf32> to vector<8x196xf32>
    %614 = vector.broadcast %611 : f32 to vector<8x196xf32>
    %615 = arith.mulf %614, %613 : vector<8x196xf32>
    %616 = arith.addf %610, %615 : vector<8x196xf32>
    %c3_486 = arith.constant 3 : index
    %c24_487 = arith.constant 24 : index
    %617 = memref.load %arg2[%c3_486, %c24_487] : memref<5x25xf32, #tpu.memory_space<smem>>
    %c24_488 = arith.constant 24 : index
    %c0_489 = arith.constant 0 : index
    %c0_490 = arith.constant 0 : index
    %618 = vector.load %arg1[%c24_488, %c0_489, %c0_490] : memref<25x8x196xf32, #tpu.memory_space<vmem>>, vector<1x8x196xf32>
    %619 = vector.shape_cast %618 : vector<1x8x196xf32> to vector<8x196xf32>
    %620 = vector.broadcast %617 : f32 to vector<8x196xf32>
    %621 = arith.mulf %620, %619 : vector<8x196xf32>
    %622 = arith.addf %616, %621 : vector<8x196xf32>
    %c3_491 = arith.constant 3 : index
    %623 = memref.load %arg3[%c3_491] : memref<5xf32, #tpu.memory_space<smem>>
    %624 = vector.broadcast %623 : f32 to vector<8x196xf32>
    %625 = arith.addf %622, %624 : vector<8x196xf32>
    %626 = arith.mulf %625, %625 : vector<8x196xf32>
    %c3_492 = arith.constant 3 : index
    %c0_493 = arith.constant 0 : index
    %c0_494 = arith.constant 0 : index
    %627 = vector.load %arg4[%c3_492, %c0_493, %c0_494] : memref<5x196x128xf32, #tpu.memory_space<vmem>>, vector<1x196x128xf32>
    %628 = vector.shape_cast %627 : vector<1x196x128xf32> to vector<196x128xf32>
    %cst_495 = arith.constant dense<0.000000e+00> : vector<8x128xf32>
    %629 = tpu.matmul %626, %628, %cst_495 {dimension_numbers = #tpu.dot_dimension_numbers<[1], [0], [0], [1], [0, 0, 1, 1], [], []>} : vector<8x196xf32>, vector<196x128xf32>, vector<8x128xf32> -> vector<8x128xf32>
    %630 = arith.addf %473, %629 : vector<8x128xf32>
    %c4_496 = arith.constant 4 : index
    %c0_497 = arith.constant 0 : index
    %631 = memref.load %arg2[%c4_496, %c0_497] : memref<5x25xf32, #tpu.memory_space<smem>>
    %c0_498 = arith.constant 0 : index
    %c0_499 = arith.constant 0 : index
    %c0_500 = arith.constant 0 : index
    %632 = vector.load %arg1[%c0_498, %c0_499, %c0_500] : memref<25x8x196xf32, #tpu.memory_space<vmem>>, vector<1x8x196xf32>
    %633 = vector.shape_cast %632 : vector<1x8x196xf32> to vector<8x196xf32>
    %634 = vector.broadcast %631 : f32 to vector<8x196xf32>
    %635 = arith.mulf %634, %633 : vector<8x196xf32>
    %c4_501 = arith.constant 4 : index
    %c1_502 = arith.constant 1 : index
    %636 = memref.load %arg2[%c4_501, %c1_502] : memref<5x25xf32, #tpu.memory_space<smem>>
    %c1_503 = arith.constant 1 : index
    %c0_504 = arith.constant 0 : index
    %c0_505 = arith.constant 0 : index
    %637 = vector.load %arg1[%c1_503, %c0_504, %c0_505] : memref<25x8x196xf32, #tpu.memory_space<vmem>>, vector<1x8x196xf32>
    %638 = vector.shape_cast %637 : vector<1x8x196xf32> to vector<8x196xf32>
    %639 = vector.broadcast %636 : f32 to vector<8x196xf32>
    %640 = arith.mulf %639, %638 : vector<8x196xf32>
    %641 = arith.addf %635, %640 : vector<8x196xf32>
    %c4_506 = arith.constant 4 : index
    %c2_507 = arith.constant 2 : index
    %642 = memref.load %arg2[%c4_506, %c2_507] : memref<5x25xf32, #tpu.memory_space<smem>>
    %c2_508 = arith.constant 2 : index
    %c0_509 = arith.constant 0 : index
    %c0_510 = arith.constant 0 : index
    %643 = vector.load %arg1[%c2_508, %c0_509, %c0_510] : memref<25x8x196xf32, #tpu.memory_space<vmem>>, vector<1x8x196xf32>
    %644 = vector.shape_cast %643 : vector<1x8x196xf32> to vector<8x196xf32>
    %645 = vector.broadcast %642 : f32 to vector<8x196xf32>
    %646 = arith.mulf %645, %644 : vector<8x196xf32>
    %647 = arith.addf %641, %646 : vector<8x196xf32>
    %c4_511 = arith.constant 4 : index
    %c3_512 = arith.constant 3 : index
    %648 = memref.load %arg2[%c4_511, %c3_512] : memref<5x25xf32, #tpu.memory_space<smem>>
    %c3_513 = arith.constant 3 : index
    %c0_514 = arith.constant 0 : index
    %c0_515 = arith.constant 0 : index
    %649 = vector.load %arg1[%c3_513, %c0_514, %c0_515] : memref<25x8x196xf32, #tpu.memory_space<vmem>>, vector<1x8x196xf32>
    %650 = vector.shape_cast %649 : vector<1x8x196xf32> to vector<8x196xf32>
    %651 = vector.broadcast %648 : f32 to vector<8x196xf32>
    %652 = arith.mulf %651, %650 : vector<8x196xf32>
    %653 = arith.addf %647, %652 : vector<8x196xf32>
    %c4_516 = arith.constant 4 : index
    %c4_517 = arith.constant 4 : index
    %654 = memref.load %arg2[%c4_516, %c4_517] : memref<5x25xf32, #tpu.memory_space<smem>>
    %c4_518 = arith.constant 4 : index
    %c0_519 = arith.constant 0 : index
    %c0_520 = arith.constant 0 : index
    %655 = vector.load %arg1[%c4_518, %c0_519, %c0_520] : memref<25x8x196xf32, #tpu.memory_space<vmem>>, vector<1x8x196xf32>
    %656 = vector.shape_cast %655 : vector<1x8x196xf32> to vector<8x196xf32>
    %657 = vector.broadcast %654 : f32 to vector<8x196xf32>
    %658 = arith.mulf %657, %656 : vector<8x196xf32>
    %659 = arith.addf %653, %658 : vector<8x196xf32>
    %c4_521 = arith.constant 4 : index
    %c5_522 = arith.constant 5 : index
    %660 = memref.load %arg2[%c4_521, %c5_522] : memref<5x25xf32, #tpu.memory_space<smem>>
    %c5_523 = arith.constant 5 : index
    %c0_524 = arith.constant 0 : index
    %c0_525 = arith.constant 0 : index
    %661 = vector.load %arg1[%c5_523, %c0_524, %c0_525] : memref<25x8x196xf32, #tpu.memory_space<vmem>>, vector<1x8x196xf32>
    %662 = vector.shape_cast %661 : vector<1x8x196xf32> to vector<8x196xf32>
    %663 = vector.broadcast %660 : f32 to vector<8x196xf32>
    %664 = arith.mulf %663, %662 : vector<8x196xf32>
    %665 = arith.addf %659, %664 : vector<8x196xf32>
    %c4_526 = arith.constant 4 : index
    %c6_527 = arith.constant 6 : index
    %666 = memref.load %arg2[%c4_526, %c6_527] : memref<5x25xf32, #tpu.memory_space<smem>>
    %c6_528 = arith.constant 6 : index
    %c0_529 = arith.constant 0 : index
    %c0_530 = arith.constant 0 : index
    %667 = vector.load %arg1[%c6_528, %c0_529, %c0_530] : memref<25x8x196xf32, #tpu.memory_space<vmem>>, vector<1x8x196xf32>
    %668 = vector.shape_cast %667 : vector<1x8x196xf32> to vector<8x196xf32>
    %669 = vector.broadcast %666 : f32 to vector<8x196xf32>
    %670 = arith.mulf %669, %668 : vector<8x196xf32>
    %671 = arith.addf %665, %670 : vector<8x196xf32>
    %c4_531 = arith.constant 4 : index
    %c7_532 = arith.constant 7 : index
    %672 = memref.load %arg2[%c4_531, %c7_532] : memref<5x25xf32, #tpu.memory_space<smem>>
    %c7_533 = arith.constant 7 : index
    %c0_534 = arith.constant 0 : index
    %c0_535 = arith.constant 0 : index
    %673 = vector.load %arg1[%c7_533, %c0_534, %c0_535] : memref<25x8x196xf32, #tpu.memory_space<vmem>>, vector<1x8x196xf32>
    %674 = vector.shape_cast %673 : vector<1x8x196xf32> to vector<8x196xf32>
    %675 = vector.broadcast %672 : f32 to vector<8x196xf32>
    %676 = arith.mulf %675, %674 : vector<8x196xf32>
    %677 = arith.addf %671, %676 : vector<8x196xf32>
    %c4_536 = arith.constant 4 : index
    %c8_537 = arith.constant 8 : index
    %678 = memref.load %arg2[%c4_536, %c8_537] : memref<5x25xf32, #tpu.memory_space<smem>>
    %c8_538 = arith.constant 8 : index
    %c0_539 = arith.constant 0 : index
    %c0_540 = arith.constant 0 : index
    %679 = vector.load %arg1[%c8_538, %c0_539, %c0_540] : memref<25x8x196xf32, #tpu.memory_space<vmem>>, vector<1x8x196xf32>
    %680 = vector.shape_cast %679 : vector<1x8x196xf32> to vector<8x196xf32>
    %681 = vector.broadcast %678 : f32 to vector<8x196xf32>
    %682 = arith.mulf %681, %680 : vector<8x196xf32>
    %683 = arith.addf %677, %682 : vector<8x196xf32>
    %c4_541 = arith.constant 4 : index
    %c9_542 = arith.constant 9 : index
    %684 = memref.load %arg2[%c4_541, %c9_542] : memref<5x25xf32, #tpu.memory_space<smem>>
    %c9_543 = arith.constant 9 : index
    %c0_544 = arith.constant 0 : index
    %c0_545 = arith.constant 0 : index
    %685 = vector.load %arg1[%c9_543, %c0_544, %c0_545] : memref<25x8x196xf32, #tpu.memory_space<vmem>>, vector<1x8x196xf32>
    %686 = vector.shape_cast %685 : vector<1x8x196xf32> to vector<8x196xf32>
    %687 = vector.broadcast %684 : f32 to vector<8x196xf32>
    %688 = arith.mulf %687, %686 : vector<8x196xf32>
    %689 = arith.addf %683, %688 : vector<8x196xf32>
    %c4_546 = arith.constant 4 : index
    %c10_547 = arith.constant 10 : index
    %690 = memref.load %arg2[%c4_546, %c10_547] : memref<5x25xf32, #tpu.memory_space<smem>>
    %c10_548 = arith.constant 10 : index
    %c0_549 = arith.constant 0 : index
    %c0_550 = arith.constant 0 : index
    %691 = vector.load %arg1[%c10_548, %c0_549, %c0_550] : memref<25x8x196xf32, #tpu.memory_space<vmem>>, vector<1x8x196xf32>
    %692 = vector.shape_cast %691 : vector<1x8x196xf32> to vector<8x196xf32>
    %693 = vector.broadcast %690 : f32 to vector<8x196xf32>
    %694 = arith.mulf %693, %692 : vector<8x196xf32>
    %695 = arith.addf %689, %694 : vector<8x196xf32>
    %c4_551 = arith.constant 4 : index
    %c11_552 = arith.constant 11 : index
    %696 = memref.load %arg2[%c4_551, %c11_552] : memref<5x25xf32, #tpu.memory_space<smem>>
    %c11_553 = arith.constant 11 : index
    %c0_554 = arith.constant 0 : index
    %c0_555 = arith.constant 0 : index
    %697 = vector.load %arg1[%c11_553, %c0_554, %c0_555] : memref<25x8x196xf32, #tpu.memory_space<vmem>>, vector<1x8x196xf32>
    %698 = vector.shape_cast %697 : vector<1x8x196xf32> to vector<8x196xf32>
    %699 = vector.broadcast %696 : f32 to vector<8x196xf32>
    %700 = arith.mulf %699, %698 : vector<8x196xf32>
    %701 = arith.addf %695, %700 : vector<8x196xf32>
    %c4_556 = arith.constant 4 : index
    %c12_557 = arith.constant 12 : index
    %702 = memref.load %arg2[%c4_556, %c12_557] : memref<5x25xf32, #tpu.memory_space<smem>>
    %c12_558 = arith.constant 12 : index
    %c0_559 = arith.constant 0 : index
    %c0_560 = arith.constant 0 : index
    %703 = vector.load %arg1[%c12_558, %c0_559, %c0_560] : memref<25x8x196xf32, #tpu.memory_space<vmem>>, vector<1x8x196xf32>
    %704 = vector.shape_cast %703 : vector<1x8x196xf32> to vector<8x196xf32>
    %705 = vector.broadcast %702 : f32 to vector<8x196xf32>
    %706 = arith.mulf %705, %704 : vector<8x196xf32>
    %707 = arith.addf %701, %706 : vector<8x196xf32>
    %c4_561 = arith.constant 4 : index
    %c13_562 = arith.constant 13 : index
    %708 = memref.load %arg2[%c4_561, %c13_562] : memref<5x25xf32, #tpu.memory_space<smem>>
    %c13_563 = arith.constant 13 : index
    %c0_564 = arith.constant 0 : index
    %c0_565 = arith.constant 0 : index
    %709 = vector.load %arg1[%c13_563, %c0_564, %c0_565] : memref<25x8x196xf32, #tpu.memory_space<vmem>>, vector<1x8x196xf32>
    %710 = vector.shape_cast %709 : vector<1x8x196xf32> to vector<8x196xf32>
    %711 = vector.broadcast %708 : f32 to vector<8x196xf32>
    %712 = arith.mulf %711, %710 : vector<8x196xf32>
    %713 = arith.addf %707, %712 : vector<8x196xf32>
    %c4_566 = arith.constant 4 : index
    %c14_567 = arith.constant 14 : index
    %714 = memref.load %arg2[%c4_566, %c14_567] : memref<5x25xf32, #tpu.memory_space<smem>>
    %c14_568 = arith.constant 14 : index
    %c0_569 = arith.constant 0 : index
    %c0_570 = arith.constant 0 : index
    %715 = vector.load %arg1[%c14_568, %c0_569, %c0_570] : memref<25x8x196xf32, #tpu.memory_space<vmem>>, vector<1x8x196xf32>
    %716 = vector.shape_cast %715 : vector<1x8x196xf32> to vector<8x196xf32>
    %717 = vector.broadcast %714 : f32 to vector<8x196xf32>
    %718 = arith.mulf %717, %716 : vector<8x196xf32>
    %719 = arith.addf %713, %718 : vector<8x196xf32>
    %c4_571 = arith.constant 4 : index
    %c15_572 = arith.constant 15 : index
    %720 = memref.load %arg2[%c4_571, %c15_572] : memref<5x25xf32, #tpu.memory_space<smem>>
    %c15_573 = arith.constant 15 : index
    %c0_574 = arith.constant 0 : index
    %c0_575 = arith.constant 0 : index
    %721 = vector.load %arg1[%c15_573, %c0_574, %c0_575] : memref<25x8x196xf32, #tpu.memory_space<vmem>>, vector<1x8x196xf32>
    %722 = vector.shape_cast %721 : vector<1x8x196xf32> to vector<8x196xf32>
    %723 = vector.broadcast %720 : f32 to vector<8x196xf32>
    %724 = arith.mulf %723, %722 : vector<8x196xf32>
    %725 = arith.addf %719, %724 : vector<8x196xf32>
    %c4_576 = arith.constant 4 : index
    %c16_577 = arith.constant 16 : index
    %726 = memref.load %arg2[%c4_576, %c16_577] : memref<5x25xf32, #tpu.memory_space<smem>>
    %c16_578 = arith.constant 16 : index
    %c0_579 = arith.constant 0 : index
    %c0_580 = arith.constant 0 : index
    %727 = vector.load %arg1[%c16_578, %c0_579, %c0_580] : memref<25x8x196xf32, #tpu.memory_space<vmem>>, vector<1x8x196xf32>
    %728 = vector.shape_cast %727 : vector<1x8x196xf32> to vector<8x196xf32>
    %729 = vector.broadcast %726 : f32 to vector<8x196xf32>
    %730 = arith.mulf %729, %728 : vector<8x196xf32>
    %731 = arith.addf %725, %730 : vector<8x196xf32>
    %c4_581 = arith.constant 4 : index
    %c17_582 = arith.constant 17 : index
    %732 = memref.load %arg2[%c4_581, %c17_582] : memref<5x25xf32, #tpu.memory_space<smem>>
    %c17_583 = arith.constant 17 : index
    %c0_584 = arith.constant 0 : index
    %c0_585 = arith.constant 0 : index
    %733 = vector.load %arg1[%c17_583, %c0_584, %c0_585] : memref<25x8x196xf32, #tpu.memory_space<vmem>>, vector<1x8x196xf32>
    %734 = vector.shape_cast %733 : vector<1x8x196xf32> to vector<8x196xf32>
    %735 = vector.broadcast %732 : f32 to vector<8x196xf32>
    %736 = arith.mulf %735, %734 : vector<8x196xf32>
    %737 = arith.addf %731, %736 : vector<8x196xf32>
    %c4_586 = arith.constant 4 : index
    %c18_587 = arith.constant 18 : index
    %738 = memref.load %arg2[%c4_586, %c18_587] : memref<5x25xf32, #tpu.memory_space<smem>>
    %c18_588 = arith.constant 18 : index
    %c0_589 = arith.constant 0 : index
    %c0_590 = arith.constant 0 : index
    %739 = vector.load %arg1[%c18_588, %c0_589, %c0_590] : memref<25x8x196xf32, #tpu.memory_space<vmem>>, vector<1x8x196xf32>
    %740 = vector.shape_cast %739 : vector<1x8x196xf32> to vector<8x196xf32>
    %741 = vector.broadcast %738 : f32 to vector<8x196xf32>
    %742 = arith.mulf %741, %740 : vector<8x196xf32>
    %743 = arith.addf %737, %742 : vector<8x196xf32>
    %c4_591 = arith.constant 4 : index
    %c19_592 = arith.constant 19 : index
    %744 = memref.load %arg2[%c4_591, %c19_592] : memref<5x25xf32, #tpu.memory_space<smem>>
    %c19_593 = arith.constant 19 : index
    %c0_594 = arith.constant 0 : index
    %c0_595 = arith.constant 0 : index
    %745 = vector.load %arg1[%c19_593, %c0_594, %c0_595] : memref<25x8x196xf32, #tpu.memory_space<vmem>>, vector<1x8x196xf32>
    %746 = vector.shape_cast %745 : vector<1x8x196xf32> to vector<8x196xf32>
    %747 = vector.broadcast %744 : f32 to vector<8x196xf32>
    %748 = arith.mulf %747, %746 : vector<8x196xf32>
    %749 = arith.addf %743, %748 : vector<8x196xf32>
    %c4_596 = arith.constant 4 : index
    %c20_597 = arith.constant 20 : index
    %750 = memref.load %arg2[%c4_596, %c20_597] : memref<5x25xf32, #tpu.memory_space<smem>>
    %c20_598 = arith.constant 20 : index
    %c0_599 = arith.constant 0 : index
    %c0_600 = arith.constant 0 : index
    %751 = vector.load %arg1[%c20_598, %c0_599, %c0_600] : memref<25x8x196xf32, #tpu.memory_space<vmem>>, vector<1x8x196xf32>
    %752 = vector.shape_cast %751 : vector<1x8x196xf32> to vector<8x196xf32>
    %753 = vector.broadcast %750 : f32 to vector<8x196xf32>
    %754 = arith.mulf %753, %752 : vector<8x196xf32>
    %755 = arith.addf %749, %754 : vector<8x196xf32>
    %c4_601 = arith.constant 4 : index
    %c21_602 = arith.constant 21 : index
    %756 = memref.load %arg2[%c4_601, %c21_602] : memref<5x25xf32, #tpu.memory_space<smem>>
    %c21_603 = arith.constant 21 : index
    %c0_604 = arith.constant 0 : index
    %c0_605 = arith.constant 0 : index
    %757 = vector.load %arg1[%c21_603, %c0_604, %c0_605] : memref<25x8x196xf32, #tpu.memory_space<vmem>>, vector<1x8x196xf32>
    %758 = vector.shape_cast %757 : vector<1x8x196xf32> to vector<8x196xf32>
    %759 = vector.broadcast %756 : f32 to vector<8x196xf32>
    %760 = arith.mulf %759, %758 : vector<8x196xf32>
    %761 = arith.addf %755, %760 : vector<8x196xf32>
    %c4_606 = arith.constant 4 : index
    %c22_607 = arith.constant 22 : index
    %762 = memref.load %arg2[%c4_606, %c22_607] : memref<5x25xf32, #tpu.memory_space<smem>>
    %c22_608 = arith.constant 22 : index
    %c0_609 = arith.constant 0 : index
    %c0_610 = arith.constant 0 : index
    %763 = vector.load %arg1[%c22_608, %c0_609, %c0_610] : memref<25x8x196xf32, #tpu.memory_space<vmem>>, vector<1x8x196xf32>
    %764 = vector.shape_cast %763 : vector<1x8x196xf32> to vector<8x196xf32>
    %765 = vector.broadcast %762 : f32 to vector<8x196xf32>
    %766 = arith.mulf %765, %764 : vector<8x196xf32>
    %767 = arith.addf %761, %766 : vector<8x196xf32>
    %c4_611 = arith.constant 4 : index
    %c23_612 = arith.constant 23 : index
    %768 = memref.load %arg2[%c4_611, %c23_612] : memref<5x25xf32, #tpu.memory_space<smem>>
    %c23_613 = arith.constant 23 : index
    %c0_614 = arith.constant 0 : index
    %c0_615 = arith.constant 0 : index
    %769 = vector.load %arg1[%c23_613, %c0_614, %c0_615] : memref<25x8x196xf32, #tpu.memory_space<vmem>>, vector<1x8x196xf32>
    %770 = vector.shape_cast %769 : vector<1x8x196xf32> to vector<8x196xf32>
    %771 = vector.broadcast %768 : f32 to vector<8x196xf32>
    %772 = arith.mulf %771, %770 : vector<8x196xf32>
    %773 = arith.addf %767, %772 : vector<8x196xf32>
    %c4_616 = arith.constant 4 : index
    %c24_617 = arith.constant 24 : index
    %774 = memref.load %arg2[%c4_616, %c24_617] : memref<5x25xf32, #tpu.memory_space<smem>>
    %c24_618 = arith.constant 24 : index
    %c0_619 = arith.constant 0 : index
    %c0_620 = arith.constant 0 : index
    %775 = vector.load %arg1[%c24_618, %c0_619, %c0_620] : memref<25x8x196xf32, #tpu.memory_space<vmem>>, vector<1x8x196xf32>
    %776 = vector.shape_cast %775 : vector<1x8x196xf32> to vector<8x196xf32>
    %777 = vector.broadcast %774 : f32 to vector<8x196xf32>
    %778 = arith.mulf %777, %776 : vector<8x196xf32>
    %779 = arith.addf %773, %778 : vector<8x196xf32>
    %c4_621 = arith.constant 4 : index
    %780 = memref.load %arg3[%c4_621] : memref<5xf32, #tpu.memory_space<smem>>
    %781 = vector.broadcast %780 : f32 to vector<8x196xf32>
    %782 = arith.addf %779, %781 : vector<8x196xf32>
    %783 = arith.mulf %782, %782 : vector<8x196xf32>
    %c4_622 = arith.constant 4 : index
    %c0_623 = arith.constant 0 : index
    %c0_624 = arith.constant 0 : index
    %784 = vector.load %arg4[%c4_622, %c0_623, %c0_624] : memref<5x196x128xf32, #tpu.memory_space<vmem>>, vector<1x196x128xf32>
    %785 = vector.shape_cast %784 : vector<1x196x128xf32> to vector<196x128xf32>
    %cst_625 = arith.constant dense<0.000000e+00> : vector<8x128xf32>
    %786 = tpu.matmul %783, %785, %cst_625 {dimension_numbers = #tpu.dot_dimension_numbers<[1], [0], [0], [1], [0, 0, 1, 1], [], []>} : vector<8x196xf32>, vector<196x128xf32>, vector<8x128xf32> -> vector<8x128xf32>
    %787 = arith.addf %630, %786 : vector<8x128xf32>
    %788 = arith.mulf %787, %787 : vector<8x128xf32>
    %c0_626 = arith.constant 0 : index
    %c0_627 = arith.constant 0 : index
    %789 = vector.load %arg6[%c0_626, %c0_627] : memref<128x128xf32, #tpu.memory_space<vmem>>, vector<128x128xf32>
    %cst_628 = arith.constant dense<0.000000e+00> : vector<8x128xf32>
    %790 = tpu.matmul %788, %789, %cst_628 {dimension_numbers = #tpu.dot_dimension_numbers<[1], [0], [0], [1], [0, 0, 1, 1], [], []>} : vector<8x128xf32>, vector<128x128xf32>, vector<8x128xf32> -> vector<8x128xf32>
    %c0_629 = arith.constant 0 : index
    %c0_630 = arith.constant 0 : index
    %791 = vector.load %arg7[%c0_629, %c0_630] : memref<1x128xf32, #tpu.memory_space<vmem>>, vector<1x128xf32>
    %792 = vector.broadcast %791 : vector<1x128xf32> to vector<8x128xf32>
    %793 = arith.addf %790, %792 : vector<8x128xf32>
    %c0_631 = arith.constant 0 : index
    %c0_632 = arith.constant 0 : index
    %794 = vector.load %arg8[%c0_631, %c0_632] : memref<8x128xf32, #tpu.memory_space<vmem>>, vector<8x128xf32>
    tpu.vector_store %arg8[%c0_631, %c0_632], %793 {strides = array<i32>} : memref<8x128xf32, #tpu.memory_space<vmem>>, vector<8x128xf32>,
    return
  }
  func.func @transform_0(%arg0: i32) -> (i32, i32, i32) {
    %c0_i32 = arith.constant 0 : i32
    %c0_i32_0 = arith.constant 0 : i32
    %c0_i32_1 = arith.constant 0 : i32
    return %c0_i32, %arg0, %c0_i32_0 : i32, i32, i32
  }
  func.func @transform_1(%arg0: i32) -> (i32, i32) {
    %c0_i32 = arith.constant 0 : i32
    %c0_i32_0 = arith.constant 0 : i32
    %c0_i32_1 = arith.constant 0 : i32
    return %c0_i32, %c0_i32_0 : i32, i32
  }
  func.func @transform_2(%arg0: i32) -> i32 {
    %c0_i32 = arith.constant 0 : i32
    %c0_i32_0 = arith.constant 0 : i32
    return %c0_i32 : i32
  }
  func.func @transform_3(%arg0: i32) -> (i32, i32, i32) {
    %c0_i32 = arith.constant 0 : i32
    %c0_i32_0 = arith.constant 0 : i32
    %c0_i32_1 = arith.constant 0 : i32
    %c0_i32_2 = arith.constant 0 : i32
    return %c0_i32, %c0_i32_0, %c0_i32_1 : i32, i32, i32
  }
  func.func @transform_4(%arg0: i32) -> (i32, i32) {
    %c0_i32 = arith.constant 0 : i32
    %c0_i32_0 = arith.constant 0 : i32
    %c0_i32_1 = arith.constant 0 : i32
    return %c0_i32, %c0_i32_0 : i32, i32
  }
  func.func @transform_5(%arg0: i32) -> (i32, i32) {
    %c0_i32 = arith.constant 0 : i32
    %c0_i32_0 = arith.constant 0 : i32
    %c0_i32_1 = arith.constant 0 : i32
    return %c0_i32, %c0_i32_0 : i32, i32
  }
  func.func @transform_6(%arg0: i32) -> (i32, i32) {
    %c0_i32 = arith.constant 0 : i32
    %c0_i32_0 = arith.constant 0 : i32
    %c0_i32_1 = arith.constant 0 : i32
    return %c0_i32, %c0_i32_0 : i32, i32
  }
  func.func @transform_7(%arg0: i32) -> (i32, i32) {
    %c0_i32 = arith.constant 0 : i32
    %c0_i32_0 = arith.constant 0 : i32
    return %arg0, %c0_i32 : i32, i32
  }
}

</mosaic_0001>

<llo_original>
// kernel: squeeze.0
$region0: #{squeeze.0}
  %s0 = inlined_call_operand.vmem [shape: f32[20,14,14], index: 0, kind: input, shape index: {}]
  %s1 = inlined_call_operand.vmem [shape: f32[1,20,196], index: 1, kind: output, shape index: {}]
  %s2 = smov 3
  %v3 = vld [vmem:[%s0] ss:$16 sm:%s2]
  %s4 = smov 12
  %v5 = vld [vmem:[%s0] ss:$16 sm:%s4]
  %vm6 = vcmask 1043458
  %v7 = vsel %vm6, %v5, %v3
  %s8 = smov 48
  %v9 = vld [vmem:[%s0] ss:$16 sm:%s8]
  %vm10 = vcmask 1045508
  %v11 = vsel %vm10, %v9, %v7
  %s12 = smov 192
  %v13 = vld [vmem:[%s0] ss:$16 sm:%s12]
  %vm14 = vcmask 1047558
  %v15 = vsel %vm14, %v13, %v11
  %vm16 = vcmask 113664
  %17 = vst.msk [vmem:[%s1] sm:$0xff] %vm16, %v15
  %s18 = scalar_lea.vmem %s0, 128
  %s19 = smov 3
  %v20 = vld [vmem:[%s18] ss:$16 sm:%s19]
  %s21 = scalar_lea.vmem %s0, 128
  %s22 = smov 12
  %v23 = vld [vmem:[%s21] ss:$16 sm:%s22]
  %vm24 = vcmask 1043458
  %v25 = vsel %vm24, %v23, %v20
  %s26 = scalar_lea.vmem %s0, 128
  %s27 = smov 48
  %v28 = vld [vmem:[%s26] ss:$16 sm:%s27]
  %vm29 = vcmask 1045508
  %v30 = vsel %vm29, %v28, %v25
  %s31 = scalar_lea.vmem %s0, 128
  %s32 = smov 192
  %v33 = vld [vmem:[%s31] ss:$16 sm:%s32]
  %vm34 = vcmask 1047558
  %v35 = vsel %vm34, %v33, %v30
  %vm36 = vcmask 113664
  %s37 = scalar_lea.vmem %s1, 16
  %38 = vst.msk [vmem:[%s37] sm:$0xff] %vm36, %v35
  %s39 = scalar_lea.vmem %s0, 256
  %s40 = smov 3
  %v41 = vld [vmem:[%s39] ss:$16 sm:%s40]
  %s42 = scalar_lea.vmem %s0, 256
  %s43 = smov 12
  %v44 = vld [vmem:[%s42] ss:$16 sm:%s43]
  %vm45 = vcmask 1043458
  %v46 = vsel %vm45, %v44, %v41
  %vm47 = vcmask 113664
  %s48 = scalar_lea.vmem %s1, 32
  %49 = vst.msk [vmem:[%s48] sm:$0xf] %vm47, %v46
  %s50 = scalar_lea.vmem %s0, 9
  %s51 = smov 3
  %v52 = vld [vmem:[%s50] ss:$16 sm:%s51]
  %s53 = scalar_lea.vmem %s0, 9
  %s54 = smov 12
  %v55 = vld [vmem:[%s53] ss:$16 sm:%s54]
  %vm56 = vcmask 1043458
  %v57 = vsel %vm56, %v55, %v52
  %s58 = scalar_lea.vmem %s0, 9
  %s59 = smov 48
  %v60 = vld [vmem:[%s58] ss:$16 sm:%s59]
  %vm61 = vcmask 1045508
  %v62 = vsel %vm61, %v60, %v57
  %s63 = scalar_lea.vmem %s0, 9
  %s64 = smov 192
  %v65 = vld [vmem:[%s63] ss:$16 sm:%s64]
  %vm66 = vcmask 1047558
  %v67 = vsel %vm66, %v65, %v62
  %s68 = scalar_lea.vmem %s0, 9
  %s69 = smov 3
  %v70 = vld [vmem:[%s68] ss:$16 sm:%s69]
  %s71 = scalar_lea.vmem %s0, 9
  %s72 = smov 12
  %v73 = vld [vmem:[%s71] ss:$16 sm:%s72]
  %vm74 = vcmask 1043458
  %v75 = vsel %vm74, %v73, %v70
  %s76 = scalar_lea.vmem %s0, 9
  %s77 = smov 48
  %v78 = vld [vmem:[%s76] ss:$16 sm:%s77]
  %vm79 = vcmask 1045508
  %v80 = vsel %vm79, %v78, %v75
  %s81 = scalar_lea.vmem %s0, 9
  %s82 = smov 192
  %v83 = vld [vmem:[%s81] ss:$16 sm:%s82]
  %vm84 = vcmask 1047558
  %v85 = vsel %vm84, %v83, %v80
  %vm86 = vcmask 15360
  %v87 = vsel %vm86, %v85, %v67
  %88 = vrot.lane.b32.xlu0 %v87, 126
  %v89 = vpop.permute.xlu0 %88
  %vm90 = vcmask 97280
  %s91 = scalar_lea.vmem %s1, 8
  %92 = vst.msk [vmem:[%s91] sm:$0xff] %vm90, %v89
  %vm93 = vcmask 1048560
  %94 = vst.msk [vmem:[%s1] sm:$0xff] %vm93, %v89
  %s95 = scalar_lea.vmem %s0, 265
  %s96 = smov 3
  %v97 = vld [vmem:[%s95] ss:$16 sm:%s96]
  %s98 = scalar_lea.vmem %s0, 265
  %s99 = smov 12
  %v100 = vld [vmem:[%s98] ss:$16 sm:%s99]
  %vm101 = vcmask 1043458
  %v102 = vsel %vm101, %v100, %v97
  %s103 = scalar_lea.vmem %s0, 73
  %s104 = smov 48
  %v105 = vld [vmem:[%s103] ss:$16 sm:%s104]
  %vm106 = vcmask 1045508
  %v107 = vsel %vm106, %v105, %v102
  %s108 = scalar_lea.vmem %s0, 73
  %s109 = smov 192
  %v110 = vld [vmem:[%s108] ss:$16 sm:%s109]
  %vm111 = vcmask 1047558
  %v112 = vsel %vm111, %v110, %v107
  %s113 = scalar_lea.vmem %s0, 265
  %s114 = smov 3
  %v115 = vld [vmem:[%s113] ss:$16 sm:%s114]
  %s116 = scalar_lea.vmem %s0, 265
  %s117 = smov 12
  %v118 = vld [vmem:[%s116] ss:$16 sm:%s117]
  %vm119 = vcmask 1043458
  %v120 = vsel %vm119, %v118, %v115
  %s121 = scalar_lea.vmem %s0, 73
  %s122 = smov 48
  %v123 = vld [vmem:[%s121] ss:$16 sm:%s122]
  %vm124 = vcmask 1045508
  %v125 = vsel %vm124, %v123, %v120
  %s126 = scalar_lea.vmem %s0, 73
  %s127 = smov 192
  %v128 = vld [vmem:[%s126] ss:$16 sm:%s127]
  %vm129 = vcmask 1047558
  %v130 = vsel %vm129, %v128, %v125
  %vm131 = vcmask 15360
  %v132 = vsel %vm131, %v130, %v112
  %133 = vrot.lane.b32.xlu0 %v132, 126
  %v134 = vpop.permute.xlu0 %133
  %vm135 = vcmask 97280
  %s136 = scalar_lea.vmem %s1, 40
  %137 = vst.msk [vmem:[%s136] sm:$0xf] %vm135, %v134
  %s138 = scalar_lea.vmem %s1, 20
  %139 = vst.msk [vmem:[%s138] sm:$0xf0] %vm135, %v134
  %vm140 = vcmask 1048560
  %s141 = scalar_lea.vmem %s1, 32
  %142 = vst.msk [vmem:[%s141] sm:$0xf] %vm140, %v134
  %s143 = scalar_lea.vmem %s1, 12
  %144 = vst.msk [vmem:[%s143] sm:$0xf0] %vm140, %v134
  %s145 = scalar_lea.vmem %s0, 201
  %s146 = smov 3
  %v147 = vld [vmem:[%s145] ss:$16 sm:%s146]
  %s148 = scalar_lea.vmem %s0, 201
  %s149 = smov 12
  %v150 = vld [vmem:[%s148] ss:$16 sm:%s149]
  %vm151 = vcmask 1043458
  %v152 = vsel %vm151, %v150, %v147
  %s153 = scalar_lea.vmem %s0, 201
  %s154 = smov 3
  %v155 = vld [vmem:[%s153] ss:$16 sm:%s154]
  %s156 = scalar_lea.vmem %s0, 201
  %s157 = smov 12
  %v158 = vld [vmem:[%s156] ss:$16 sm:%s157]
  %vm159 = vcmask 1043458
  %v160 = vsel %vm159, %v158, %v155
  %vm161 = vcmask 15360
  %v162 = vsel %vm161, %v160, %v152
  %163 = vrot.lane.b32.xlu0 %v162, 126
  %v164 = vpop.permute.xlu0 %163
  %vm165 = vcmask 97280
  %s166 = scalar_lea.vmem %s1, 28
  %167 = vst.msk [vmem:[%s166] sm:$0xf] %vm165, %v164
  %vm168 = vcmask 1048560
  %s169 = scalar_lea.vmem %s1, 20
  %170 = vst.msk [vmem:[%s169] sm:$0xf] %vm168, %v164
  %s171 = scalar_lea.vmem %s0, 8
  %s172 = smov 3
  %v173 = vld [vmem:[%s171] ss:$16 sm:%s172]
  %s174 = scalar_lea.vmem %s0, 8
  %s175 = smov 12
  %v176 = vld [vmem:[%s174] ss:$16 sm:%s175]
  %vm177 = vcmask 1043458
  %v178 = vsel %vm177, %v176, %v173
  %s179 = scalar_lea.vmem %s0, 8
  %s180 = smov 48
  %v181 = vld [vmem:[%s179] ss:$16 sm:%s180]
  %vm182 = vcmask 1045508
  %v183 = vsel %vm182, %v181, %v178
  %s184 = scalar_lea.vmem %s0, 8
  %s185 = smov 192
  %v186 = vld [vmem:[%s184] ss:$16 sm:%s185]
  %vm187 = vcmask 1047558
  %v188 = vsel %vm187, %v186, %v183
  %189 = vrot.lane.b32.xlu0 %v188, 112
  %v190 = vpop.permute.xlu0 %189
  %vm191 = vcmask 1032064
  %192 = vst.msk [vmem:[%s1] sm:$0xff] %vm191, %v190
  %s193 = scalar_lea.vmem %s0, 264
  %s194 = smov 3
  %v195 = vld [vmem:[%s193] ss:$16 sm:%s194]
  %s196 = scalar_lea.vmem %s0, 264
  %s197 = smov 12
  %v198 = vld [vmem:[%s196] ss:$16 sm:%s197]
  %vm199 = vcmask 1043458
  %v200 = vsel %vm199, %v198, %v195
  %s201 = scalar_lea.vmem %s0, 72
  %s202 = smov 48
  %v203 = vld [vmem:[%s201] ss:$16 sm:%s202]
  %vm204 = vcmask 1045508
  %v205 = vsel %vm204, %v203, %v200
  %s206 = scalar_lea.vmem %s0, 72
  %s207 = smov 192
  %v208 = vld [vmem:[%s206] ss:$16 sm:%s207]
  %vm209 = vcmask 1047558
  %v210 = vsel %vm209, %v208, %v205
  %211 = vrot.lane.b32.xlu0 %v210, 112
  %v212 = vpop.permute.xlu0 %211
  %vm213 = vcmask 1032064
  %s214 = scalar_lea.vmem %s1, 32
  %215 = vst.msk [vmem:[%s214] sm:$0xf] %vm213, %v212
  %s216 = scalar_lea.vmem %s1, 12
  %217 = vst.msk [vmem:[%s216] sm:$0xf0] %vm213, %v212
  %s218 = scalar_lea.vmem %s0, 200
  %s219 = smov 3
  %v220 = vld [vmem:[%s218] ss:$16 sm:%s219]
  %s221 = scalar_lea.vmem %s0, 200
  %s222 = smov 12
  %v223 = vld [vmem:[%s221] ss:$16 sm:%s222]
  %vm224 = vcmask 1043458
  %v225 = vsel %vm224, %v223, %v220
  %226 = vrot.lane.b32.xlu0 %v225, 112
  %v227 = vpop.permute.xlu0 %226
  %vm228 = vcmask 1032064
  %s229 = scalar_lea.vmem %s1, 20
  %230 = vst.msk [vmem:[%s229] sm:$0xf] %vm228, %v227
  %s231 = scalar_lea.vmem %s0, 7
  %s232 = smov 3
  %v233 = vld [vmem:[%s231] ss:$16 sm:%s232]
  %s234 = scalar_lea.vmem %s0, 7
  %s235 = smov 12
  %v236 = vld [vmem:[%s234] ss:$16 sm:%s235]
  %vm237 = vcmask 1043458
  %v238 = vsel %vm237, %v236, %v233
  %s239 = scalar_lea.vmem %s0, 7
  %s240 = smov 48
  %v241 = vld [vmem:[%s239] ss:$16 sm:%s240]
  %vm242 = vcmask 1045508
  %v243 = vsel %vm242, %v241, %v238
  %s244 = scalar_lea.vmem %s0, 7
  %s245 = smov 192
  %v246 = vld [vmem:[%s244] ss:$16 sm:%s245]
  %vm247 = vcmask 1047558
  %v248 = vsel %vm247, %v246, %v243
  %249 = vrot.lane.b32.xlu0 %v248, 98
  %v250 = vpop.permute.xlu0 %249
  %vm251 = vcmask 917264
  %252 = vst.msk [vmem:[%s1] sm:$0xff] %vm251, %v250
  %s253 = scalar_lea.vmem %s0, 263
  %s254 = smov 3
  %v255 = vld [vmem:[%s253] ss:$16 sm:%s254]
  %s256 = scalar_lea.vmem %s0, 263
  %s257 = smov 12
  %v258 = vld [vmem:[%s256] ss:$16 sm:%s257]
  %vm259 = vcmask 1043458
  %v260 = vsel %vm259, %v258, %v255
  %s261 = scalar_lea.vmem %s0, 71
  %s262 = smov 48
  %v263 = vld [vmem:[%s261] ss:$16 sm:%s262]
  %vm264 = vcmask 1045508
  %v265 = vsel %vm264, %v263, %v260
  %s266 = scalar_lea.vmem %s0, 71
  %s267 = smov 192
  %v268 = vld [vmem:[%s266] ss:$16 sm:%s267]
  %vm269 = vcmask 1047558
  %v270 = vsel %vm269, %v268, %v265
  %271 = vrot.lane.b32.xlu0 %v270, 98
  %v272 = vpop.permute.xlu0 %271
  %vm273 = vcmask 917264
  %s274 = scalar_lea.vmem %s1, 32
  %275 = vst.msk [vmem:[%s274] sm:$0xf] %vm273, %v272
  %s276 = scalar_lea.vmem %s1, 12
  %277 = vst.msk [vmem:[%s276] sm:$0xf0] %vm273, %v272
  %s278 = scalar_lea.vmem %s0, 199
  %s279 = smov 3
  %v280 = vld [vmem:[%s278] ss:$16 sm:%s279]
  %s281 = scalar_lea.vmem %s0, 199
  %s282 = smov 12
  %v283 = vld [vmem:[%s281] ss:$16 sm:%s282]
  %vm284 = vcmask 1043458
  %v285 = vsel %vm284, %v283, %v280
  %286 = vrot.lane.b32.xlu0 %v285, 98
  %v287 = vpop.permute.xlu0 %286
  %vm288 = vcmask 917264
  %s289 = scalar_lea.vmem %s1, 20
  %290 = vst.msk [vmem:[%s289] sm:$0xf] %vm288, %v287
  %s291 = scalar_lea.vmem %s0, 6
  %s292 = smov 3
  %v293 = vld [vmem:[%s291] ss:$16 sm:%s292]
  %s294 = scalar_lea.vmem %s0, 6
  %s295 = smov 12
  %v296 = vld [vmem:[%s294] ss:$16 sm:%s295]
  %vm297 = vcmask 1043458
  %v298 = vsel %vm297, %v296, %v293
  %s299 = scalar_lea.vmem %s0, 6
  %s300 = smov 48
  %v301 = vld [vmem:[%s299] ss:$16 sm:%s300]
  %vm302 = vcmask 1045508
  %v303 = vsel %vm302, %v301, %v298
  %s304 = scalar_lea.vmem %s0, 6
  %s305 = smov 192
  %v306 = vld [vmem:[%s304] ss:$16 sm:%s305]
  %vm307 = vcmask 1047558
  %v308 = vsel %vm307, %v306, %v303
  %309 = vrot.lane.b32.xlu0 %v308, 84
  %v310 = vpop.permute.xlu0 %309
  %vm311 = vcmask 802464
  %312 = vst.msk [vmem:[%s1] sm:$0xff] %vm311, %v310
  %s313 = scalar_lea.vmem %s0, 262
  %s314 = smov 3
  %v315 = vld [vmem:[%s313] ss:$16 sm:%s314]
  %s316 = scalar_lea.vmem %s0, 262
  %s317 = smov 12
  %v318 = vld [vmem:[%s316] ss:$16 sm:%s317]
  %vm319 = vcmask 1043458
  %v320 = vsel %vm319, %v318, %v315
  %s321 = scalar_lea.vmem %s0, 70
  %s322 = smov 48
  %v323 = vld [vmem:[%s321] ss:$16 sm:%s322]
  %vm324 = vcmask 1045508
  %v325 = vsel %vm324, %v323, %v320
  %s326 = scalar_lea.vmem %s0, 70
  %s327 = smov 192
  %v328 = vld [vmem:[%s326] ss:$16 sm:%s327]
  %vm329 = vcmask 1047558
  %v330 = vsel %vm329, %v328, %v325
  %331 = vrot.lane.b32.xlu0 %v330, 84
  %v332 = vpop.permute.xlu0 %331
  %vm333 = vcmask 802464
  %s334 = scalar_lea.vmem %s1, 32
  %335 = vst.msk [vmem:[%s334] sm:$0xf] %vm333, %v332
  %s336 = scalar_lea.vmem %s1, 12
  %337 = vst.msk [vmem:[%s336] sm:$0xf0] %vm333, %v332
  %s338 = scalar_lea.vmem %s0, 198
  %s339 = smov 3
  %v340 = vld [vmem:[%s338] ss:$16 sm:%s339]
  %s341 = scalar_lea.vmem %s0, 198
  %s342 = smov 12
  %v343 = vld [vmem:[%s341] ss:$16 sm:%s342]
  %vm344 = vcmask 1043458
  %v345 = vsel %vm344, %v343, %v340
  %346 = vrot.lane.b32.xlu0 %v345, 84
  %v347 = vpop.permute.xlu0 %346
  %vm348 = vcmask 802464
  %s349 = scalar_lea.vmem %s1, 20
  %350 = vst.msk [vmem:[%s349] sm:$0xf] %vm348, %v347
  %s351 = scalar_lea.vmem %s0, 5
  %s352 = smov 3
  %v353 = vld [vmem:[%s351] ss:$16 sm:%s352]
  %s354 = scalar_lea.vmem %s0, 5
  %s355 = smov 12
  %v356 = vld [vmem:[%s354] ss:$16 sm:%s355]
  %vm357 = vcmask 1043458
  %v358 = vsel %vm357, %v356, %v353
  %s359 = scalar_lea.vmem %s0, 5
  %s360 = smov 48
  %v361 = vld [vmem:[%s359] ss:$16 sm:%s360]
  %vm362 = vcmask 1045508
  %v363 = vsel %vm362, %v361, %v358
  %s364 = scalar_lea.vmem %s0, 5
  %s365 = smov 192
  %v366 = vld [vmem:[%s364] ss:$16 sm:%s365]
  %vm367 = vcmask 1047558
  %v368 = vsel %vm367, %v366, %v363
  %369 = vrot.lane.b32.xlu0 %v368, 70
  %v370 = vpop.permute.xlu0 %369
  %vm371 = vcmask 687664
  %372 = vst.msk [vmem:[%s1] sm:$0xff] %vm371, %v370
  %s373 = scalar_lea.vmem %s0, 261
  %s374 = smov 3
  %v375 = vld [vmem:[%s373] ss:$16 sm:%s374]
  %s376 = scalar_lea.vmem %s0, 261
  %s377 = smov 12
  %v378 = vld [vmem:[%s376] ss:$16 sm:%s377]
  %vm379 = vcmask 1043458
  %v380 = vsel %vm379, %v378, %v375
  %s381 = scalar_lea.vmem %s0, 69
  %s382 = smov 48
  %v383 = vld [vmem:[%s381] ss:$16 sm:%s382]
  %vm384 = vcmask 1045508
  %v385 = vsel %vm384, %v383, %v380
  %s386 = scalar_lea.vmem %s0, 69
  %s387 = smov 192
  %v388 = vld [vmem:[%s386] ss:$16 sm:%s387]
  %vm389 = vcmask 1047558
  %v390 = vsel %vm389, %v388, %v385
  %391 = vrot.lane.b32.xlu0 %v390, 70
  %v392 = vpop.permute.xlu0 %391
  %vm393 = vcmask 687664
  %s394 = scalar_lea.vmem %s1, 32
  %395 = vst.msk [vmem:[%s394] sm:$0xf] %vm393, %v392
  %s396 = scalar_lea.vmem %s1, 12
  %397 = vst.msk [vmem:[%s396] sm:$0xf0] %vm393, %v392
  %s398 = scalar_lea.vmem %s0, 197
  %s399 = smov 3
  %v400 = vld [vmem:[%s398] ss:$16 sm:%s399]
  %s401 = scalar_lea.vmem %s0, 197
  %s402 = smov 12
  %v403 = vld [vmem:[%s401] ss:$16 sm:%s402]
  %vm404 = vcmask 1043458
  %v405 = vsel %vm404, %v403, %v400
  %406 = vrot.lane.b32.xlu0 %v405, 70
  %v407 = vpop.permute.xlu0 %406
  %vm408 = vcmask 687664
  %s409 = scalar_lea.vmem %s1, 20
  %410 = vst.msk [vmem:[%s409] sm:$0xf] %vm408, %v407
  %s411 = scalar_lea.vmem %s0, 4
  %s412 = smov 3
  %v413 = vld [vmem:[%s411] ss:$16 sm:%s412]
  %s414 = scalar_lea.vmem %s0, 4
  %s415 = smov 12
  %v416 = vld [vmem:[%s414] ss:$16 sm:%s415]
  %vm417 = vcmask 1043458
  %v418 = vsel %vm417, %v416, %v413
  %s419 = scalar_lea.vmem %s0, 4
  %s420 = smov 48
  %v421 = vld [vmem:[%s419] ss:$16 sm:%s420]
  %vm422 = vcmask 1045508
  %v423 = vsel %vm422, %v421, %v418
  %s424 = scalar_lea.vmem %s0, 4
  %s425 = smov 192
  %v426 = vld [vmem:[%s424] ss:$16 sm:%s425]
  %vm427 = vcmask 1047558
  %v428 = vsel %vm427, %v426, %v423
  %429 = vrot.lane.b32.xlu0 %v428, 56
  %v430 = vpop.permute.xlu0 %429
  %vm431 = vcmask 572864
  %432 = vst.msk [vmem:[%s1] sm:$0xff] %vm431, %v430
  %s433 = scalar_lea.vmem %s0, 260
  %s434 = smov 3
  %v435 = vld [vmem:[%s433] ss:$16 sm:%s434]
  %s436 = scalar_lea.vmem %s0, 260
  %s437 = smov 12
  %v438 = vld [vmem:[%s436] ss:$16 sm:%s437]
  %vm439 = vcmask 1043458
  %v440 = vsel %vm439, %v438, %v435
  %s441 = scalar_lea.vmem %s0, 68
  %s442 = smov 48
  %v443 = vld [vmem:[%s441] ss:$16 sm:%s442]
  %vm444 = vcmask 1045508
  %v445 = vsel %vm444, %v443, %v440
  %s446 = scalar_lea.vmem %s0, 68
  %s447 = smov 192
  %v448 = vld [vmem:[%s446] ss:$16 sm:%s447]
  %vm449 = vcmask 1047558
  %v450 = vsel %vm449, %v448, %v445
  %451 = vrot.lane.b32.xlu0 %v450, 56
  %v452 = vpop.permute.xlu0 %451
  %vm453 = vcmask 572864
  %s454 = scalar_lea.vmem %s1, 32
  %455 = vst.msk [vmem:[%s454] sm:$0xf] %vm453, %v452
  %s456 = scalar_lea.vmem %s1, 12
  %457 = vst.msk [vmem:[%s456] sm:$0xf0] %vm453, %v452
  %s458 = scalar_lea.vmem %s0, 196
  %s459 = smov 3
  %v460 = vld [vmem:[%s458] ss:$16 sm:%s459]
  %s461 = scalar_lea.vmem %s0, 196
  %s462 = smov 12
  %v463 = vld [vmem:[%s461] ss:$16 sm:%s462]
  %vm464 = vcmask 1043458
  %v465 = vsel %vm464, %v463, %v460
  %466 = vrot.lane.b32.xlu0 %v465, 56
  %v467 = vpop.permute.xlu0 %466
  %vm468 = vcmask 572864
  %s469 = scalar_lea.vmem %s1, 20
  %470 = vst.msk [vmem:[%s469] sm:$0xf] %vm468, %v467
  %s471 = scalar_lea.vmem %s0, 13
  %s472 = smov 3
  %v473 = vld [vmem:[%s471] ss:$16 sm:%s472]
  %s474 = scalar_lea.vmem %s0, 13
  %s475 = smov 12
  %v476 = vld [vmem:[%s474] ss:$16 sm:%s475]
  %vm477 = vcmask 1043458
  %v478 = vsel %vm477, %v476, %v473
  %s479 = scalar_lea.vmem %s0, 13
  %s480 = smov 48
  %v481 = vld [vmem:[%s479] ss:$16 sm:%s480]
  %vm482 = vcmask 1045508
  %v483 = vsel %vm482, %v481, %v478
  %s484 = scalar_lea.vmem %s0, 13
  %s485 = smov 192
  %v486 = vld [vmem:[%s484] ss:$16 sm:%s485]
  %vm487 = vcmask 1047558
  %v488 = vsel %vm487, %v486, %v483
  %489 = vrot.lane.b32.xlu0 %v488, 54
  %v490 = vpop.permute.xlu0 %489
  %vm491 = vcmask 556464
  %s492 = scalar_lea.vmem %s1, 8
  %493 = vst.msk [vmem:[%s492] sm:$0xff] %vm491, %v490
  %s494 = scalar_lea.vmem %s0, 269
  %s495 = smov 3
  %v496 = vld [vmem:[%s494] ss:$16 sm:%s495]
  %s497 = scalar_lea.vmem %s0, 269
  %s498 = smov 12
  %v499 = vld [vmem:[%s497] ss:$16 sm:%s498]
  %vm500 = vcmask 1043458
  %v501 = vsel %vm500, %v499, %v496
  %s502 = scalar_lea.vmem %s0, 77
  %s503 = smov 48
  %v504 = vld [vmem:[%s502] ss:$16 sm:%s503]
  %vm505 = vcmask 1045508
  %v506 = vsel %vm505, %v504, %v501
  %s507 = scalar_lea.vmem %s0, 77
  %s508 = smov 192
  %v509 = vld [vmem:[%s507] ss:$16 sm:%s508]
  %vm510 = vcmask 1047558
  %v511 = vsel %vm510, %v509, %v506
  %512 = vrot.lane.b32.xlu0 %v511, 54
  %v513 = vpop.permute.xlu0 %512
  %vm514 = vcmask 556464
  %s515 = scalar_lea.vmem %s1, 40
  %516 = vst.msk [vmem:[%s515] sm:$0xf] %vm514, %v513
  %s517 = scalar_lea.vmem %s1, 20
  %518 = vst.msk [vmem:[%s517] sm:$0xf0] %vm514, %v513
  %s519 = scalar_lea.vmem %s0, 205
  %s520 = smov 3
  %v521 = vld [vmem:[%s519] ss:$16 sm:%s520]
  %s522 = scalar_lea.vmem %s0, 205
  %s523 = smov 12
  %v524 = vld [vmem:[%s522] ss:$16 sm:%s523]
  %vm525 = vcmask 1043458
  %v526 = vsel %vm525, %v524, %v521
  %527 = vrot.lane.b32.xlu0 %v526, 54
  %v528 = vpop.permute.xlu0 %527
  %vm529 = vcmask 556464
  %s530 = scalar_lea.vmem %s1, 28
  %531 = vst.msk [vmem:[%s530] sm:$0xf] %vm529, %v528
  %s532 = scalar_lea.vmem %s0, 3
  %s533 = smov 3
  %v534 = vld [vmem:[%s532] ss:$16 sm:%s533]
  %s535 = scalar_lea.vmem %s0, 3
  %s536 = smov 12
  %v537 = vld [vmem:[%s535] ss:$16 sm:%s536]
  %vm538 = vcmask 1043458
  %v539 = vsel %vm538, %v537, %v534
  %s540 = scalar_lea.vmem %s0, 3
  %s541 = smov 48
  %v542 = vld [vmem:[%s540] ss:$16 sm:%s541]
  %vm543 = vcmask 1045508
  %v544 = vsel %vm543, %v542, %v539
  %s545 = scalar_lea.vmem %s0, 3
  %s546 = smov 192
  %v547 = vld [vmem:[%s545] ss:$16 sm:%s546]
  %vm548 = vcmask 1047558
  %v549 = vsel %vm548, %v547, %v544
  %550 = vrot.lane.b32.xlu0 %v549, 42
  %v551 = vpop.permute.xlu0 %550
  %vm552 = vcmask 458064
  %553 = vst.msk [vmem:[%s1] sm:$0xff] %vm552, %v551
  %s554 = scalar_lea.vmem %s0, 259
  %s555 = smov 3
  %v556 = vld [vmem:[%s554] ss:$16 sm:%s555]
  %s557 = scalar_lea.vmem %s0, 259
  %s558 = smov 12
  %v559 = vld [vmem:[%s557] ss:$16 sm:%s558]
  %vm560 = vcmask 1043458
  %v561 = vsel %vm560, %v559, %v556
  %s562 = scalar_lea.vmem %s0, 67
  %s563 = smov 48
  %v564 = vld [vmem:[%s562] ss:$16 sm:%s563]
  %vm565 = vcmask 1045508
  %v566 = vsel %vm565, %v564, %v561
  %s567 = scalar_lea.vmem %s0, 67
  %s568 = smov 192
  %v569 = vld [vmem:[%s567] ss:$16 sm:%s568]
  %vm570 = vcmask 1047558
  %v571 = vsel %vm570, %v569, %v566
  %572 = vrot.lane.b32.xlu0 %v571, 42
  %v573 = vpop.permute.xlu0 %572
  %vm574 = vcmask 458064
  %s575 = scalar_lea.vmem %s1, 32
  %576 = vst.msk [vmem:[%s575] sm:$0xf] %vm574, %v573
  %s577 = scalar_lea.vmem %s1, 12
  %578 = vst.msk [vmem:[%s577] sm:$0xf0] %vm574, %v573
  %s579 = scalar_lea.vmem %s0, 195
  %s580 = smov 3
  %v581 = vld [vmem:[%s579] ss:$16 sm:%s580]
  %s582 = scalar_lea.vmem %s0, 195
  %s583 = smov 12
  %v584 = vld [vmem:[%s582] ss:$16 sm:%s583]
  %vm585 = vcmask 1043458
  %v586 = vsel %vm585, %v584, %v581
  %587 = vrot.lane.b32.xlu0 %v586, 42
  %v588 = vpop.permute.xlu0 %587
  %vm589 = vcmask 458064
  %s590 = scalar_lea.vmem %s1, 20
  %591 = vst.msk [vmem:[%s590] sm:$0xf] %vm589, %v588
  %s592 = scalar_lea.vmem %s0, 12
  %s593 = smov 3
  %v594 = vld [vmem:[%s592] ss:$16 sm:%s593]
  %s595 = scalar_lea.vmem %s0, 12
  %s596 = smov 12
  %v597 = vld [vmem:[%s595] ss:$16 sm:%s596]
  %vm598 = vcmask 1043458
  %v599 = vsel %vm598, %v597, %v594
  %s600 = scalar_lea.vmem %s0, 12
  %s601 = smov 48
  %v602 = vld [vmem:[%s600] ss:$16 sm:%s601]
  %vm603 = vcmask 1045508
  %v604 = vsel %vm603, %v602, %v599
  %s605 = scalar_lea.vmem %s0, 12
  %s606 = smov 192
  %v607 = vld [vmem:[%s605] ss:$16 sm:%s606]
  %vm608 = vcmask 1047558
  %v609 = vsel %vm608, %v607, %v604
  %610 = vrot.lane.b32.xlu0 %v609, 40
  %v611 = vpop.permute.xlu0 %610
  %vm612 = vcmask 441664
  %s613 = scalar_lea.vmem %s1, 8
  %614 = vst.msk [vmem:[%s613] sm:$0xff] %vm612, %v611
  %s615 = scalar_lea.vmem %s0, 268
  %s616 = smov 3
  %v617 = vld [vmem:[%s615] ss:$16 sm:%s616]
  %s618 = scalar_lea.vmem %s0, 268
  %s619 = smov 12
  %v620 = vld [vmem:[%s618] ss:$16 sm:%s619]
  %vm621 = vcmask 1043458
  %v622 = vsel %vm621, %v620, %v617
  %s623 = scalar_lea.vmem %s0, 76
  %s624 = smov 48
  %v625 = vld [vmem:[%s623] ss:$16 sm:%s624]
  %vm626 = vcmask 1045508
  %v627 = vsel %vm626, %v625, %v622
  %s628 = scalar_lea.vmem %s0, 76
  %s629 = smov 192
  %v630 = vld [vmem:[%s628] ss:$16 sm:%s629]
  %vm631 = vcmask 1047558
  %v632 = vsel %vm631, %v630, %v627
  %633 = vrot.lane.b32.xlu0 %v632, 40
  %v634 = vpop.permute.xlu0 %633
  %vm635 = vcmask 441664
  %s636 = scalar_lea.vmem %s1, 40
  %637 = vst.msk [vmem:[%s636] sm:$0xf] %vm635, %v634
  %s638 = scalar_lea.vmem %s1, 20
  %639 = vst.msk [vmem:[%s638] sm:$0xf0] %vm635, %v634
  %s640 = scalar_lea.vmem %s0, 204
  %s641 = smov 3
  %v642 = vld [vmem:[%s640] ss:$16 sm:%s641]
  %s643 = scalar_lea.vmem %s0, 204
  %s644 = smov 12
  %v645 = vld [vmem:[%s643] ss:$16 sm:%s644]
  %vm646 = vcmask 1043458
  %v647 = vsel %vm646, %v645, %v642
  %648 = vrot.lane.b32.xlu0 %v647, 40
  %v649 = vpop.permute.xlu0 %648
  %vm650 = vcmask 441664
  %s651 = scalar_lea.vmem %s1, 28
  %652 = vst.msk [vmem:[%s651] sm:$0xf] %vm650, %v649
  %s653 = scalar_lea.vmem %s0, 2
  %s654 = smov 3
  %v655 = vld [vmem:[%s653] ss:$16 sm:%s654]
  %s656 = scalar_lea.vmem %s0, 2
  %s657 = smov 12
  %v658 = vld [vmem:[%s656] ss:$16 sm:%s657]
  %vm659 = vcmask 1043458
  %v660 = vsel %vm659, %v658, %v655
  %s661 = scalar_lea.vmem %s0, 2
  %s662 = smov 48
  %v663 = vld [vmem:[%s661] ss:$16 sm:%s662]
  %vm664 = vcmask 1045508
  %v665 = vsel %vm664, %v663, %v660
  %s666 = scalar_lea.vmem %s0, 2
  %s667 = smov 192
  %v668 = vld [vmem:[%s666] ss:$16 sm:%s667]
  %vm669 = vcmask 1047558
  %v670 = vsel %vm669, %v668, %v665
  %671 = vrot.lane.b32.xlu0 %v670, 28
  %v672 = vpop.permute.xlu0 %671
  %vm673 = vcmask 343264
  %674 = vst.msk [vmem:[%s1] sm:$0xff] %vm673, %v672
  %s675 = scalar_lea.vmem %s0, 258
  %s676 = smov 3
  %v677 = vld [vmem:[%s675] ss:$16 sm:%s676]
  %s678 = scalar_lea.vmem %s0, 258
  %s679 = smov 12
  %v680 = vld [vmem:[%s678] ss:$16 sm:%s679]
  %vm681 = vcmask 1043458
  %v682 = vsel %vm681, %v680, %v677
  %s683 = scalar_lea.vmem %s0, 66
  %s684 = smov 48
  %v685 = vld [vmem:[%s683] ss:$16 sm:%s684]
  %vm686 = vcmask 1045508
  %v687 = vsel %vm686, %v685, %v682
  %s688 = scalar_lea.vmem %s0, 66
  %s689 = smov 192
  %v690 = vld [vmem:[%s688] ss:$16 sm:%s689]
  %vm691 = vcmask 1047558
  %v692 = vsel %vm691, %v690, %v687
  %693 = vrot.lane.b32.xlu0 %v692, 28
  %v694 = vpop.permute.xlu0 %693
  %vm695 = vcmask 343264
  %s696 = scalar_lea.vmem %s1, 32
  %697 = vst.msk [vmem:[%s696] sm:$0xf] %vm695, %v694
  %s698 = scalar_lea.vmem %s1, 12
  %699 = vst.msk [vmem:[%s698] sm:$0xf0] %vm695, %v694
  %s700 = scalar_lea.vmem %s0, 194
  %s701 = smov 3
  %v702 = vld [vmem:[%s700] ss:$16 sm:%s701]
  %s703 = scalar_lea.vmem %s0, 194
  %s704 = smov 12
  %v705 = vld [vmem:[%s703] ss:$16 sm:%s704]
  %vm706 = vcmask 1043458
  %v707 = vsel %vm706, %v705, %v702
  %708 = vrot.lane.b32.xlu0 %v707, 28
  %v709 = vpop.permute.xlu0 %708
  %vm710 = vcmask 343264
  %s711 = scalar_lea.vmem %s1, 20
  %712 = vst.msk [vmem:[%s711] sm:$0xf] %vm710, %v709
  %s713 = scalar_lea.vmem %s0, 11
  %s714 = smov 3
  %v715 = vld [vmem:[%s713] ss:$16 sm:%s714]
  %s716 = scalar_lea.vmem %s0, 11
  %s717 = smov 12
  %v718 = vld [vmem:[%s716] ss:$16 sm:%s717]
  %vm719 = vcmask 1043458
  %v720 = vsel %vm719, %v718, %v715
  %s721 = scalar_lea.vmem %s0, 11
  %s722 = smov 48
  %v723 = vld [vmem:[%s721] ss:$16 sm:%s722]
  %vm724 = vcmask 1045508
  %v725 = vsel %vm724, %v723, %v720
  %s726 = scalar_lea.vmem %s0, 11
  %s727 = smov 192
  %v728 = vld [vmem:[%s726] ss:$16 sm:%s727]
  %vm729 = vcmask 1047558
  %v730 = vsel %vm729, %v728, %v725
  %731 = vrot.lane.b32.xlu0 %v730, 26
  %v732 = vpop.permute.xlu0 %731
  %vm733 = vcmask 326864
  %s734 = scalar_lea.vmem %s1, 8
  %735 = vst.msk [vmem:[%s734] sm:$0xff] %vm733, %v732
  %s736 = scalar_lea.vmem %s0, 267
  %s737 = smov 3
  %v738 = vld [vmem:[%s736] ss:$16 sm:%s737]
  %s739 = scalar_lea.vmem %s0, 267
  %s740 = smov 12
  %v741 = vld [vmem:[%s739] ss:$16 sm:%s740]
  %vm742 = vcmask 1043458
  %v743 = vsel %vm742, %v741, %v738
  %s744 = scalar_lea.vmem %s0, 75
  %s745 = smov 48
  %v746 = vld [vmem:[%s744] ss:$16 sm:%s745]
  %vm747 = vcmask 1045508
  %v748 = vsel %vm747, %v746, %v743
  %s749 = scalar_lea.vmem %s0, 75
  %s750 = smov 192
  %v751 = vld [vmem:[%s749] ss:$16 sm:%s750]
  %vm752 = vcmask 1047558
  %v753 = vsel %vm752, %v751, %v748
  %754 = vrot.lane.b32.xlu0 %v753, 26
  %v755 = vpop.permute.xlu0 %754
  %vm756 = vcmask 326864
  %s757 = scalar_lea.vmem %s1, 40
  %758 = vst.msk [vmem:[%s757] sm:$0xf] %vm756, %v755
  %s759 = scalar_lea.vmem %s1, 20
  %760 = vst.msk [vmem:[%s759] sm:$0xf0] %vm756, %v755
  %s761 = scalar_lea.vmem %s0, 203
  %s762 = smov 3
  %v763 = vld [vmem:[%s761] ss:$16 sm:%s762]
  %s764 = scalar_lea.vmem %s0, 203
  %s765 = smov 12
  %v766 = vld [vmem:[%s764] ss:$16 sm:%s765]
  %vm767 = vcmask 1043458
  %v768 = vsel %vm767, %v766, %v763
  %769 = vrot.lane.b32.xlu0 %v768, 26
  %v770 = vpop.permute.xlu0 %769
  %vm771 = vcmask 326864
  %s772 = scalar_lea.vmem %s1, 28
  %773 = vst.msk [vmem:[%s772] sm:$0xf] %vm771, %v770
  %s774 = scalar_lea.vmem %s0, 1
  %s775 = smov 3
  %v776 = vld [vmem:[%s774] ss:$16 sm:%s775]
  %s777 = scalar_lea.vmem %s0, 1
  %s778 = smov 12
  %v779 = vld [vmem:[%s777] ss:$16 sm:%s778]
  %vm780 = vcmask 1043458
  %v781 = vsel %vm780, %v779, %v776
  %s782 = scalar_lea.vmem %s0, 1
  %s783 = smov 48
  %v784 = vld [vmem:[%s782] ss:$16 sm:%s783]
  %vm785 = vcmask 1045508
  %v786 = vsel %vm785, %v784, %v781
  %s787 = scalar_lea.vmem %s0, 1
  %s788 = smov 192
  %v789 = vld [vmem:[%s787] ss:$16 sm:%s788]
  %vm790 = vcmask 1047558
  %v791 = vsel %vm790, %v789, %v786
  %792 = vrot.lane.b32.xlu0 %v791, 14
  %v793 = vpop.permute.xlu0 %792
  %vm794 = vcmask 228464
  %795 = vst.msk [vmem:[%s1] sm:$0xff] %vm794, %v793
  %s796 = scalar_lea.vmem %s0, 257
  %s797 = smov 3
  %v798 = vld [vmem:[%s796] ss:$16 sm:%s797]
  %s799 = scalar_lea.vmem %s0, 257
  %s800 = smov 12
  %v801 = vld [vmem:[%s799] ss:$16 sm:%s800]
  %vm802 = vcmask 1043458
  %v803 = vsel %vm802, %v801, %v798
  %s804 = scalar_lea.vmem %s0, 65
  %s805 = smov 48
  %v806 = vld [vmem:[%s804] ss:$16 sm:%s805]
  %vm807 = vcmask 1045508
  %v808 = vsel %vm807, %v806, %v803
  %s809 = scalar_lea.vmem %s0, 65
  %s810 = smov 192
  %v811 = vld [vmem:[%s809] ss:$16 sm:%s810]
  %vm812 = vcmask 1047558
  %v813 = vsel %vm812, %v811, %v808
  %814 = vrot.lane.b32.xlu0 %v813, 14
  %v815 = vpop.permute.xlu0 %814
  %vm816 = vcmask 228464
  %s817 = scalar_lea.vmem %s1, 32
  %818 = vst.msk [vmem:[%s817] sm:$0xf] %vm816, %v815
  %s819 = scalar_lea.vmem %s1, 12
  %820 = vst.msk [vmem:[%s819] sm:$0xf0] %vm816, %v815
  %s821 = scalar_lea.vmem %s0, 193
  %s822 = smov 3
  %v823 = vld [vmem:[%s821] ss:$16 sm:%s822]
  %s824 = scalar_lea.vmem %s0, 193
  %s825 = smov 12
  %v826 = vld [vmem:[%s824] ss:$16 sm:%s825]
  %vm827 = vcmask 1043458
  %v828 = vsel %vm827, %v826, %v823
  %829 = vrot.lane.b32.xlu0 %v828, 14
  %v830 = vpop.permute.xlu0 %829
  %vm831 = vcmask 228464
  %s832 = scalar_lea.vmem %s1, 20
  %833 = vst.msk [vmem:[%s832] sm:$0xf] %vm831, %v830
  %s834 = scalar_lea.vmem %s0, 10
  %s835 = smov 3
  %v836 = vld [vmem:[%s834] ss:$16 sm:%s835]
  %s837 = scalar_lea.vmem %s0, 10
  %s838 = smov 12
  %v839 = vld [vmem:[%s837] ss:$16 sm:%s838]
  %vm840 = vcmask 1043458
  %v841 = vsel %vm840, %v839, %v836
  %s842 = scalar_lea.vmem %s0, 10
  %s843 = smov 48
  %v844 = vld [vmem:[%s842] ss:$16 sm:%s843]
  %vm845 = vcmask 1045508
  %v846 = vsel %vm845, %v844, %v841
  %s847 = scalar_lea.vmem %s0, 10
  %s848 = smov 192
  %v849 = vld [vmem:[%s847] ss:$16 sm:%s848]
  %vm850 = vcmask 1047558
  %v851 = vsel %vm850, %v849, %v846
  %852 = vrot.lane.b32.xlu0 %v851, 12
  %v853 = vpop.permute.xlu0 %852
  %vm854 = vcmask 212064
  %s855 = scalar_lea.vmem %s1, 8
  %856 = vst.msk [vmem:[%s855] sm:$0xff] %vm854, %v853
  %s857 = scalar_lea.vmem %s0, 266
  %s858 = smov 3
  %v859 = vld [vmem:[%s857] ss:$16 sm:%s858]
  %s860 = scalar_lea.vmem %s0, 266
  %s861 = smov 12
  %v862 = vld [vmem:[%s860] ss:$16 sm:%s861]
  %vm863 = vcmask 1043458
  %v864 = vsel %vm863, %v862, %v859
  %s865 = scalar_lea.vmem %s0, 74
  %s866 = smov 48
  %v867 = vld [vmem:[%s865] ss:$16 sm:%s866]
  %vm868 = vcmask 1045508
  %v869 = vsel %vm868, %v867, %v864
  %s870 = scalar_lea.vmem %s0, 74
  %s871 = smov 192
  %v872 = vld [vmem:[%s870] ss:$16 sm:%s871]
  %vm873 = vcmask 1047558
  %v874 = vsel %vm873, %v872, %v869
  %875 = vrot.lane.b32.xlu0 %v874, 12
  %v876 = vpop.permute.xlu0 %875
  %vm877 = vcmask 212064
  %s878 = scalar_lea.vmem %s1, 40
  %879 = vst.msk [vmem:[%s878] sm:$0xf] %vm877, %v876
  %s880 = scalar_lea.vmem %s1, 20
  %881 = vst.msk [vmem:[%s880] sm:$0xf0] %vm877, %v876
  %s882 = scalar_lea.vmem %s0, 202
  %s883 = smov 3
  %v884 = vld [vmem:[%s882] ss:$16 sm:%s883]
  %s885 = scalar_lea.vmem %s0, 202
  %s886 = smov 12
  %v887 = vld [vmem:[%s885] ss:$16 sm:%s886]
  %vm888 = vcmask 1043458
  %v889 = vsel %vm888, %v887, %v884
  %890 = vrot.lane.b32.xlu0 %v889, 12
  %v891 = vpop.permute.xlu0 %890
  %vm892 = vcmask 212064
  %s893 = scalar_lea.vmem %s1, 28
  %894 = vst.msk [vmem:[%s893] sm:$0xf] %vm892, %v891

// kernel: _lambda_.1
$region0: #{_lambda_.1}
  #allocation0 [shape = 'u32[]', space=smem, size = 0x4, offset = 0x4, fixed_abs, tag = 'smem constant byte address 0x4 - core index']
  #allocation1 [shape = 'u32[144,128]{1,0:T(1,128)}', space=vmem, size = 0x12000, scoped, tag = 'internal scratch']
  %s0 = inlined_call_operand.vmem [shape: f32[25,24,196], index: 0, kind: input, shape index: {}]
  %s1 = inlined_call_operand.vmem [shape: f32[5,25], index: 1, kind: input, shape index: {}]
  %s2 = inlined_call_operand.vmem [shape: f32[5], index: 2, kind: input, shape index: {}]
  %s3 = inlined_call_operand.vmem [shape: f32[5,196,128], index: 3, kind: input, shape index: {}]
  %s4 = inlined_call_operand.vmem [shape: f32[1,128], index: 4, kind: input, shape index: {}]
  %s5 = inlined_call_operand.vmem [shape: f32[128,128], index: 5, kind: input, shape index: {}]
  %s6 = inlined_call_operand.vmem [shape: f32[1,128], index: 6, kind: input, shape index: {}]
  %s7 = inlined_call_operand.vmem [shape: f32[24,128], index: 7, kind: output, shape index: {}]
  %s8 = sld [smem:[#allocation0]]
  $region92: #{_lambda_.1} parent=0
    _
  %s10 = ssub.s32 1, %s8
  %s11 = scalar_select 0, %s10, %s8
  $region1: #{_lambda_.1} parent=0
    #allocation2 [shape = 'u8[409600]{0}', space=vmem, size = 0x64000, scoped, tag = 'input window, operand 0']
    #allocation3 [shape = 'u8[4096]{0}', space=smem, size = 0x1000, scoped, tag = 'input window, operand 1, single buffered']
    #allocation4 [shape = 's32[2]{0}', space=sflag, size = 0x8, scoped, tag = 'scoped memory for _lambda_.1']
    #allocation5 [shape = 'u8[512]{0}', space=smem, size = 0x200, scoped, tag = 'input window, operand 2, single buffered']
    #allocation6 [shape = 's32[1]{0}', space=sflag, size = 0x4, scoped, tag = 'scoped memory for _lambda_.1']
    %12 = vsyncpa [#allocation4], 0
    %13 = vsyncpa [#allocation6], 0
    loop: start=0, step=1, limit=5
    $region2: #{_lambda_.1} parent=1 // loop_pre_header
      _
    $region3: #{_lambda_.1} parent=1 // loop_header
      %s15 = sphi 0, %s19
      %p16 = scmp.ge.s32.totalorder %s15, 5
      %s25 = sphi 0, %s27
      %s28 = sphi 0, %s25
      %s29 = sphi 0, %s28
      %s45 = sphi 0, %s29
      %s49 = sphi 0, %s49
      %s51 = sphi 0, %s49
      %s52 = sphi 0, %s51
      %s66 = sphi 0, %s52
      %s70 = sphi 0, %s70
      %s72 = sphi 0, %s70
      %s73 = sphi 0, %s72
      %s87 = sphi 0, %s73
      %s91 = sphi 0, %s91
      %s93 = sphi 0, %s91
      %s94 = sphi 0, %s93
      %s108 = sphi 0, %s94
      %s112 = sphi 0, %s112
      %s114 = sphi 0, %s112
      %s115 = sphi 0, %s114
      %s129 = sphi 0, %s115
      %s133 = sphi 0, %s133
      %s135 = sphi 0, %s133
      %s136 = sphi 0, %s135
      %s150 = sphi 0, %s136
      %s154 = sphi 0, %s154
      %s156 = sphi 0, %s154
      %s157 = sphi 0, %s156
      %s171 = sphi 0, %s157
      %s177 = sphi 0, %s179
      %s180 = sphi 0, %s177
      %s181 = sphi 0, %s180
      %s197 = sphi 0, %s181
    $region4: #{_lambda_.1} parent=1 // loop_header_branch
      %18 = sbr.rel (%p16) target = $region8
    $region5: #{_lambda_.1} parent=1 // loop_body
      %s20 = ssub.s32 %s15, 1
      %s21 = ssub.s32 %s15, 2
      %s22 = sadd.s32 %s15, 1
      %s23 = ssub.s32 %s15, %s22
      %p24 = scmp.eq.s32.totalorder %s23, 0
      %s26 = sadd.s32 %s25, 1
      %s27 = scalar_select %p24, %s25, %s26
      %p30 = pneg %p24
      %p31 = scmp.eq.s32.totalorder %s15, 2
      %p32 = por %p30, %p31
      %p33 = scmp.ne.s32.totalorder %s25, %s28
      %p34 = scmp.eq.s32.totalorder %s15, 0
      %p35 = por %p33, %p34
      %p36 = scmp.ne.s32.totalorder %s25, %s28
      %p37 = scmp.eq.s32.totalorder %s20, 2
      %p38 = por %p36, %p37
      %p39 = scmp.ne.s32.totalorder %s28, %s29
      %p40 = scmp.eq.s32.totalorder %s20, 0
      %p41 = por %p39, %p40
      %p42 = scmp.ne.s32.totalorder %s28, %s29
      %p43 = scmp.eq.s32.totalorder %s21, 2
      %p44 = por %p42, %p43
      %p46 = scmp.ne.s32.totalorder %s29, %s45
      %p47 = scmp.eq.s32.totalorder %s21, 0
      %p48 = por %p46, %p47
      %s50 = sadd.s32 %s49, 1
      %p53 = scmp.eq.s32.totalorder %s15, 2
      %p54 = scmp.ne.s32.totalorder %s49, %s51
      %p55 = scmp.eq.s32.totalorder %s15, 0
      %p56 = por %p54, %p55
      %p57 = scmp.ne.s32.totalorder %s49, %s51
      %p58 = scmp.eq.s32.totalorder %s20, 2
      %p59 = por %p57, %p58
      %p60 = scmp.ne.s32.totalorder %s51, %s52
      %p61 = scmp.eq.s32.totalorder %s20, 0
      %p62 = por %p60, %p61
      %p63 = scmp.ne.s32.totalorder %s51, %s52
      %p64 = scmp.eq.s32.totalorder %s21, 2
      %p65 = por %p63, %p64
      %p67 = scmp.ne.s32.totalorder %s52, %s66
      %p68 = scmp.eq.s32.totalorder %s21, 0
      %p69 = por %p67, %p68
      %s71 = sadd.s32 %s70, 1
      %p74 = scmp.eq.s32.totalorder %s15, 2
      %p75 = scmp.ne.s32.totalorder %s70, %s72
      %p76 = scmp.eq.s32.totalorder %s15, 0
      %p77 = por %p75, %p76
      %p78 = scmp.ne.s32.totalorder %s70, %s72
      %p79 = scmp.eq.s32.totalorder %s20, 2
      %p80 = por %p78, %p79
      %p81 = scmp.ne.s32.totalorder %s72, %s73
      %p82 = scmp.eq.s32.totalorder %s20, 0
      %p83 = por %p81, %p82
      %p84 = scmp.ne.s32.totalorder %s72, %s73
      %p85 = scmp.eq.s32.totalorder %s21, 2
      %p86 = por %p84, %p85
      %p88 = scmp.ne.s32.totalorder %s73, %s87
      %p89 = scmp.eq.s32.totalorder %s21, 0
      %p90 = por %p88, %p89
      %s92 = sadd.s32 %s91, 1
      %p95 = scmp.eq.s32.totalorder %s15, 2
      %p96 = scmp.ne.s32.totalorder %s91, %s93
      %p97 = scmp.eq.s32.totalorder %s15, 0
      %p98 = por %p96, %p97
      %p99 = scmp.ne.s32.totalorder %s91, %s93
      %p100 = scmp.eq.s32.totalorder %s20, 2
      %p101 = por %p99, %p100
      %p102 = scmp.ne.s32.totalorder %s93, %s94
      %p103 = scmp.eq.s32.totalorder %s20, 0
      %p104 = por %p102, %p103
      %p105 = scmp.ne.s32.totalorder %s93, %s94
      %p106 = scmp.eq.s32.totalorder %s21, 2
      %p107 = por %p105, %p106
      %p109 = scmp.ne.s32.totalorder %s94, %s108
      %p110 = scmp.eq.s32.totalorder %s21, 0
      %p111 = por %p109, %p110
      %s113 = sadd.s32 %s112, 1
      %p116 = scmp.eq.s32.totalorder %s15, 2
      %p117 = scmp.ne.s32.totalorder %s112, %s114
      %p118 = scmp.eq.s32.totalorder %s15, 0
      %p119 = por %p117, %p118
      %p120 = scmp.ne.s32.totalorder %s112, %s114
      %p121 = scmp.eq.s32.totalorder %s20, 2
      %p122 = por %p120, %p121
      %p123 = scmp.ne.s32.totalorder %s114, %s115
      %p124 = scmp.eq.s32.totalorder %s20, 0
      %p125 = por %p123, %p124
      %p126 = scmp.ne.s32.totalorder %s114, %s115
      %p127 = scmp.eq.s32.totalorder %s21, 2
      %p128 = por %p126, %p127
      %p130 = scmp.ne.s32.totalorder %s115, %s129
      %p131 = scmp.eq.s32.totalorder %s21, 0
      %p132 = por %p130, %p131
      %s134 = sadd.s32 %s133, 1
      %p137 = scmp.eq.s32.totalorder %s15, 2
      %p138 = scmp.ne.s32.totalorder %s133, %s135
      %p139 = scmp.eq.s32.totalorder %s15, 0
      %p140 = por %p138, %p139
      %p141 = scmp.ne.s32.totalorder %s133, %s135
      %p142 = scmp.eq.s32.totalorder %s20, 2
      %p143 = por %p141, %p142
      %p144 = scmp.ne.s32.totalorder %s135, %s136
      %p145 = scmp.eq.s32.totalorder %s20, 0
      %p146 = por %p144, %p145
      %p147 = scmp.ne.s32.totalorder %s135, %s136
      %p148 = scmp.eq.s32.totalorder %s21, 2
      %p149 = por %p147, %p148
      %p151 = scmp.ne.s32.totalorder %s136, %s150
      %p152 = scmp.eq.s32.totalorder %s21, 0
      %p153 = por %p151, %p152
      %s155 = sadd.s32 %s154, 1
      %p158 = scmp.eq.s32.totalorder %s15, 2
      %p159 = scmp.ne.s32.totalorder %s154, %s156
      %p160 = scmp.eq.s32.totalorder %s15, 0
      %p161 = por %p159, %p160
      %p162 = scmp.ne.s32.totalorder %s154, %s156
      %p163 = scmp.eq.s32.totalorder %s20, 2
      %p164 = por %p162, %p163
      %p165 = scmp.ne.s32.totalorder %s156, %s157
      %p166 = scmp.eq.s32.totalorder %s20, 0
      %p167 = por %p165, %p166
      %p168 = scmp.ne.s32.totalorder %s156, %s157
      %p169 = scmp.eq.s32.totalorder %s21, 2
      %p170 = por %p168, %p169
      %p172 = scmp.ne.s32.totalorder %s157, %s171
      %p173 = scmp.eq.s32.totalorder %s21, 0
      %p174 = por %p172, %p173
      %s175 = ssub.s32 %s15, %s22
      %p176 = scmp.eq.s32.totalorder %s175, 0
      %s178 = sadd.s32 %s177, 1
      %s179 = scalar_select %p176, %s177, %s178
      %p182 = pneg %p176
      %p183 = scmp.eq.s32.totalorder %s15, 2
      %p184 = por %p182, %p183
      %p185 = scmp.ne.s32.totalorder %s177, %s180
      %p186 = scmp.eq.s32.totalorder %s15, 0
      %p187 = por %p185, %p186
      %p188 = scmp.ne.s32.totalorder %s177, %s180
      %p189 = scmp.eq.s32.totalorder %s20, 2
      %p190 = por %p188, %p189
      %p191 = scmp.ne.s32.totalorder %s180, %s181
      %p192 = scmp.eq.s32.totalorder %s20, 0
      %p193 = por %p191, %p192
      %p194 = scmp.ne.s32.totalorder %s180, %s181
      %p195 = scmp.eq.s32.totalorder %s21, 2
      %p196 = por %p194, %p195
      %p198 = scmp.ne.s32.totalorder %s181, %s197
      %p199 = scmp.eq.s32.totalorder %s21, 0
      %p200 = por %p198, %p199
      %p201 = scmp.le.s32.totalorder 1, %s15
      %p202 = scmp.lt.s32.totalorder %s15, 4
      %p203 = pnand %p201, %p202
      %p204 = pneg %p203
      // Predicated region
      $region9: #{_lambda_.1} parent=5 // pred_check
        _
      $region10: #{_lambda_.1} parent=5 // pred_check_branch
        %206 = sbr.rel (%p203) target = $region12
      $region11: #{_lambda_.1} parent=5 // pred_region
        %s207 = ssub.s32 %s15, 1
        // Predicated region
        $region13: #{_lambda_.1} parent=11 // pred_check
          %p208 = pneg %p62
        $region14: #{_lambda_.1} parent=11 // pred_check_branch
          %210 = sbr.rel (%p208) target = $region16
        $region15: #{_lambda_.1} parent=11 // pred_region
          %s212 = ssub.s32 128, 128
          %213 = vsyncadd [#allocation4], %s212
          %s215 = sshll.u32 %s1, 4
          %s216 = int_to_ptr.vmem [resolvable:$true] %s215
          %218 = dma.vmem_to_smem %s216, 128, [#allocation3], [#allocation4]
        $region16: #{_lambda_.1} parent=11 // pred_fallthru
          _
        // Predicated region
        $region17: #{_lambda_.1} parent=11 // pred_check
          %p219 = pneg %p83
        $region18: #{_lambda_.1} parent=11 // pred_check_branch
          %221 = sbr.rel (%p219) target = $region20
        $region19: #{_lambda_.1} parent=11 // pred_region
          %s223 = ssub.s32 16, 16
          %224 = vsyncadd [#allocation6], %s223
          %s226 = sshll.u32 %s2, 4
          %s227 = int_to_ptr.vmem [resolvable:$true] %s226
          %229 = dma.vmem_to_smem %s227, 16, [#allocation5], [#allocation6]
        $region20: #{_lambda_.1} parent=11 // pred_fallthru
          _
        // Predicated region
        $region21: #{_lambda_.1} parent=11 // pred_check
          %p230 = pneg %p104
        $region22: #{_lambda_.1} parent=11 // pred_check_branch
          %232 = sbr.rel (%p230) target = $region24
        $region23: #{_lambda_.1} parent=11 // pred_region
          _
        $region24: #{_lambda_.1} parent=11 // pred_fallthru
          _
        // Predicated region
        $region25: #{_lambda_.1} parent=11 // pred_check
          %p233 = pneg %p125
        $region26: #{_lambda_.1} parent=11 // pred_check_branch
          %235 = sbr.rel (%p233) target = $region28
        $region27: #{_lambda_.1} parent=11 // pred_region
          _
        $region28: #{_lambda_.1} parent=11 // pred_fallthru
          _
        // Predicated region
        $region29: #{_lambda_.1} parent=11 // pred_check
          %p236 = pneg %p146
        $region30: #{_lambda_.1} parent=11 // pred_check_branch
          %238 = sbr.rel (%p236) target = $region32
        $region31: #{_lambda_.1} parent=11 // pred_region
          _
        $region32: #{_lambda_.1} parent=11 // pred_fallthru
          _
        // Predicated region
        $region33: #{_lambda_.1} parent=11 // pred_check
          %p239 = pneg %p167
        $region34: #{_lambda_.1} parent=11 // pred_check_branch
          %241 = sbr.rel (%p239) target = $region36
        $region35: #{_lambda_.1} parent=11 // pred_region
          _
        $region36: #{_lambda_.1} parent=11 // pred_fallthru
          _
      $region12: #{_lambda_.1} parent=5 // pred_fallthru
        _
      %p242 = scmp.lt.s32.totalorder %s15, 3
      // Predicated region
      $region37: #{_lambda_.1} parent=5 // pred_check
        %p243 = pneg %p242
      $region38: #{_lambda_.1} parent=5 // pred_check_branch
        %245 = sbr.rel (%p243) target = $region40
      $region39: #{_lambda_.1} parent=5 // pred_region
        // Predicated region
        $region41: #{_lambda_.1} parent=39 // pred_check
          %p246 = pneg %p35
        $region42: #{_lambda_.1} parent=39 // pred_check_branch
          %248 = sbr.rel (%p246) target = $region44
        $region43: #{_lambda_.1} parent=39 // pred_region
          %s249 = sand.u32 %s25, 1
          %s250 = sand.u32 %s25, 1
          %s251 = smul.addr %s250, 400
          %s252 = scalar_lea.vmem [#allocation2], %s251
          %s253 = smul.addr %s15, 2
          %s254 = smul.addr %s253, 8
          %s255 = scalar_lea.vmem %s0, %s254
          // Predicated region
          $region45: #{_lambda_.1} parent=43 // pred_check
            _
          $region46: #{_lambda_.1} parent=43 // pred_check_branch
            %257 = sbr.rel (0) target = $region48
          $region47: #{_lambda_.1} parent=43 // pred_region
            // Predicated region
            $region49: #{_lambda_.1} parent=47 // pred_check
              _
            $region50: #{_lambda_.1} parent=47 // pred_check_branch
              %259 = sbr.rel (0) target = $region52
            $region51: #{_lambda_.1} parent=47 // pred_region
              loop: start=0, step=1, limit=1
              $region53: #{_lambda_.1} parent=51 // loop_pre_header
                _
              $region54: #{_lambda_.1} parent=51 // loop_header
                %s261 = sphi 0, %s265
                %p262 = scmp.ge.s32.totalorder %s261, 1
                %s266 = sphi %s255, %s255
                %s267 = sphi %s252, %s252
              $region55: #{_lambda_.1} parent=51 // loop_header_branch
                %264 = sbr.rel (%p262) target = $region59
              $region56: #{_lambda_.1} parent=51 // loop_body
                %v268 = vld [vmem:[%s266] sm:$0xff]
                %269 = vst [vmem:[%s267] sm:$0xff] %v268
                %v270 = vld [vmem:[%s266 + $0x8] sm:$0xff]
                %271 = vst [vmem:[%s267 + $0x8] sm:$0xff] %v270
                %v272 = vld [vmem:[%s266 + $0x30] sm:$0xff]
                %273 = vst [vmem:[%s267 + $0x10] sm:$0xff] %v272
                %v274 = vld [vmem:[%s266 + $0x38] sm:$0xff]
                %275 = vst [vmem:[%s267 + $0x18] sm:$0xff] %v274
                %v276 = vld [vmem:[%s266 + $0x60] sm:$0xff]
                %277 = vst [vmem:[%s267 + $0x20] sm:$0xff] %v276
                %v278 = vld [vmem:[%s266 + $0x68] sm:$0xff]
                %279 = vst [vmem:[%s267 + $0x28] sm:$0xff] %v278
                %v280 = vld [vmem:[%s266 + $0x90] sm:$0xff]
                %281 = vst [vmem:[%s267 + $0x30] sm:$0xff] %v280
                %v282 = vld [vmem:[%s266 + $0x98] sm:$0xff]
                %283 = vst [vmem:[%s267 + $0x38] sm:$0xff] %v282
                %v284 = vld [vmem:[%s266 + $0xc0] sm:$0xff]
                %285 = vst [vmem:[%s267 + $0x40] sm:$0xff] %v284
                %v286 = vld [vmem:[%s266 + $0xc8] sm:$0xff]
                %287 = vst [vmem:[%s267 + $0x48] sm:$0xff] %v286
                %v288 = vld [vmem:[%s266 + $0xf0] sm:$0xff]
                %289 = vst [vmem:[%s267 + $0x50] sm:$0xff] %v288
                %v290 = vld [vmem:[%s266 + $0xf8] sm:$0xff]
                %291 = vst [vmem:[%s267 + $0x58] sm:$0xff] %v290
                %v292 = vld [vmem:[%s266 + $0x120] sm:$0xff]
                %293 = vst [vmem:[%s267 + $0x60] sm:$0xff] %v292
                %v294 = vld [vmem:[%s266 + $0x128] sm:$0xff]
                %295 = vst [vmem:[%s267 + $0x68] sm:$0xff] %v294
                %v296 = vld [vmem:[%s266 + $0x150] sm:$0xff]
                %297 = vst [vmem:[%s267 + $0x70] sm:$0xff] %v296
                %v298 = vld [vmem:[%s266 + $0x158] sm:$0xff]
                %299 = vst [vmem:[%s267 + $0x78] sm:$0xff] %v298
                %v300 = vld [vmem:[%s266 + $0x180] sm:$0xff]
                %301 = vst [vmem:[%s267 + $0x80] sm:$0xff] %v300
                %v302 = vld [vmem:[%s266 + $0x188] sm:$0xff]
                %303 = vst [vmem:[%s267 + $0x88] sm:$0xff] %v302
                %v304 = vld [vmem:[%s266 + $0x1b0] sm:$0xff]
                %305 = vst [vmem:[%s267 + $0x90] sm:$0xff] %v304
                %v306 = vld [vmem:[%s266 + $0x1b8] sm:$0xff]
                %307 = vst [vmem:[%s267 + $0x98] sm:$0xff] %v306
                %v308 = vld [vmem:[%s266 + $0x1e0] sm:$0xff]
                %309 = vst [vmem:[%s267 + $0xa0] sm:$0xff] %v308
                %v310 = vld [vmem:[%s266 + $0x1e8] sm:$0xff]
                %311 = vst [vmem:[%s267 + $0xa8] sm:$0xff] %v310
                %v312 = vld [vmem:[%s266 + $0x210] sm:$0xff]
                %313 = vst [vmem:[%s267 + $0xb0] sm:$0xff] %v312
                %v314 = vld [vmem:[%s266 + $0x218] sm:$0xff]
                %315 = vst [vmem:[%s267 + $0xb8] sm:$0xff] %v314
                %v316 = vld [vmem:[%s266 + $0x240] sm:$0xff]
                %317 = vst [vmem:[%s267 + $0xc0] sm:$0xff] %v316
                %v318 = vld [vmem:[%s266 + $0x248] sm:$0xff]
                %319 = vst [vmem:[%s267 + $0xc8] sm:$0xff] %v318
                %v320 = vld [vmem:[%s266 + $0x270] sm:$0xff]
                %321 = vst [vmem:[%s267 + $0xd0] sm:$0xff] %v320
                %v322 = vld [vmem:[%s266 + $0x278] sm:$0xff]
                %323 = vst [vmem:[%s267 + $0xd8] sm:$0xff] %v322
                %v324 = vld [vmem:[%s266 + $0x2a0] sm:$0xff]
                %325 = vst [vmem:[%s267 + $0xe0] sm:$0xff] %v324
                %v326 = vld [vmem:[%s266 + $0x2a8] sm:$0xff]
                %327 = vst [vmem:[%s267 + $0xe8] sm:$0xff] %v326
                %v328 = vld [vmem:[%s266 + $0x2d0] sm:$0xff]
                %329 = vst [vmem:[%s267 + $0xf0] sm:$0xff] %v328
                %v330 = vld [vmem:[%s266 + $0x2d8] sm:$0xff]
                %331 = vst [vmem:[%s267 + $0xf8] sm:$0xff] %v330
                %v332 = vld [vmem:[%s266 + $0x300] sm:$0xff]
                %333 = vst [vmem:[%s267 + $0x100] sm:$0xff] %v332
                %v334 = vld [vmem:[%s266 + $0x308] sm:$0xff]
                %335 = vst [vmem:[%s267 + $0x108] sm:$0xff] %v334
                %v336 = vld [vmem:[%s266 + $0x330] sm:$0xff]
                %337 = vst [vmem:[%s267 + $0x110] sm:$0xff] %v336
                %v338 = vld [vmem:[%s266 + $0x338] sm:$0xff]
                %339 = vst [vmem:[%s267 + $0x118] sm:$0xff] %v338
                %v340 = vld [vmem:[%s266 + $0x360] sm:$0xff]
                %341 = vst [vmem:[%s267 + $0x120] sm:$0xff] %v340
                %v342 = vld [vmem:[%s266 + $0x368] sm:$0xff]
                %343 = vst [vmem:[%s267 + $0x128] sm:$0xff] %v342
                %v344 = vld [vmem:[%s266 + $0x390] sm:$0xff]
                %345 = vst [vmem:[%s267 + $0x130] sm:$0xff] %v344
                %v346 = vld [vmem:[%s266 + $0x398] sm:$0xff]
                %347 = vst [vmem:[%s267 + $0x138] sm:$0xff] %v346
                %v348 = vld [vmem:[%s266 + $0x3c0] sm:$0xff]
                %349 = vst [vmem:[%s267 + $0x140] sm:$0xff] %v348
                %v350 = vld [vmem:[%s266 + $0x3c8] sm:$0xff]
                %351 = vst [vmem:[%s267 + $0x148] sm:$0xff] %v350
                %v352 = vld [vmem:[%s266 + $0x3f0] sm:$0xff]
                %353 = vst [vmem:[%s267 + $0x150] sm:$0xff] %v352
                %v354 = vld [vmem:[%s266 + $0x3f8] sm:$0xff]
                %355 = vst [vmem:[%s267 + $0x158] sm:$0xff] %v354
                %v356 = vld [vmem:[%s266 + $0x420] sm:$0xff]
                %357 = vst [vmem:[%s267 + $0x160] sm:$0xff] %v356
                %v358 = vld [vmem:[%s266 + $0x428] sm:$0xff]
                %359 = vst [vmem:[%s267 + $0x168] sm:$0xff] %v358
                %v360 = vld [vmem:[%s266 + $0x450] sm:$0xff]
                %361 = vst [vmem:[%s267 + $0x170] sm:$0xff] %v360
                %v362 = vld [vmem:[%s266 + $0x458] sm:$0xff]
                %363 = vst [vmem:[%s267 + $0x178] sm:$0xff] %v362
                %v364 = vld [vmem:[%s266 + $0x480] sm:$0xff]
                %365 = vst [vmem:[%s267 + $0x180] sm:$0xff] %v364
                %v366 = vld [vmem:[%s266 + $0x488] sm:$0xff]
                %367 = vst [vmem:[%s267 + $0x188] sm:$0xff] %v366
              $region57: #{_lambda_.1} parent=51 // loop_footer
                %s265 = sadd.s32 1, %s261
              $region58: #{_lambda_.1} parent=51 // loop_footer_branch
                %260 = sbr.rel target = $region54
              $region59: #{_lambda_.1} parent=51 // loop_exit
                _
            $region52: #{_lambda_.1} parent=47 // pred_fallthru
              _
            // Predicated region
            $region60: #{_lambda_.1} parent=47 // pred_check
              _
            $region61: #{_lambda_.1} parent=47 // pred_check_branch
              %369 = sbr.rel target = $region63
            $region62: #{_lambda_.1} parent=47 // pred_region
              _
            $region63: #{_lambda_.1} parent=47 // pred_fallthru
              _
          $region48: #{_lambda_.1} parent=43 // pred_fallthru
            _
          %370 = vnop
        $region44: #{_lambda_.1} parent=39 // pred_fallthru
          _
      $region40: #{_lambda_.1} parent=5 // pred_fallthru
        _
      %p371 = scmp.le.s32.totalorder 1, %s15
      %p372 = scmp.lt.s32.totalorder %s15, 4
      %p373 = pnand %p371, %p372
      %p374 = pneg %p373
      // Predicated region
      $region64: #{_lambda_.1} parent=5 // pred_check
        _
      $region65: #{_lambda_.1} parent=5 // pred_check_branch
        %376 = sbr.rel (%p373) target = $region67
      $region66: #{_lambda_.1} parent=5 // pred_region
        %s377 = ssub.s32 %s15, 1
        %s378 = sand.u32 %s28, 1
        %s379 = sand.u32 %s28, 1
        %s380 = smul.addr %s379, 400
        %s381 = scalar_lea.vmem [#allocation2], %s380
        // Predicated region
        $region68: #{_lambda_.1} parent=66 // pred_check
          %p382 = pneg %p41
        $region69: #{_lambda_.1} parent=66 // pred_check_branch
          %384 = sbr.rel (%p382) target = $region71
        $region70: #{_lambda_.1} parent=66 // pred_region
          _
        $region71: #{_lambda_.1} parent=66 // pred_fallthru
          _
        // Predicated region
        $region72: #{_lambda_.1} parent=66 // pred_check
          %p385 = pneg %p62
        $region73: #{_lambda_.1} parent=66 // pred_check_branch
          %387 = sbr.rel (%p385) target = $region75
        $region74: #{_lambda_.1} parent=66 // pred_region
          %388 = dma.done [#allocation4], 128
        $region75: #{_lambda_.1} parent=66 // pred_fallthru
          _
        // Predicated region
        $region76: #{_lambda_.1} parent=66 // pred_check
          %p389 = pneg %p83
        $region77: #{_lambda_.1} parent=66 // pred_check_branch
          %391 = sbr.rel (%p389) target = $region79
        $region78: #{_lambda_.1} parent=66 // pred_region
          %392 = dma.done [#allocation6], 16
        $region79: #{_lambda_.1} parent=66 // pred_fallthru
          _
        %393 = sfence
        %s394 = sand.u32 %s28, 1
        %s395 = sand.u32 %s28, 1
        %s396 = smul.addr %s395, 400
        %s397 = scalar_lea.vmem [#allocation2], %s396
        %p398 = pneg %p41
        %p399 = pneg %p38
        %p400 = pneg %p62
        %p401 = pneg %p59
        %p402 = pneg %p83
        %p403 = pneg %p80
        %p404 = pneg %p104
        %p405 = pneg %p101
        %p406 = pneg %p125
        %p407 = pneg %p122
        %p408 = pneg %p146
        %p409 = pneg %p143
        %p410 = pneg %p167
        %p411 = pneg %p164
        %p412 = pneg %p193
        %p413 = pneg %p190
        %p414 = scmp.lt.s32.totalorder %s20, 2
        %s415 = scalar_select %p414, %s20, 2
        %s416 = smul.addr %s415, 8
        %s417 = scalar_lea.vmem %s7, %s416
        %p418 = scmp.lt.s32.totalorder %s20, 2
        %s419 = scalar_select %p418, %s20, 2
        %s420 = smul.addr %s419, 8
        %s421 = scalar_lea.vmem %s7, %s420
        %v422 = vld [vmem:[%s4] sm:$0x1]
        %v424 = vlaneseq
        %v425 = vshrl.u32 %v424, 7
        %v426 = vsub.s32 0, %v425
        %v427 = vrot.slane %v422, %v426
        %s429 = sld [smem:[#allocation3]]
        %v430 = vld [vmem:[%s381] sm:$0xff]
        %v431 = vld [vmem:[%s381 + $0x8] sm:$0xff]
        %v432 = vstv %s429
        %v433 = vmul.f32 %v432, %v430
        %v434 = vmul.f32 %v432, %v431
        %s435 = sld [smem:[#allocation3 + $0x1]]
        %s436 = scalar_lea.vmem %s381, 16 [#allocation2]
        %v437 = vld [vmem:[%s436] sm:$0xff]
        %v438 = vld [vmem:[%s436 + $0x8] sm:$0xff]
        %v439 = vstv %s435
        %v440 = vmul.f32 %v439, %v437
        %v441 = vmul.f32 %v439, %v438
        %v442 = vadd.f32 %v433, %v440
        %v443 = vadd.f32 %v434, %v441
        %s444 = sld [smem:[#allocation3 + $0x2]]
        %s445 = scalar_lea.vmem %s381, 32 [#allocation2]
        %v446 = vld [vmem:[%s445] sm:$0xff]
        %v447 = vld [vmem:[%s445 + $0x8] sm:$0xff]
        %v448 = vstv %s444
        %v449 = vmul.f32 %v448, %v446
        %v450 = vmul.f32 %v448, %v447
        %v451 = vadd.f32 %v442, %v449
        %v452 = vadd.f32 %v443, %v450
        %s453 = sld [smem:[#allocation3 + $0x3]]
        %s454 = scalar_lea.vmem %s381, 48 [#allocation2]
        %v455 = vld [vmem:[%s454] sm:$0xff]
        %v456 = vld [vmem:[%s454 + $0x8] sm:$0xff]
        %v457 = vstv %s453
        %v458 = vmul.f32 %v457, %v455
        %v459 = vmul.f32 %v457, %v456
        %v460 = vadd.f32 %v451, %v458
        %v461 = vadd.f32 %v452, %v459
        %s462 = sld [smem:[#allocation3 + $0x4]]
        %s463 = scalar_lea.vmem %s381, 64 [#allocation2]
        %v464 = vld [vmem:[%s463] sm:$0xff]
        %v465 = vld [vmem:[%s463 + $0x8] sm:$0xff]
        %v466 = vstv %s462
        %v467 = vmul.f32 %v466, %v464
        %v468 = vmul.f32 %v466, %v465
        %v469 = vadd.f32 %v460, %v467
        %v470 = vadd.f32 %v461, %v468
        %s471 = sld [smem:[#allocation3 + $0x5]]
        %s472 = scalar_lea.vmem %s381, 80 [#allocation2]
        %v473 = vld [vmem:[%s472] sm:$0xff]
        %v474 = vld [vmem:[%s472 + $0x8] sm:$0xff]
        %v475 = vstv %s471
        %v476 = vmul.f32 %v475, %v473
        %v477 = vmul.f32 %v475, %v474
        %v478 = vadd.f32 %v469, %v476
        %v479 = vadd.f32 %v470, %v477
        %s480 = sld [smem:[#allocation3 + $0x6]]
        %s481 = scalar_lea.vmem %s381, 96 [#allocation2]
        %v482 = vld [vmem:[%s481] sm:$0xff]
        %v483 = vld [vmem:[%s481 + $0x8] sm:$0xff]
        %v484 = vstv %s480
        %v485 = vmul.f32 %v484, %v482
        %v486 = vmul.f32 %v484, %v483
        %v487 = vadd.f32 %v478, %v485
        %v488 = vadd.f32 %v479, %v486
        %s489 = sld [smem:[#allocation3 + $0x7]]
        %s490 = scalar_lea.vmem %s381, 112 [#allocation2]
        %v491 = vld [vmem:[%s490] sm:$0xff]
        %v492 = vld [vmem:[%s490 + $0x8] sm:$0xff]
        %v493 = vstv %s489
        %v494 = vmul.f32 %v493, %v491
        %v495 = vmul.f32 %v493, %v492
        %v496 = vadd.f32 %v487, %v494
        %v497 = vadd.f32 %v488, %v495
        %s498 = sld [smem:[#allocation3 + $0x8]]
        %s499 = scalar_lea.vmem %s381, 128 [#allocation2]
        %v500 = vld [vmem:[%s499] sm:$0xff]
        %v501 = vld [vmem:[%s499 + $0x8] sm:$0xff]
        %v502 = vstv %s498
        %v503 = vmul.f32 %v502, %v500
        %v504 = vmul.f32 %v502, %v501
        %v505 = vadd.f32 %v496, %v503
        %v506 = vadd.f32 %v497, %v504
        %s507 = sld [smem:[#allocation3 + $0x9]]
        %s508 = scalar_lea.vmem %s381, 144 [#allocation2]
        %v509 = vld [vmem:[%s508] sm:$0xff]
        %v510 = vld [vmem:[%s508 + $0x8] sm:$0xff]
        %v511 = vstv %s507
        %v512 = vmul.f32 %v511, %v509
        %v513 = vmul.f32 %v511, %v510
        %v514 = vadd.f32 %v505, %v512
        %v515 = vadd.f32 %v506, %v513
        %s516 = sld [smem:[#allocation3 + $0xa]]
        %s517 = scalar_lea.vmem %s381, 160 [#allocation2]
        %v518 = vld [vmem:[%s517] sm:$0xff]
        %v519 = vld [vmem:[%s517 + $0x8] sm:$0xff]
        %v520 = vstv %s516
        %v521 = vmul.f32 %v520, %v518
        %v522 = vmul.f32 %v520, %v519
        %v523 = vadd.f32 %v514, %v521
        %v524 = vadd.f32 %v515, %v522
        %s525 = sld [smem:[#allocation3 + $0xb]]
        %s526 = scalar_lea.vmem %s381, 176 [#allocation2]
        %v527 = vld [vmem:[%s526] sm:$0xff]
        %v528 = vld [vmem:[%s526 + $0x8] sm:$0xff]
        %v529 = vstv %s525
        %v530 = vmul.f32 %v529, %v527
        %v531 = vmul.f32 %v529, %v528
        %v532 = vadd.f32 %v523, %v530
        %v533 = vadd.f32 %v524, %v531
        %s534 = sld [smem:[#allocation3 + $0xc]]
        %s535 = scalar_lea.vmem %s381, 192 [#allocation2]
        %v536 = vld [vmem:[%s535] sm:$0xff]
        %v537 = vld [vmem:[%s535 + $0x8] sm:$0xff]
        %v538 = vstv %s534
        %v539 = vmul.f32 %v538, %v536
        %v540 = vmul.f32 %v538, %v537
        %v541 = vadd.f32 %v532, %v539
        %v542 = vadd.f32 %v533, %v540
        %s543 = sld [smem:[#allocation3 + $0xd]]
        %s544 = scalar_lea.vmem %s381, 208 [#allocation2]
        %v545 = vld [vmem:[%s544] sm:$0xff]
        %v546 = vld [vmem:[%s544 + $0x8] sm:$0xff]
        %v547 = vstv %s543
        %v548 = vmul.f32 %v547, %v545
        %v549 = vmul.f32 %v547, %v546
        %v550 = vadd.f32 %v541, %v548
        %v551 = vadd.f32 %v542, %v549
        %s552 = sld [smem:[#allocation3 + $0xe]]
        %s553 = scalar_lea.vmem %s381, 224 [#allocation2]
        %v554 = vld [vmem:[%s553] sm:$0xff]
        %v555 = vld [vmem:[%s553 + $0x8] sm:$0xff]
        %v556 = vstv %s552
        %v557 = vmul.f32 %v556, %v554
        %v558 = vmul.f32 %v556, %v555
        %v559 = vadd.f32 %v550, %v557
        %v560 = vadd.f32 %v551, %v558
        %s561 = sld [smem:[#allocation3 + $0xf]]
        %s562 = scalar_lea.vmem %s381, 240 [#allocation2]
        %v563 = vld [vmem:[%s562] sm:$0xff]
        %v564 = vld [vmem:[%s562 + $0x8] sm:$0xff]
        %v565 = vstv %s561
        %v566 = vmul.f32 %v565, %v563
        %v567 = vmul.f32 %v565, %v564
        %v568 = vadd.f32 %v559, %v566
        %v569 = vadd.f32 %v560, %v567
        %s570 = sld [smem:[#allocation3 + $0x10]]
        %s571 = scalar_lea.vmem %s381, 256 [#allocation2]
        %v572 = vld [vmem:[%s571] sm:$0xff]
        %v573 = vld [vmem:[%s571 + $0x8] sm:$0xff]
        %v574 = vstv %s570
        %v575 = vmul.f32 %v574, %v572
        %v576 = vmul.f32 %v574, %v573
        %v577 = vadd.f32 %v568, %v575
        %v578 = vadd.f32 %v569, %v576
        %s579 = sld [smem:[#allocation3 + $0x11]]
        %s580 = scalar_lea.vmem %s381, 272 [#allocation2]
        %v581 = vld [vmem:[%s580] sm:$0xff]
        %v582 = vld [vmem:[%s580 + $0x8] sm:$0xff]
        %v583 = vstv %s579
        %v584 = vmul.f32 %v583, %v581
        %v585 = vmul.f32 %v583, %v582
        %v586 = vadd.f32 %v577, %v584
        %v587 = vadd.f32 %v578, %v585
        %s588 = sld [smem:[#allocation3 + $0x12]]
        %s589 = scalar_lea.vmem %s381, 288 [#allocation2]
        %v590 = vld [vmem:[%s589] sm:$0xff]
        %v591 = vld [vmem:[%s589 + $0x8] sm:$0xff]
        %v592 = vstv %s588
        %v593 = vmul.f32 %v592, %v590
        %v594 = vmul.f32 %v592, %v591
        %v595 = vadd.f32 %v586, %v593
        %v596 = vadd.f32 %v587, %v594
        %s597 = sld [smem:[#allocation3 + $0x13]]
        %s598 = scalar_lea.vmem %s381, 304 [#allocation2]
        %v599 = vld [vmem:[%s598] sm:$0xff]
        %v600 = vld [vmem:[%s598 + $0x8] sm:$0xff]
        %v601 = vstv %s597
        %v602 = vmul.f32 %v601, %v599
        %v603 = vmul.f32 %v601, %v600
        %v604 = vadd.f32 %v595, %v602
        %v605 = vadd.f32 %v596, %v603
        %s606 = sld [smem:[#allocation3 + $0x14]]
        %s607 = scalar_lea.vmem %s381, 320 [#allocation2]
        %v608 = vld [vmem:[%s607] sm:$0xff]
        %v609 = vld [vmem:[%s607 + $0x8] sm:$0xff]
        %v610 = vstv %s606
        %v611 = vmul.f32 %v610, %v608
        %v612 = vmul.f32 %v610, %v609
        %v613 = vadd.f32 %v604, %v611
        %v614 = vadd.f32 %v605, %v612
        %s615 = sld [smem:[#allocation3 + $0x15]]
        %s616 = scalar_lea.vmem %s381, 336 [#allocation2]
        %v617 = vld [vmem:[%s616] sm:$0xff]
        %v618 = vld [vmem:[%s616 + $0x8] sm:$0xff]
        %v619 = vstv %s615
        %v620 = vmul.f32 %v619, %v617
        %v621 = vmul.f32 %v619, %v618
        %v622 = vadd.f32 %v613, %v620
        %v623 = vadd.f32 %v614, %v621
        %s624 = sld [smem:[#allocation3 + $0x16]]
        %s625 = scalar_lea.vmem %s381, 352 [#allocation2]
        %v626 = vld [vmem:[%s625] sm:$0xff]
        %v627 = vld [vmem:[%s625 + $0x8] sm:$0xff]
        %v628 = vstv %s624
        %v629 = vmul.f32 %v628, %v626
        %v630 = vmul.f32 %v628, %v627
        %v631 = vadd.f32 %v622, %v629
        %v632 = vadd.f32 %v623, %v630
        %s633 = sld [smem:[#allocation3 + $0x17]]
        %s634 = scalar_lea.vmem %s381, 368 [#allocation2]
        %v635 = vld [vmem:[%s634] sm:$0xff]
        %v636 = vld [vmem:[%s634 + $0x8] sm:$0xff]
        %v637 = vstv %s633
        %v638 = vmul.f32 %v637, %v635
        %v639 = vmul.f32 %v637, %v636
        %v640 = vadd.f32 %v631, %v638
        %v641 = vadd.f32 %v632, %v639
        %s642 = sld [smem:[#allocation3 + $0x18]]
        %s643 = scalar_lea.vmem %s381, 384 [#allocation2]
        %v644 = vld [vmem:[%s643] sm:$0xff]
        %v645 = vld [vmem:[%s643 + $0x8] sm:$0xff]
        %v646 = vstv %s642
        %v647 = vmul.f32 %v646, %v644
        %v648 = vmul.f32 %v646, %v645
        %v649 = vadd.f32 %v640, %v647
        %v650 = vadd.f32 %v641, %v648
        %s651 = sld [smem:[#allocation5]]
        %v652 = vstv %s651
        %v653 = vadd.f32 %v649, %v652
        %v654 = vadd.f32 %v650, %v652
        %v655 = vmul.f32 %v653, %v653
        %v656 = vmul.f32 %v654, %v654
        %v657 = vld [vmem:[%s3] sm:$0xff]
        %v658 = vld [vmem:[%s3 + $0x8] sm:$0xff]
        %v659 = vld [vmem:[%s3 + $0x10] sm:$0xff]
        %v660 = vld [vmem:[%s3 + $0x18] sm:$0xff]
        %v661 = vld [vmem:[%s3 + $0x20] sm:$0xff]
        %v662 = vld [vmem:[%s3 + $0x28] sm:$0xff]
        %v663 = vld [vmem:[%s3 + $0x30] sm:$0xff]
        %v664 = vld [vmem:[%s3 + $0x38] sm:$0xff]
        %v665 = vld [vmem:[%s3 + $0x40] sm:$0xff]
        %v666 = vld [vmem:[%s3 + $0x48] sm:$0xff]
        %v667 = vld [vmem:[%s3 + $0x50] sm:$0xff]
        %v668 = vld [vmem:[%s3 + $0x58] sm:$0xff]
        %v669 = vld [vmem:[%s3 + $0x60] sm:$0xff]
        %v670 = vld [vmem:[%s3 + $0x68] sm:$0xff]
        %v671 = vld [vmem:[%s3 + $0x70] sm:$0xff]
        %v672 = vld [vmem:[%s3 + $0x78] sm:$0xff]
        %v673 = vld [vmem:[%s3 + $0x80] sm:$0xff]
        %v674 = vld [vmem:[%s3 + $0x88] sm:$0xff]
        %v675 = vld [vmem:[%s3 + $0x90] sm:$0xff]
        %v676 = vld [vmem:[%s3 + $0x98] sm:$0xff]
        %v677 = vld [vmem:[%s3 + $0xa0] sm:$0xff]
        %v678 = vld [vmem:[%s3 + $0xa8] sm:$0xff]
        %v679 = vld [vmem:[%s3 + $0xb0] sm:$0xff]
        %v680 = vld [vmem:[%s3 + $0xb8] sm:$0xff]
        %v681 = vld [vmem:[%s3 + $0xc0] sm:$0xf]
        %vm682 = vcmask 556032
        %v684 = vsel %vm682, %v656, 0
        %vm686 = vcmask 1043456
        %v688 = vsel %vm686, %v681, 0
        %690 = vmatprep.subr.mxu0 0.0
        %691 = vmatpush1.msra.mxu0 %v657
        %692 = vmatprep.subr.mxu0 0.0
        %693 = vmatpush1.msra.mxu0 %v658
        %694 = vmatprep.subr.mxu0 0.0
        %695 = vmatpush1.msra.mxu0 %v659
        %696 = vmatprep.subr.mxu0 0.0
        %697 = vmatpush1.msra.mxu0 %v660
        %698 = vmatprep.subr.mxu0 0.0
        %699 = vmatpush1.msra.mxu0 %v661
        %700 = vmatprep.subr.mxu0 0.0
        %701 = vmatpush1.msra.mxu0 %v662
        %702 = vmatprep.subr.mxu0 0.0
        %703 = vmatpush1.msra.mxu0 %v663
        %704 = vmatprep.subr.mxu0 0.0
        %705 = vmatpush1.msra.mxu0 %v664
        %706 = vmatprep.subr.mxu0 0.0
        %707 = vmatpush1.msra.mxu0 %v665
        %708 = vmatprep.subr.mxu0 0.0
        %709 = vmatpush1.msra.mxu0 %v666
        %710 = vmatprep.subr.mxu0 0.0
        %711 = vmatpush1.msra.mxu0 %v667
        %712 = vmatprep.subr.mxu0 0.0
        %713 = vmatpush1.msra.mxu0 %v668
        %714 = vmatprep.subr.mxu0 0.0
        %715 = vmatpush1.msra.mxu0 %v669
        %716 = vmatprep.subr.mxu0 0.0
        %717 = vmatpush1.msra.mxu0 %v670
        %718 = vmatprep.subr.mxu0 0.0
        %719 = vmatpush1.msra.mxu0 %v671
        %720 = vmatprep.subr.mxu0 0.0
        %721 = vmatpush1.msra.mxu0 %v672
        %722 = vmatprep.subr.mxu0 0.0
        %723 = vmatpush1.msra.mxu0 %v673
        %724 = vmatprep.subr.mxu0 0.0
        %725 = vmatpush1.msra.mxu0 %v674
        %726 = vmatprep.subr.mxu0 0.0
        %727 = vmatpush1.msra.mxu0 %v675
        %728 = vmatprep.subr.mxu0 0.0
        %729 = vmatpush1.msra.mxu0 %v676
        %730 = vmatprep.subr.mxu0 0.0
        %731 = vmatpush1.msra.mxu0 %v677
        %732 = vmatprep.subr.mxu0 0.0
        %733 = vmatpush1.msra.mxu0 %v678
        %734 = vmatprep.subr.mxu0 0.0
        %735 = vmatpush1.msra.mxu0 %v679
        %736 = vmatprep.subr.mxu0 0.0
        %737 = vmatpush1.msra.mxu0 %v680
        %738 = vmatprep.subr.mxu0 0.0
        %739 = vmatpush1.msra.mxu0 %v688
        %740 = vmatprep.subr.mxu0 0.0
        %741 = vmatpush1.msra.mxu0 0.0
        %742 = vmatprep.subr.mxu0 0.0
        %743 = vmatpush1.msra.mxu0 0.0
        %744 = vmatprep.subr.mxu0 0.0
        %745 = vmatpush1.msra.mxu0 0.0
        %746 = vmatprep.subr.mxu0 0.0
        %747 = vmatpush1.msra.mxu0 0.0
        %748 = vmatprep.subr.mxu0 0.0
        %749 = vmatpush1.msra.mxu0 0.0
        %750 = vmatprep.subr.mxu0 0.0
        %751 = vmatpush1.msra.mxu0 0.0
        %752 = vmatprep.subr.mxu0 0.0
        %753 = vmatpush1.msra.mxu0 0.0
        %754 = vmatprep.mubr.f32.mxu0 %v684
        %755 = vmatmul.mubr.f32.gmra.mrb[0].mxu0 %v655
        %v756 = vpop.f32.mrb[0].mxu0
        %v757 = vadd.f32 0.0, %v756
        %v758 = vpop.f32.mrb[0].mxu0
        %759 = vdwg.mxu0
        %v760 = vadd.f32 %v427, %v757
        %s761 = sld [smem:[#allocation3 + $0x80]]
        %v762 = vstv %s761
        %v763 = vmul.f32 %v762, %v430
        %v764 = vmul.f32 %v762, %v431
        %s765 = sld [smem:[#allocation3 + $0x81]]
        %v766 = vstv %s765
        %v767 = vmul.f32 %v766, %v437
        %v768 = vmul.f32 %v766, %v438
        %v769 = vadd.f32 %v763, %v767
        %v770 = vadd.f32 %v764, %v768
        %s771 = sld [smem:[#allocation3 + $0x82]]
        %v772 = vstv %s771
        %v773 = vmul.f32 %v772, %v446
        %v774 = vmul.f32 %v772, %v447
        %v775 = vadd.f32 %v769, %v773
        %v776 = vadd.f32 %v770, %v774
        %s777 = sld [smem:[#allocation3 + $0x83]]
        %v778 = vstv %s777
        %v779 = vmul.f32 %v778, %v455
        %v780 = vmul.f32 %v778, %v456
        %v781 = vadd.f32 %v775, %v779
        %v782 = vadd.f32 %v776, %v780
        %s783 = sld [smem:[#allocation3 + $0x84]]
        %v784 = vstv %s783
        %v785 = vmul.f32 %v784, %v464
        %v786 = vmul.f32 %v784, %v465
        %v787 = vadd.f32 %v781, %v785
        %v788 = vadd.f32 %v782, %v786
        %s789 = sld [smem:[#allocation3 + $0x85]]
        %v790 = vstv %s789
        %v791 = vmul.f32 %v790, %v473
        %v792 = vmul.f32 %v790, %v474
        %v793 = vadd.f32 %v787, %v791
        %v794 = vadd.f32 %v788, %v792
        %s795 = sld [smem:[#allocation3 + $0x86]]
        %v796 = vstv %s795
        %v797 = vmul.f32 %v796, %v482
        %v798 = vmul.f32 %v796, %v483
        %v799 = vadd.f32 %v793, %v797
        %v800 = vadd.f32 %v794, %v798
        %s801 = sld [smem:[#allocation3 + $0x87]]
        %v802 = vstv %s801
        %v803 = vmul.f32 %v802, %v491
        %v804 = vmul.f32 %v802, %v492
        %v805 = vadd.f32 %v799, %v803
        %v806 = vadd.f32 %v800, %v804
        %s807 = sld [smem:[#allocation3 + $0x88]]
        %v808 = vstv %s807
        %v809 = vmul.f32 %v808, %v500
        %v810 = vmul.f32 %v808, %v501
        %v811 = vadd.f32 %v805, %v809
        %v812 = vadd.f32 %v806, %v810
        %s813 = sld [smem:[#allocation3 + $0x89]]
        %v814 = vstv %s813
        %v815 = vmul.f32 %v814, %v509
        %v816 = vmul.f32 %v814, %v510
        %v817 = vadd.f32 %v811, %v815
        %v818 = vadd.f32 %v812, %v816
        %s819 = sld [smem:[#allocation3 + $0x8a]]
        %v820 = vstv %s819
        %v821 = vmul.f32 %v820, %v518
        %v822 = vmul.f32 %v820, %v519
        %v823 = vadd.f32 %v817, %v821
        %v824 = vadd.f32 %v818, %v822
        %s825 = sld [smem:[#allocation3 + $0x8b]]
        %v826 = vstv %s825
        %v827 = vmul.f32 %v826, %v527
        %v828 = vmul.f32 %v826, %v528
        %v829 = vadd.f32 %v823, %v827
        %v830 = vadd.f32 %v824, %v828
        %s831 = sld [smem:[#allocation3 + $0x8c]]
        %v832 = vstv %s831
        %v833 = vmul.f32 %v832, %v536
        %v834 = vmul.f32 %v832, %v537
        %v835 = vadd.f32 %v829, %v833
        %v836 = vadd.f32 %v830, %v834
        %s837 = sld [smem:[#allocation3 + $0x8d]]
        %v838 = vstv %s837
        %v839 = vmul.f32 %v838, %v545
        %v840 = vmul.f32 %v838, %v546
        %v841 = vadd.f32 %v835, %v839
        %v842 = vadd.f32 %v836, %v840
        %s843 = sld [smem:[#allocation3 + $0x8e]]
        %v844 = vstv %s843
        %v845 = vmul.f32 %v844, %v554
        %v846 = vmul.f32 %v844, %v555
        %v847 = vadd.f32 %v841, %v845
        %v848 = vadd.f32 %v842, %v846
        %s849 = sld [smem:[#allocation3 + $0x8f]]
        %v850 = vstv %s849
        %v851 = vmul.f32 %v850, %v563
        %v852 = vmul.f32 %v850, %v564
        %v853 = vadd.f32 %v847, %v851
        %v854 = vadd.f32 %v848, %v852
        %s855 = sld [smem:[#allocation3 + $0x90]]
        %v856 = vstv %s855
        %v857 = vmul.f32 %v856, %v572
        %v858 = vmul.f32 %v856, %v573
        %v859 = vadd.f32 %v853, %v857
        %v860 = vadd.f32 %v854, %v858
        %s861 = sld [smem:[#allocation3 + $0x91]]
        %v862 = vstv %s861
        %v863 = vmul.f32 %v862, %v581
        %v864 = vmul.f32 %v862, %v582
        %v865 = vadd.f32 %v859, %v863
        %v866 = vadd.f32 %v860, %v864
        %s867 = sld [smem:[#allocation3 + $0x92]]
        %v868 = vstv %s867
        %v869 = vmul.f32 %v868, %v590
        %v870 = vmul.f32 %v868, %v591
        %v871 = vadd.f32 %v865, %v869
        %v872 = vadd.f32 %v866, %v870
        %s873 = sld [smem:[#allocation3 + $0x93]]
        %v874 = vstv %s873
        %v875 = vmul.f32 %v874, %v599
        %v876 = vmul.f32 %v874, %v600
        %v877 = vadd.f32 %v871, %v875
        %v878 = vadd.f32 %v872, %v876
        %s879 = sld [smem:[#allocation3 + $0x94]]
        %v880 = vstv %s879
        %v881 = vmul.f32 %v880, %v608
        %v882 = vmul.f32 %v880, %v609
        %v883 = vadd.f32 %v877, %v881
        %v884 = vadd.f32 %v878, %v882
        %s885 = sld [smem:[#allocation3 + $0x95]]
        %v886 = vstv %s885
        %v887 = vmul.f32 %v886, %v617
        %v888 = vmul.f32 %v886, %v618
        %v889 = vadd.f32 %v883, %v887
        %v890 = vadd.f32 %v884, %v888
        %s891 = sld [smem:[#allocation3 + $0x96]]
        %v892 = vstv %s891
        %v893 = vmul.f32 %v892, %v626
        %v894 = vmul.f32 %v892, %v627
        %v895 = vadd.f32 %v889, %v893
        %v896 = vadd.f32 %v890, %v894
        %s897 = sld [smem:[#allocation3 + $0x97]]
        %v898 = vstv %s897
        %v899 = vmul.f32 %v898, %v635
        %v900 = vmul.f32 %v898, %v636
        %v901 = vadd.f32 %v895, %v899
        %v902 = vadd.f32 %v896, %v900
        %s903 = sld [smem:[#allocation3 + $0x98]]
        %v904 = vstv %s903
        %v905 = vmul.f32 %v904, %v644
        %v906 = vmul.f32 %v904, %v645
        %v907 = vadd.f32 %v901, %v905
        %v908 = vadd.f32 %v902, %v906
        %s909 = sld [smem:[#allocation5 + $0x1]]
        %v910 = vstv %s909
        %v911 = vadd.f32 %v907, %v910
        %v912 = vadd.f32 %v908, %v910
        %v913 = vmul.f32 %v911, %v911
        %v914 = vmul.f32 %v912, %v912
        %s915 = scalar_lea.vmem %s3, 200
        %v916 = vld [vmem:[%s915] sm:$0xff]
        %v917 = vld [vmem:[%s915 + $0x8] sm:$0xff]
        %v918 = vld [vmem:[%s915 + $0x10] sm:$0xff]
        %v919 = vld [vmem:[%s915 + $0x18] sm:$0xff]
        %v920 = vld [vmem:[%s915 + $0x20] sm:$0xff]
        %v921 = vld [vmem:[%s915 + $0x28] sm:$0xff]
        %v922 = vld [vmem:[%s915 + $0x30] sm:$0xff]
        %v923 = vld [vmem:[%s915 + $0x38] sm:$0xff]
        %v924 = vld [vmem:[%s915 + $0x40] sm:$0xff]
        %v925 = vld [vmem:[%s915 + $0x48] sm:$0xff]
        %v926 = vld [vmem:[%s915 + $0x50] sm:$0xff]
        %v927 = vld [vmem:[%s915 + $0x58] sm:$0xff]
        %v928 = vld [vmem:[%s915 + $0x60] sm:$0xff]
        %v929 = vld [vmem:[%s915 + $0x68] sm:$0xff]
        %v930 = vld [vmem:[%s915 + $0x70] sm:$0xff]
        %v931 = vld [vmem:[%s915 + $0x78] sm:$0xff]
        %v932 = vld [vmem:[%s915 + $0x80] sm:$0xff]
        %v933 = vld [vmem:[%s915 + $0x88] sm:$0xff]
        %v934 = vld [vmem:[%s915 + $0x90] sm:$0xff]
        %v935 = vld [vmem:[%s915 + $0x98] sm:$0xff]
        %v936 = vld [vmem:[%s915 + $0xa0] sm:$0xff]
        %v937 = vld [vmem:[%s915 + $0xa8] sm:$0xff]
        %v938 = vld [vmem:[%s915 + $0xb0] sm:$0xff]
        %v939 = vld [vmem:[%s915 + $0xb8] sm:$0xff]
        %v940 = vld [vmem:[%s915 + $0xc0] sm:$0xf]
        %v942 = vsel %vm682, %v914, 0
        %v945 = vsel %vm686, %v940, 0
        %947 = vmatprep.subr.mxu0 0.0
        %948 = vmatpush1.msra.mxu0 %v916
        %949 = vmatprep.subr.mxu0 0.0
        %950 = vmatpush1.msra.mxu0 %v917
        %951 = vmatprep.subr.mxu0 0.0
        %952 = vmatpush1.msra.mxu0 %v918
        %953 = vmatprep.subr.mxu0 0.0
        %954 = vmatpush1.msra.mxu0 %v919
        %955 = vmatprep.subr.mxu0 0.0
        %956 = vmatpush1.msra.mxu0 %v920
        %957 = vmatprep.subr.mxu0 0.0
        %958 = vmatpush1.msra.mxu0 %v921
        %959 = vmatprep.subr.mxu0 0.0
        %960 = vmatpush1.msra.mxu0 %v922
        %961 = vmatprep.subr.mxu0 0.0
        %962 = vmatpush1.msra.mxu0 %v923
        %963 = vmatprep.subr.mxu0 0.0
        %964 = vmatpush1.msra.mxu0 %v924
        %965 = vmatprep.subr.mxu0 0.0
        %966 = vmatpush1.msra.mxu0 %v925
        %967 = vmatprep.subr.mxu0 0.0
        %968 = vmatpush1.msra.mxu0 %v926
        %969 = vmatprep.subr.mxu0 0.0
        %970 = vmatpush1.msra.mxu0 %v927
        %971 = vmatprep.subr.mxu0 0.0
        %972 = vmatpush1.msra.mxu0 %v928
        %973 = vmatprep.subr.mxu0 0.0
        %974 = vmatpush1.msra.mxu0 %v929
        %975 = vmatprep.subr.mxu0 0.0
        %976 = vmatpush1.msra.mxu0 %v930
        %977 = vmatprep.subr.mxu0 0.0
        %978 = vmatpush1.msra.mxu0 %v931
        %979 = vmatprep.subr.mxu0 0.0
        %980 = vmatpush1.msra.mxu0 %v932
        %981 = vmatprep.subr.mxu0 0.0
        %982 = vmatpush1.msra.mxu0 %v933
        %983 = vmatprep.subr.mxu0 0.0
        %984 = vmatpush1.msra.mxu0 %v934
        %985 = vmatprep.subr.mxu0 0.0
        %986 = vmatpush1.msra.mxu0 %v935
        %987 = vmatprep.subr.mxu0 0.0
        %988 = vmatpush1.msra.mxu0 %v936
        %989 = vmatprep.subr.mxu0 0.0
        %990 = vmatpush1.msra.mxu0 %v937
        %991 = vmatprep.subr.mxu0 0.0
        %992 = vmatpush1.msra.mxu0 %v938
        %993 = vmatprep.subr.mxu0 0.0
        %994 = vmatpush1.msra.mxu0 %v939
        %995 = vmatprep.subr.mxu0 0.0
        %996 = vmatpush1.msra.mxu0 %v945
        %997 = vmatprep.subr.mxu0 0.0
        %998 = vmatpush1.msra.mxu0 0.0
        %999 = vmatprep.subr.mxu0 0.0
        %1000 = vmatpush1.msra.mxu0 0.0
        %1001 = vmatprep.subr.mxu0 0.0
        %1002 = vmatpush1.msra.mxu0 0.0
        %1003 = vmatprep.subr.mxu0 0.0
        %1004 = vmatpush1.msra.mxu0 0.0
        %1005 = vmatprep.subr.mxu0 0.0
        %1006 = vmatpush1.msra.mxu0 0.0
        %1007 = vmatprep.subr.mxu0 0.0
        %1008 = vmatpush1.msra.mxu0 0.0
        %1009 = vmatprep.subr.mxu0 0.0
        %1010 = vmatpush1.msra.mxu0 0.0
        %1011 = vmatprep.mubr.f32.mxu0 %v942
        %1012 = vmatmul.mubr.f32.gmra.mrb[0].mxu0 %v913
        %v1013 = vpop.f32.mrb[0].mxu0
        %v1014 = vadd.f32 0.0, %v1013
        %v1015 = vpop.f32.mrb[0].mxu0
        %1016 = vdwg.mxu0
        %v1017 = vadd.f32 %v760, %v1014
        %s1018 = sld [smem:[#allocation3 + $0x100]]
        %v1019 = vstv %s1018
        %v1020 = vmul.f32 %v1019, %v430
        %v1021 = vmul.f32 %v1019, %v431
        %s1022 = sld [smem:[#allocation3 + $0x101]]
        %v1023 = vstv %s1022
        %v1024 = vmul.f32 %v1023, %v437
        %v1025 = vmul.f32 %v1023, %v438
        %v1026 = vadd.f32 %v1020, %v1024
        %v1027 = vadd.f32 %v1021, %v1025
        %s1028 = sld [smem:[#allocation3 + $0x102]]
        %v1029 = vstv %s1028
        %v1030 = vmul.f32 %v1029, %v446
        %v1031 = vmul.f32 %v1029, %v447
        %v1032 = vadd.f32 %v1026, %v1030
        %v1033 = vadd.f32 %v1027, %v1031
        %s1034 = sld [smem:[#allocation3 + $0x103]]
        %v1035 = vstv %s1034
        %v1036 = vmul.f32 %v1035, %v455
        %v1037 = vmul.f32 %v1035, %v456
        %v1038 = vadd.f32 %v1032, %v1036
        %v1039 = vadd.f32 %v1033, %v1037
        %s1040 = sld [smem:[#allocation3 + $0x104]]
        %v1041 = vstv %s1040
        %v1042 = vmul.f32 %v1041, %v464
        %v1043 = vmul.f32 %v1041, %v465
        %v1044 = vadd.f32 %v1038, %v1042
        %v1045 = vadd.f32 %v1039, %v1043
        %s1046 = sld [smem:[#allocation3 + $0x105]]
        %v1047 = vstv %s1046
        %v1048 = vmul.f32 %v1047, %v473
        %v1049 = vmul.f32 %v1047, %v474
        %v1050 = vadd.f32 %v1044, %v1048
        %v1051 = vadd.f32 %v1045, %v1049
        %s1052 = sld [smem:[#allocation3 + $0x106]]
        %v1053 = vstv %s1052
        %v1054 = vmul.f32 %v1053, %v482
        %v1055 = vmul.f32 %v1053, %v483
        %v1056 = vadd.f32 %v1050, %v1054
        %v1057 = vadd.f32 %v1051, %v1055
        %s1058 = sld [smem:[#allocation3 + $0x107]]
        %v1059 = vstv %s1058
        %v1060 = vmul.f32 %v1059, %v491
        %v1061 = vmul.f32 %v1059, %v492
        %v1062 = vadd.f32 %v1056, %v1060
        %v1063 = vadd.f32 %v1057, %v1061
        %s1064 = sld [smem:[#allocation3 + $0x108]]
        %v1065 = vstv %s1064
        %v1066 = vmul.f32 %v1065, %v500
        %v1067 = vmul.f32 %v1065, %v501
        %v1068 = vadd.f32 %v1062, %v1066
        %v1069 = vadd.f32 %v1063, %v1067
        %s1070 = sld [smem:[#allocation3 + $0x109]]
        %v1071 = vstv %s1070
        %v1072 = vmul.f32 %v1071, %v509
        %v1073 = vmul.f32 %v1071, %v510
        %v1074 = vadd.f32 %v1068, %v1072
        %v1075 = vadd.f32 %v1069, %v1073
        %s1076 = sld [smem:[#allocation3 + $0x10a]]
        %v1077 = vstv %s1076
        %v1078 = vmul.f32 %v1077, %v518
        %v1079 = vmul.f32 %v1077, %v519
        %v1080 = vadd.f32 %v1074, %v1078
        %v1081 = vadd.f32 %v1075, %v1079
        %s1082 = sld [smem:[#allocation3 + $0x10b]]
        %v1083 = vstv %s1082
        %v1084 = vmul.f32 %v1083, %v527
        %v1085 = vmul.f32 %v1083, %v528
        %v1086 = vadd.f32 %v1080, %v1084
        %v1087 = vadd.f32 %v1081, %v1085
        %s1088 = sld [smem:[#allocation3 + $0x10c]]
        %v1089 = vstv %s1088
        %v1090 = vmul.f32 %v1089, %v536
        %v1091 = vmul.f32 %v1089, %v537
        %v1092 = vadd.f32 %v1086, %v1090
        %v1093 = vadd.f32 %v1087, %v1091
        %s1094 = sld [smem:[#allocation3 + $0x10d]]
        %v1095 = vstv %s1094
        %v1096 = vmul.f32 %v1095, %v545
        %v1097 = vmul.f32 %v1095, %v546
        %v1098 = vadd.f32 %v1092, %v1096
        %v1099 = vadd.f32 %v1093, %v1097
        %s1100 = sld [smem:[#allocation3 + $0x10e]]
        %v1101 = vstv %s1100
        %v1102 = vmul.f32 %v1101, %v554
        %v1103 = vmul.f32 %v1101, %v555
        %v1104 = vadd.f32 %v1098, %v1102
        %v1105 = vadd.f32 %v1099, %v1103
        %s1106 = sld [smem:[#allocation3 + $0x10f]]
        %v1107 = vstv %s1106
        %v1108 = vmul.f32 %v1107, %v563
        %v1109 = vmul.f32 %v1107, %v564
        %v1110 = vadd.f32 %v1104, %v1108
        %v1111 = vadd.f32 %v1105, %v1109
        %s1112 = sld [smem:[#allocation3 + $0x110]]
        %v1113 = vstv %s1112
        %v1114 = vmul.f32 %v1113, %v572
        %v1115 = vmul.f32 %v1113, %v573
        %v1116 = vadd.f32 %v1110, %v1114
        %v1117 = vadd.f32 %v1111, %v1115
        %s1118 = sld [smem:[#allocation3 + $0x111]]
        %v1119 = vstv %s1118
        %v1120 = vmul.f32 %v1119, %v581
        %v1121 = vmul.f32 %v1119, %v582
        %v1122 = vadd.f32 %v1116, %v1120
        %v1123 = vadd.f32 %v1117, %v1121
        %s1124 = sld [smem:[#allocation3 + $0x112]]
        %v1125 = vstv %s1124
        %v1126 = vmul.f32 %v1125, %v590
        %v1127 = vmul.f32 %v1125, %v591
        %v1128 = vadd.f32 %v1122, %v1126
        %v1129 = vadd.f32 %v1123, %v1127
        %s1130 = sld [smem:[#allocation3 + $0x113]]
        %v1131 = vstv %s1130
        %v1132 = vmul.f32 %v1131, %v599
        %v1133 = vmul.f32 %v1131, %v600
        %v1134 = vadd.f32 %v1128, %v1132
        %v1135 = vadd.f32 %v1129, %v1133
        %s1136 = sld [smem:[#allocation3 + $0x114]]
        %v1137 = vstv %s1136
        %v1138 = vmul.f32 %v1137, %v608
        %v1139 = vmul.f32 %v1137, %v609
        %v1140 = vadd.f32 %v1134, %v1138
        %v1141 = vadd.f32 %v1135, %v1139
        %s1142 = sld [smem:[#allocation3 + $0x115]]
        %v1143 = vstv %s1142
        %v1144 = vmul.f32 %v1143, %v617
        %v1145 = vmul.f32 %v1143, %v618
        %v1146 = vadd.f32 %v1140, %v1144
        %v1147 = vadd.f32 %v1141, %v1145
        %s1148 = sld [smem:[#allocation3 + $0x116]]
        %v1149 = vstv %s1148
        %v1150 = vmul.f32 %v1149, %v626
        %v1151 = vmul.f32 %v1149, %v627
        %v1152 = vadd.f32 %v1146, %v1150
        %v1153 = vadd.f32 %v1147, %v1151
        %s1154 = sld [smem:[#allocation3 + $0x117]]
        %v1155 = vstv %s1154
        %v1156 = vmul.f32 %v1155, %v635
        %v1157 = vmul.f32 %v1155, %v636
        %v1158 = vadd.f32 %v1152, %v1156
        %v1159 = vadd.f32 %v1153, %v1157
        %s1160 = sld [smem:[#allocation3 + $0x118]]
        %v1161 = vstv %s1160
        %v1162 = vmul.f32 %v1161, %v644
        %v1163 = vmul.f32 %v1161, %v645
        %v1164 = vadd.f32 %v1158, %v1162
        %v1165 = vadd.f32 %v1159, %v1163
        %s1166 = sld [smem:[#allocation5 + $0x2]]
        %v1167 = vstv %s1166
        %v1168 = vadd.f32 %v1164, %v1167
        %v1169 = vadd.f32 %v1165, %v1167
        %v1170 = vmul.f32 %v1168, %v1168
        %v1171 = vmul.f32 %v1169, %v1169
        %s1172 = scalar_lea.vmem %s3, 400
        %v1173 = vld [vmem:[%s1172] sm:$0xff]
        %v1174 = vld [vmem:[%s1172 + $0x8] sm:$0xff]
        %v1175 = vld [vmem:[%s1172 + $0x10] sm:$0xff]
        %v1176 = vld [vmem:[%s1172 + $0x18] sm:$0xff]
        %v1177 = vld [vmem:[%s1172 + $0x20] sm:$0xff]
        %v1178 = vld [vmem:[%s1172 + $0x28] sm:$0xff]
        %v1179 = vld [vmem:[%s1172 + $0x30] sm:$0xff]
        %v1180 = vld [vmem:[%s1172 + $0x38] sm:$0xff]
        %v1181 = vld [vmem:[%s1172 + $0x40] sm:$0xff]
        %v1182 = vld [vmem:[%s1172 + $0x48] sm:$0xff]
        %v1183 = vld [vmem:[%s1172 + $0x50] sm:$0xff]
        %v1184 = vld [vmem:[%s1172 + $0x58] sm:$0xff]
        %v1185 = vld [vmem:[%s1172 + $0x60] sm:$0xff]
        %v1186 = vld [vmem:[%s1172 + $0x68] sm:$0xff]
        %v1187 = vld [vmem:[%s1172 + $0x70] sm:$0xff]
        %v1188 = vld [vmem:[%s1172 + $0x78] sm:$0xff]
        %v1189 = vld [vmem:[%s1172 + $0x80] sm:$0xff]
        %v1190 = vld [vmem:[%s1172 + $0x88] sm:$0xff]
        %v1191 = vld [vmem:[%s1172 + $0x90] sm:$0xff]
        %v1192 = vld [vmem:[%s1172 + $0x98] sm:$0xff]
        %v1193 = vld [vmem:[%s1172 + $0xa0] sm:$0xff]
        %v1194 = vld [vmem:[%s1172 + $0xa8] sm:$0xff]
        %v1195 = vld [vmem:[%s1172 + $0xb0] sm:$0xff]
        %v1196 = vld [vmem:[%s1172 + $0xb8] sm:$0xff]
        %v1197 = vld [vmem:[%s1172 + $0xc0] sm:$0xf]
        %v1199 = vsel %vm682, %v1171, 0
        %v1202 = vsel %vm686, %v1197, 0
        %1204 = vmatprep.subr.mxu0 0.0
        %1205 = vmatpush1.msra.mxu0 %v1173
        %1206 = vmatprep.subr.mxu0 0.0
        %1207 = vmatpush1.msra.mxu0 %v1174
        %1208 = vmatprep.subr.mxu0 0.0
        %1209 = vmatpush1.msra.mxu0 %v1175
        %1210 = vmatprep.subr.mxu0 0.0
        %1211 = vmatpush1.msra.mxu0 %v1176
        %1212 = vmatprep.subr.mxu0 0.0
        %1213 = vmatpush1.msra.mxu0 %v1177
        %1214 = vmatprep.subr.mxu0 0.0
        %1215 = vmatpush1.msra.mxu0 %v1178
        %1216 = vmatprep.subr.mxu0 0.0
        %1217 = vmatpush1.msra.mxu0 %v1179
        %1218 = vmatprep.subr.mxu0 0.0
        %1219 = vmatpush1.msra.mxu0 %v1180
        %1220 = vmatprep.subr.mxu0 0.0
        %1221 = vmatpush1.msra.mxu0 %v1181
        %1222 = vmatprep.subr.mxu0 0.0
        %1223 = vmatpush1.msra.mxu0 %v1182
        %1224 = vmatprep.subr.mxu0 0.0
        %1225 = vmatpush1.msra.mxu0 %v1183
        %1226 = vmatprep.subr.mxu0 0.0
        %1227 = vmatpush1.msra.mxu0 %v1184
        %1228 = vmatprep.subr.mxu0 0.0
        %1229 = vmatpush1.msra.mxu0 %v1185
        %1230 = vmatprep.subr.mxu0 0.0
        %1231 = vmatpush1.msra.mxu0 %v1186
        %1232 = vmatprep.subr.mxu0 0.0
        %1233 = vmatpush1.msra.mxu0 %v1187
        %1234 = vmatprep.subr.mxu0 0.0
        %1235 = vmatpush1.msra.mxu0 %v1188
        %1236 = vmatprep.subr.mxu0 0.0
        %1237 = vmatpush1.msra.mxu0 %v1189
        %1238 = vmatprep.subr.mxu0 0.0
        %1239 = vmatpush1.msra.mxu0 %v1190
        %1240 = vmatprep.subr.mxu0 0.0
        %1241 = vmatpush1.msra.mxu0 %v1191
        %1242 = vmatprep.subr.mxu0 0.0
        %1243 = vmatpush1.msra.mxu0 %v1192
        %1244 = vmatprep.subr.mxu0 0.0
        %1245 = vmatpush1.msra.mxu0 %v1193
        %1246 = vmatprep.subr.mxu0 0.0
        %1247 = vmatpush1.msra.mxu0 %v1194
        %1248 = vmatprep.subr.mxu0 0.0
        %1249 = vmatpush1.msra.mxu0 %v1195
        %1250 = vmatprep.subr.mxu0 0.0
        %1251 = vmatpush1.msra.mxu0 %v1196
        %1252 = vmatprep.subr.mxu0 0.0
        %1253 = vmatpush1.msra.mxu0 %v1202
        %1254 = vmatprep.subr.mxu0 0.0
        %1255 = vmatpush1.msra.mxu0 0.0
        %1256 = vmatprep.subr.mxu0 0.0
        %1257 = vmatpush1.msra.mxu0 0.0
        %1258 = vmatprep.subr.mxu0 0.0
        %1259 = vmatpush1.msra.mxu0 0.0
        %1260 = vmatprep.subr.mxu0 0.0
        %1261 = vmatpush1.msra.mxu0 0.0
        %1262 = vmatprep.subr.mxu0 0.0
        %1263 = vmatpush1.msra.mxu0 0.0
        %1264 = vmatprep.subr.mxu0 0.0
        %1265 = vmatpush1.msra.mxu0 0.0
        %1266 = vmatprep.subr.mxu0 0.0
        %1267 = vmatpush1.msra.mxu0 0.0
        %1268 = vmatprep.mubr.f32.mxu0 %v1199
        %1269 = vmatmul.mubr.f32.gmra.mrb[0].mxu0 %v1170
        %v1270 = vpop.f32.mrb[0].mxu0
        %v1271 = vadd.f32 0.0, %v1270
        %v1272 = vpop.f32.mrb[0].mxu0
        %1273 = vdwg.mxu0
        %v1274 = vadd.f32 %v1017, %v1271
        %s1275 = sld [smem:[#allocation3 + $0x180]]
        %v1276 = vstv %s1275
        %v1277 = vmul.f32 %v1276, %v430
        %v1278 = vmul.f32 %v1276, %v431
        %s1279 = sld [smem:[#allocation3 + $0x181]]
        %v1280 = vstv %s1279
        %v1281 = vmul.f32 %v1280, %v437
        %v1282 = vmul.f32 %v1280, %v438
        %v1283 = vadd.f32 %v1277, %v1281
        %v1284 = vadd.f32 %v1278, %v1282
        %s1285 = sld [smem:[#allocation3 + $0x182]]
        %v1286 = vstv %s1285
        %v1287 = vmul.f32 %v1286, %v446
        %v1288 = vmul.f32 %v1286, %v447
        %v1289 = vadd.f32 %v1283, %v1287
        %v1290 = vadd.f32 %v1284, %v1288
        %s1291 = sld [smem:[#allocation3 + $0x183]]
        %v1292 = vstv %s1291
        %v1293 = vmul.f32 %v1292, %v455
        %v1294 = vmul.f32 %v1292, %v456
        %v1295 = vadd.f32 %v1289, %v1293
        %v1296 = vadd.f32 %v1290, %v1294
        %s1297 = sld [smem:[#allocation3 + $0x184]]
        %v1298 = vstv %s1297
        %v1299 = vmul.f32 %v1298, %v464
        %v1300 = vmul.f32 %v1298, %v465
        %v1301 = vadd.f32 %v1295, %v1299
        %v1302 = vadd.f32 %v1296, %v1300
        %s1303 = sld [smem:[#allocation3 + $0x185]]
        %v1304 = vstv %s1303
        %v1305 = vmul.f32 %v1304, %v473
        %v1306 = vmul.f32 %v1304, %v474
        %v1307 = vadd.f32 %v1301, %v1305
        %v1308 = vadd.f32 %v1302, %v1306
        %s1309 = sld [smem:[#allocation3 + $0x186]]
        %v1310 = vstv %s1309
        %v1311 = vmul.f32 %v1310, %v482
        %v1312 = vmul.f32 %v1310, %v483
        %v1313 = vadd.f32 %v1307, %v1311
        %v1314 = vadd.f32 %v1308, %v1312
        %s1315 = sld [smem:[#allocation3 + $0x187]]
        %v1316 = vstv %s1315
        %v1317 = vmul.f32 %v1316, %v491
        %v1318 = vmul.f32 %v1316, %v492
        %v1319 = vadd.f32 %v1313, %v1317
        %v1320 = vadd.f32 %v1314, %v1318
        %s1321 = sld [smem:[#allocation3 + $0x188]]
        %v1322 = vstv %s1321
        %v1323 = vmul.f32 %v1322, %v500
        %v1324 = vmul.f32 %v1322, %v501
        %v1325 = vadd.f32 %v1319, %v1323
        %v1326 = vadd.f32 %v1320, %v1324
        %s1327 = sld [smem:[#allocation3 + $0x189]]
        %v1328 = vstv %s1327
        %v1329 = vmul.f32 %v1328, %v509
        %v1330 = vmul.f32 %v1328, %v510
        %v1331 = vadd.f32 %v1325, %v1329
        %v1332 = vadd.f32 %v1326, %v1330
        %s1333 = sld [smem:[#allocation3 + $0x18a]]
        %v1334 = vstv %s1333
        %v1335 = vmul.f32 %v1334, %v518
        %v1336 = vmul.f32 %v1334, %v519
        %v1337 = vadd.f32 %v1331, %v1335
        %v1338 = vadd.f32 %v1332, %v1336
        %s1339 = sld [smem:[#allocation3 + $0x18b]]
        %v1340 = vstv %s1339
        %v1341 = vmul.f32 %v1340, %v527
        %v1342 = vmul.f32 %v1340, %v528
        %v1343 = vadd.f32 %v1337, %v1341
        %v1344 = vadd.f32 %v1338, %v1342
        %s1345 = sld [smem:[#allocation3 + $0x18c]]
        %v1346 = vstv %s1345
        %v1347 = vmul.f32 %v1346, %v536
        %v1348 = vmul.f32 %v1346, %v537
        %v1349 = vadd.f32 %v1343, %v1347
        %v1350 = vadd.f32 %v1344, %v1348
        %s1351 = sld [smem:[#allocation3 + $0x18d]]
        %v1352 = vstv %s1351
        %v1353 = vmul.f32 %v1352, %v545
        %v1354 = vmul.f32 %v1352, %v546
        %v1355 = vadd.f32 %v1349, %v1353
        %v1356 = vadd.f32 %v1350, %v1354
        %s1357 = sld [smem:[#allocation3 + $0x18e]]
        %v1358 = vstv %s1357
        %v1359 = vmul.f32 %v1358, %v554
        %v1360 = vmul.f32 %v1358, %v555
        %v1361 = vadd.f32 %v1355, %v1359
        %v1362 = vadd.f32 %v1356, %v1360
        %s1363 = sld [smem:[#allocation3 + $0x18f]]
        %v1364 = vstv %s1363
        %v1365 = vmul.f32 %v1364, %v563
        %v1366 = vmul.f32 %v1364, %v564
        %v1367 = vadd.f32 %v1361, %v1365
        %v1368 = vadd.f32 %v1362, %v1366
        %s1369 = sld [smem:[#allocation3 + $0x190]]
        %v1370 = vstv %s1369
        %v1371 = vmul.f32 %v1370, %v572
        %v1372 = vmul.f32 %v1370, %v573
        %v1373 = vadd.f32 %v1367, %v1371
        %v1374 = vadd.f32 %v1368, %v1372
        %s1375 = sld [smem:[#allocation3 + $0x191]]
        %v1376 = vstv %s1375
        %v1377 = vmul.f32 %v1376, %v581
        %v1378 = vmul.f32 %v1376, %v582
        %v1379 = vadd.f32 %v1373, %v1377
        %v1380 = vadd.f32 %v1374, %v1378
        %s1381 = sld [smem:[#allocation3 + $0x192]]
        %v1382 = vstv %s1381
        %v1383 = vmul.f32 %v1382, %v590
        %v1384 = vmul.f32 %v1382, %v591
        %v1385 = vadd.f32 %v1379, %v1383
        %v1386 = vadd.f32 %v1380, %v1384
        %s1387 = sld [smem:[#allocation3 + $0x193]]
        %v1388 = vstv %s1387
        %v1389 = vmul.f32 %v1388, %v599
        %v1390 = vmul.f32 %v1388, %v600
        %v1391 = vadd.f32 %v1385, %v1389
        %v1392 = vadd.f32 %v1386, %v1390
        %s1393 = sld [smem:[#allocation3 + $0x194]]
        %v1394 = vstv %s1393
        %v1395 = vmul.f32 %v1394, %v608
        %v1396 = vmul.f32 %v1394, %v609
        %v1397 = vadd.f32 %v1391, %v1395
        %v1398 = vadd.f32 %v1392, %v1396
        %s1399 = sld [smem:[#allocation3 + $0x195]]
        %v1400 = vstv %s1399
        %v1401 = vmul.f32 %v1400, %v617
        %v1402 = vmul.f32 %v1400, %v618
        %v1403 = vadd.f32 %v1397, %v1401
        %v1404 = vadd.f32 %v1398, %v1402
        %s1405 = sld [smem:[#allocation3 + $0x196]]
        %v1406 = vstv %s1405
        %v1407 = vmul.f32 %v1406, %v626
        %v1408 = vmul.f32 %v1406, %v627
        %v1409 = vadd.f32 %v1403, %v1407
        %v1410 = vadd.f32 %v1404, %v1408
        %s1411 = sld [smem:[#allocation3 + $0x197]]
        %v1412 = vstv %s1411
        %v1413 = vmul.f32 %v1412, %v635
        %v1414 = vmul.f32 %v1412, %v636
        %v1415 = vadd.f32 %v1409, %v1413
        %v1416 = vadd.f32 %v1410, %v1414
        %s1417 = sld [smem:[#allocation3 + $0x198]]
        %v1418 = vstv %s1417
        %v1419 = vmul.f32 %v1418, %v644
        %v1420 = vmul.f32 %v1418, %v645
        %v1421 = vadd.f32 %v1415, %v1419
        %v1422 = vadd.f32 %v1416, %v1420
        %s1423 = sld [smem:[#allocation5 + $0x3]]
        %v1424 = vstv %s1423
        %v1425 = vadd.f32 %v1421, %v1424
        %v1426 = vadd.f32 %v1422, %v1424
        %v1427 = vmul.f32 %v1425, %v1425
        %v1428 = vmul.f32 %v1426, %v1426
        %s1429 = scalar_lea.vmem %s3, 600
        %v1430 = vld [vmem:[%s1429] sm:$0xff]
        %v1431 = vld [vmem:[%s1429 + $0x8] sm:$0xff]
        %v1432 = vld [vmem:[%s1429 + $0x10] sm:$0xff]
        %v1433 = vld [vmem:[%s1429 + $0x18] sm:$0xff]
        %v1434 = vld [vmem:[%s1429 + $0x20] sm:$0xff]
        %v1435 = vld [vmem:[%s1429 + $0x28] sm:$0xff]
        %v1436 = vld [vmem:[%s1429 + $0x30] sm:$0xff]
        %v1437 = vld [vmem:[%s1429 + $0x38] sm:$0xff]
        %v1438 = vld [vmem:[%s1429 + $0x40] sm:$0xff]
        %v1439 = vld [vmem:[%s1429 + $0x48] sm:$0xff]
        %v1440 = vld [vmem:[%s1429 + $0x50] sm:$0xff]
        %v1441 = vld [vmem:[%s1429 + $0x58] sm:$0xff]
        %v1442 = vld [vmem:[%s1429 + $0x60] sm:$0xff]
        %v1443 = vld [vmem:[%s1429 + $0x68] sm:$0xff]
        %v1444 = vld [vmem:[%s1429 + $0x70] sm:$0xff]
        %v1445 = vld [vmem:[%s1429 + $0x78] sm:$0xff]
        %v1446 = vld [vmem:[%s1429 + $0x80] sm:$0xff]
        %v1447 = vld [vmem:[%s1429 + $0x88] sm:$0xff]
        %v1448 = vld [vmem:[%s1429 + $0x90] sm:$0xff]
        %v1449 = vld [vmem:[%s1429 + $0x98] sm:$0xff]
        %v1450 = vld [vmem:[%s1429 + $0xa0] sm:$0xff]
        %v1451 = vld [vmem:[%s1429 + $0xa8] sm:$0xff]
        %v1452 = vld [vmem:[%s1429 + $0xb0] sm:$0xff]
        %v1453 = vld [vmem:[%s1429 + $0xb8] sm:$0xff]
        %v1454 = vld [vmem:[%s1429 + $0xc0] sm:$0xf]
        %v1456 = vsel %vm682, %v1428, 0
        %v1459 = vsel %vm686, %v1454, 0
        %1461 = vmatprep.subr.mxu0 0.0
        %1462 = vmatpush1.msra.mxu0 %v1430
        %1463 = vmatprep.subr.mxu0 0.0
        %1464 = vmatpush1.msra.mxu0 %v1431
        %1465 = vmatprep.subr.mxu0 0.0
        %1466 = vmatpush1.msra.mxu0 %v1432
        %1467 = vmatprep.subr.mxu0 0.0
        %1468 = vmatpush1.msra.mxu0 %v1433
        %1469 = vmatprep.subr.mxu0 0.0
        %1470 = vmatpush1.msra.mxu0 %v1434
        %1471 = vmatprep.subr.mxu0 0.0
        %1472 = vmatpush1.msra.mxu0 %v1435
        %1473 = vmatprep.subr.mxu0 0.0
        %1474 = vmatpush1.msra.mxu0 %v1436
        %1475 = vmatprep.subr.mxu0 0.0
        %1476 = vmatpush1.msra.mxu0 %v1437
        %1477 = vmatprep.subr.mxu0 0.0
        %1478 = vmatpush1.msra.mxu0 %v1438
        %1479 = vmatprep.subr.mxu0 0.0
        %1480 = vmatpush1.msra.mxu0 %v1439
        %1481 = vmatprep.subr.mxu0 0.0
        %1482 = vmatpush1.msra.mxu0 %v1440
        %1483 = vmatprep.subr.mxu0 0.0
        %1484 = vmatpush1.msra.mxu0 %v1441
        %1485 = vmatprep.subr.mxu0 0.0
        %1486 = vmatpush1.msra.mxu0 %v1442
        %1487 = vmatprep.subr.mxu0 0.0
        %1488 = vmatpush1.msra.mxu0 %v1443
        %1489 = vmatprep.subr.mxu0 0.0
        %1490 = vmatpush1.msra.mxu0 %v1444
        %1491 = vmatprep.subr.mxu0 0.0
        %1492 = vmatpush1.msra.mxu0 %v1445
        %1493 = vmatprep.subr.mxu0 0.0
        %1494 = vmatpush1.msra.mxu0 %v1446
        %1495 = vmatprep.subr.mxu0 0.0
        %1496 = vmatpush1.msra.mxu0 %v1447
        %1497 = vmatprep.subr.mxu0 0.0
        %1498 = vmatpush1.msra.mxu0 %v1448
        %1499 = vmatprep.subr.mxu0 0.0
        %1500 = vmatpush1.msra.mxu0 %v1449
        %1501 = vmatprep.subr.mxu0 0.0
        %1502 = vmatpush1.msra.mxu0 %v1450
        %1503 = vmatprep.subr.mxu0 0.0
        %1504 = vmatpush1.msra.mxu0 %v1451
        %1505 = vmatprep.subr.mxu0 0.0
        %1506 = vmatpush1.msra.mxu0 %v1452
        %1507 = vmatprep.subr.mxu0 0.0
        %1508 = vmatpush1.msra.mxu0 %v1453
        %1509 = vmatprep.subr.mxu0 0.0
        %1510 = vmatpush1.msra.mxu0 %v1459
        %1511 = vmatprep.subr.mxu0 0.0
        %1512 = vmatpush1.msra.mxu0 0.0
        %1513 = vmatprep.subr.mxu0 0.0
        %1514 = vmatpush1.msra.mxu0 0.0
        %1515 = vmatprep.subr.mxu0 0.0
        %1516 = vmatpush1.msra.mxu0 0.0
        %1517 = vmatprep.subr.mxu0 0.0
        %1518 = vmatpush1.msra.mxu0 0.0
        %1519 = vmatprep.subr.mxu0 0.0
        %1520 = vmatpush1.msra.mxu0 0.0
        %1521 = vmatprep.subr.mxu0 0.0
        %1522 = vmatpush1.msra.mxu0 0.0
        %1523 = vmatprep.subr.mxu0 0.0
        %1524 = vmatpush1.msra.mxu0 0.0
        %1525 = vmatprep.mubr.f32.mxu0 %v1456
        %1526 = vmatmul.mubr.f32.gmra.mrb[0].mxu0 %v1427
        %v1527 = vpop.f32.mrb[0].mxu0
        %v1528 = vadd.f32 0.0, %v1527
        %v1529 = vpop.f32.mrb[0].mxu0
        %1530 = vdwg.mxu0
        %v1531 = vadd.f32 %v1274, %v1528
        %s1532 = sld [smem:[#allocation3 + $0x200]]
        %v1533 = vstv %s1532
        %v1534 = vmul.f32 %v1533, %v430
        %v1535 = vmul.f32 %v1533, %v431
        %s1536 = sld [smem:[#allocation3 + $0x201]]
        %v1537 = vstv %s1536
        %v1538 = vmul.f32 %v1537, %v437
        %v1539 = vmul.f32 %v1537, %v438
        %v1540 = vadd.f32 %v1534, %v1538
        %v1541 = vadd.f32 %v1535, %v1539
        %s1542 = sld [smem:[#allocation3 + $0x202]]
        %v1543 = vstv %s1542
        %v1544 = vmul.f32 %v1543, %v446
        %v1545 = vmul.f32 %v1543, %v447
        %v1546 = vadd.f32 %v1540, %v1544
        %v1547 = vadd.f32 %v1541, %v1545
        %s1548 = sld [smem:[#allocation3 + $0x203]]
        %v1549 = vstv %s1548
        %v1550 = vmul.f32 %v1549, %v455
        %v1551 = vmul.f32 %v1549, %v456
        %v1552 = vadd.f32 %v1546, %v1550
        %v1553 = vadd.f32 %v1547, %v1551
        %s1554 = sld [smem:[#allocation3 + $0x204]]
        %v1555 = vstv %s1554
        %v1556 = vmul.f32 %v1555, %v464
        %v1557 = vmul.f32 %v1555, %v465
        %v1558 = vadd.f32 %v1552, %v1556
        %v1559 = vadd.f32 %v1553, %v1557
        %s1560 = sld [smem:[#allocation3 + $0x205]]
        %v1561 = vstv %s1560
        %v1562 = vmul.f32 %v1561, %v473
        %v1563 = vmul.f32 %v1561, %v474
        %v1564 = vadd.f32 %v1558, %v1562
        %v1565 = vadd.f32 %v1559, %v1563
        %s1566 = sld [smem:[#allocation3 + $0x206]]
        %v1567 = vstv %s1566
        %v1568 = vmul.f32 %v1567, %v482
        %v1569 = vmul.f32 %v1567, %v483
        %v1570 = vadd.f32 %v1564, %v1568
        %v1571 = vadd.f32 %v1565, %v1569
        %s1572 = sld [smem:[#allocation3 + $0x207]]
        %v1573 = vstv %s1572
        %v1574 = vmul.f32 %v1573, %v491
        %v1575 = vmul.f32 %v1573, %v492
        %v1576 = vadd.f32 %v1570, %v1574
        %v1577 = vadd.f32 %v1571, %v1575
        %s1578 = sld [smem:[#allocation3 + $0x208]]
        %v1579 = vstv %s1578
        %v1580 = vmul.f32 %v1579, %v500
        %v1581 = vmul.f32 %v1579, %v501
        %v1582 = vadd.f32 %v1576, %v1580
        %v1583 = vadd.f32 %v1577, %v1581
        %s1584 = sld [smem:[#allocation3 + $0x209]]
        %v1585 = vstv %s1584
        %v1586 = vmul.f32 %v1585, %v509
        %v1587 = vmul.f32 %v1585, %v510
        %v1588 = vadd.f32 %v1582, %v1586
        %v1589 = vadd.f32 %v1583, %v1587
        %s1590 = sld [smem:[#allocation3 + $0x20a]]
        %v1591 = vstv %s1590
        %v1592 = vmul.f32 %v1591, %v518
        %v1593 = vmul.f32 %v1591, %v519
        %v1594 = vadd.f32 %v1588, %v1592
        %v1595 = vadd.f32 %v1589, %v1593
        %s1596 = sld [smem:[#allocation3 + $0x20b]]
        %v1597 = vstv %s1596
        %v1598 = vmul.f32 %v1597, %v527
        %v1599 = vmul.f32 %v1597, %v528
        %v1600 = vadd.f32 %v1594, %v1598
        %v1601 = vadd.f32 %v1595, %v1599
        %s1602 = sld [smem:[#allocation3 + $0x20c]]
        %v1603 = vstv %s1602
        %v1604 = vmul.f32 %v1603, %v536
        %v1605 = vmul.f32 %v1603, %v537
        %v1606 = vadd.f32 %v1600, %v1604
        %v1607 = vadd.f32 %v1601, %v1605
        %s1608 = sld [smem:[#allocation3 + $0x20d]]
        %v1609 = vstv %s1608
        %v1610 = vmul.f32 %v1609, %v545
        %v1611 = vmul.f32 %v1609, %v546
        %v1612 = vadd.f32 %v1606, %v1610
        %v1613 = vadd.f32 %v1607, %v1611
        %s1614 = sld [smem:[#allocation3 + $0x20e]]
        %v1615 = vstv %s1614
        %v1616 = vmul.f32 %v1615, %v554
        %v1617 = vmul.f32 %v1615, %v555
        %v1618 = vadd.f32 %v1612, %v1616
        %v1619 = vadd.f32 %v1613, %v1617
        %s1620 = sld [smem:[#allocation3 + $0x20f]]
        %v1621 = vstv %s1620
        %v1622 = vmul.f32 %v1621, %v563
        %v1623 = vmul.f32 %v1621, %v564
        %v1624 = vadd.f32 %v1618, %v1622
        %v1625 = vadd.f32 %v1619, %v1623
        %s1626 = sld [smem:[#allocation3 + $0x210]]
        %v1627 = vstv %s1626
        %v1628 = vmul.f32 %v1627, %v572
        %v1629 = vmul.f32 %v1627, %v573
        %v1630 = vadd.f32 %v1624, %v1628
        %v1631 = vadd.f32 %v1625, %v1629
        %s1632 = sld [smem:[#allocation3 + $0x211]]
        %v1633 = vstv %s1632
        %v1634 = vmul.f32 %v1633, %v581
        %v1635 = vmul.f32 %v1633, %v582
        %v1636 = vadd.f32 %v1630, %v1634
        %v1637 = vadd.f32 %v1631, %v1635
        %s1638 = sld [smem:[#allocation3 + $0x212]]
        %v1639 = vstv %s1638
        %v1640 = vmul.f32 %v1639, %v590
        %v1641 = vmul.f32 %v1639, %v591
        %v1642 = vadd.f32 %v1636, %v1640
        %v1643 = vadd.f32 %v1637, %v1641
        %s1644 = sld [smem:[#allocation3 + $0x213]]
        %v1645 = vstv %s1644
        %v1646 = vmul.f32 %v1645, %v599
        %v1647 = vmul.f32 %v1645, %v600
        %v1648 = vadd.f32 %v1642, %v1646
        %v1649 = vadd.f32 %v1643, %v1647
        %s1650 = sld [smem:[#allocation3 + $0x214]]
        %v1651 = vstv %s1650
        %v1652 = vmul.f32 %v1651, %v608
        %v1653 = vmul.f32 %v1651, %v609
        %v1654 = vadd.f32 %v1648, %v1652
        %v1655 = vadd.f32 %v1649, %v1653
        %s1656 = sld [smem:[#allocation3 + $0x215]]
        %v1657 = vstv %s1656
        %v1658 = vmul.f32 %v1657, %v617
        %v1659 = vmul.f32 %v1657, %v618
        %v1660 = vadd.f32 %v1654, %v1658
        %v1661 = vadd.f32 %v1655, %v1659
        %s1662 = sld [smem:[#allocation3 + $0x216]]
        %v1663 = vstv %s1662
        %v1664 = vmul.f32 %v1663, %v626
        %v1665 = vmul.f32 %v1663, %v627
        %v1666 = vadd.f32 %v1660, %v1664
        %v1667 = vadd.f32 %v1661, %v1665
        %s1668 = sld [smem:[#allocation3 + $0x217]]
        %v1669 = vstv %s1668
        %v1670 = vmul.f32 %v1669, %v635
        %v1671 = vmul.f32 %v1669, %v636
        %v1672 = vadd.f32 %v1666, %v1670
        %v1673 = vadd.f32 %v1667, %v1671
        %s1674 = sld [smem:[#allocation3 + $0x218]]
        %v1675 = vstv %s1674
        %v1676 = vmul.f32 %v1675, %v644
        %v1677 = vmul.f32 %v1675, %v645
        %v1678 = vadd.f32 %v1672, %v1676
        %v1679 = vadd.f32 %v1673, %v1677
        %s1680 = sld [smem:[#allocation5 + $0x4]]
        %v1681 = vstv %s1680
        %v1682 = vadd.f32 %v1678, %v1681
        %v1683 = vadd.f32 %v1679, %v1681
        %v1684 = vmul.f32 %v1682, %v1682
        %v1685 = vmul.f32 %v1683, %v1683
        %s1686 = scalar_lea.vmem %s3, 800
        %v1687 = vld [vmem:[%s1686] sm:$0xff]
        %v1688 = vld [vmem:[%s1686 + $0x8] sm:$0xff]
        %v1689 = vld [vmem:[%s1686 + $0x10] sm:$0xff]
        %v1690 = vld [vmem:[%s1686 + $0x18] sm:$0xff]
        %v1691 = vld [vmem:[%s1686 + $0x20] sm:$0xff]
        %v1692 = vld [vmem:[%s1686 + $0x28] sm:$0xff]
        %v1693 = vld [vmem:[%s1686 + $0x30] sm:$0xff]
        %v1694 = vld [vmem:[%s1686 + $0x38] sm:$0xff]
        %v1695 = vld [vmem:[%s1686 + $0x40] sm:$0xff]
        %v1696 = vld [vmem:[%s1686 + $0x48] sm:$0xff]
        %v1697 = vld [vmem:[%s1686 + $0x50] sm:$0xff]
        %v1698 = vld [vmem:[%s1686 + $0x58] sm:$0xff]
        %v1699 = vld [vmem:[%s1686 + $0x60] sm:$0xff]
        %v1700 = vld [vmem:[%s1686 + $0x68] sm:$0xff]
        %v1701 = vld [vmem:[%s1686 + $0x70] sm:$0xff]
        %v1702 = vld [vmem:[%s1686 + $0x78] sm:$0xff]
        %v1703 = vld [vmem:[%s1686 + $0x80] sm:$0xff]
        %v1704 = vld [vmem:[%s1686 + $0x88] sm:$0xff]
        %v1705 = vld [vmem:[%s1686 + $0x90] sm:$0xff]
        %v1706 = vld [vmem:[%s1686 + $0x98] sm:$0xff]
        %v1707 = vld [vmem:[%s1686 + $0xa0] sm:$0xff]
        %v1708 = vld [vmem:[%s1686 + $0xa8] sm:$0xff]
        %v1709 = vld [vmem:[%s1686 + $0xb0] sm:$0xff]
        %v1710 = vld [vmem:[%s1686 + $0xb8] sm:$0xff]
        %v1711 = vld [vmem:[%s1686 + $0xc0] sm:$0xf]
        %v1713 = vsel %vm682, %v1685, 0
        %v1716 = vsel %vm686, %v1711, 0
        %1718 = vmatprep.subr.mxu0 0.0
        %1719 = vmatpush1.msra.mxu0 %v1687
        %1720 = vmatprep.subr.mxu0 0.0
        %1721 = vmatpush1.msra.mxu0 %v1688
        %1722 = vmatprep.subr.mxu0 0.0
        %1723 = vmatpush1.msra.mxu0 %v1689
        %1724 = vmatprep.subr.mxu0 0.0
        %1725 = vmatpush1.msra.mxu0 %v1690
        %1726 = vmatprep.subr.mxu0 0.0
        %1727 = vmatpush1.msra.mxu0 %v1691
        %1728 = vmatprep.subr.mxu0 0.0
        %1729 = vmatpush1.msra.mxu0 %v1692
        %1730 = vmatprep.subr.mxu0 0.0
        %1731 = vmatpush1.msra.mxu0 %v1693
        %1732 = vmatprep.subr.mxu0 0.0
        %1733 = vmatpush1.msra.mxu0 %v1694
        %1734 = vmatprep.subr.mxu0 0.0
        %1735 = vmatpush1.msra.mxu0 %v1695
        %1736 = vmatprep.subr.mxu0 0.0
        %1737 = vmatpush1.msra.mxu0 %v1696
        %1738 = vmatprep.subr.mxu0 0.0
        %1739 = vmatpush1.msra.mxu0 %v1697
        %1740 = vmatprep.subr.mxu0 0.0
        %1741 = vmatpush1.msra.mxu0 %v1698
        %1742 = vmatprep.subr.mxu0 0.0
        %1743 = vmatpush1.msra.mxu0 %v1699
        %1744 = vmatprep.subr.mxu0 0.0
        %1745 = vmatpush1.msra.mxu0 %v1700
        %1746 = vmatprep.subr.mxu0 0.0
        %1747 = vmatpush1.msra.mxu0 %v1701
        %1748 = vmatprep.subr.mxu0 0.0
        %1749 = vmatpush1.msra.mxu0 %v1702
        %1750 = vmatprep.subr.mxu0 0.0
        %1751 = vmatpush1.msra.mxu0 %v1703
        %1752 = vmatprep.subr.mxu0 0.0
        %1753 = vmatpush1.msra.mxu0 %v1704
        %1754 = vmatprep.subr.mxu0 0.0
        %1755 = vmatpush1.msra.mxu0 %v1705
        %1756 = vmatprep.subr.mxu0 0.0
        %1757 = vmatpush1.msra.mxu0 %v1706
        %1758 = vmatprep.subr.mxu0 0.0
        %1759 = vmatpush1.msra.mxu0 %v1707
        %1760 = vmatprep.subr.mxu0 0.0
        %1761 = vmatpush1.msra.mxu0 %v1708
        %1762 = vmatprep.subr.mxu0 0.0
        %1763 = vmatpush1.msra.mxu0 %v1709
        %1764 = vmatprep.subr.mxu0 0.0
        %1765 = vmatpush1.msra.mxu0 %v1710
        %1766 = vmatprep.subr.mxu0 0.0
        %1767 = vmatpush1.msra.mxu0 %v1716
        %1768 = vmatprep.subr.mxu0 0.0
        %1769 = vmatpush1.msra.mxu0 0.0
        %1770 = vmatprep.subr.mxu0 0.0
        %1771 = vmatpush1.msra.mxu0 0.0
        %1772 = vmatprep.subr.mxu0 0.0
        %1773 = vmatpush1.msra.mxu0 0.0
        %1774 = vmatprep.subr.mxu0 0.0
        %1775 = vmatpush1.msra.mxu0 0.0
        %1776 = vmatprep.subr.mxu0 0.0
        %1777 = vmatpush1.msra.mxu0 0.0
        %1778 = vmatprep.subr.mxu0 0.0
        %1779 = vmatpush1.msra.mxu0 0.0
        %1780 = vmatprep.subr.mxu0 0.0
        %1781 = vmatpush1.msra.mxu0 0.0
        %1782 = vmatprep.mubr.f32.mxu0 %v1713
        %1783 = vmatmul.mubr.f32.gmra.mrb[0].mxu0 %v1684
        %v1784 = vpop.f32.mrb[0].mxu0
        %v1785 = vadd.f32 0.0, %v1784
        %v1786 = vpop.f32.mrb[0].mxu0
        %1787 = vdwg.mxu0
        %v1788 = vadd.f32 %v1531, %v1785
        %v1789 = vmul.f32 %v1788, %v1788
        %v1790 = vld [vmem:[%s5] sm:$0xff]
        %v1791 = vld [vmem:[%s5 + $0x8] sm:$0xff]
        %v1792 = vld [vmem:[%s5 + $0x10] sm:$0xff]
        %v1793 = vld [vmem:[%s5 + $0x18] sm:$0xff]
        %v1794 = vld [vmem:[%s5 + $0x20] sm:$0xff]
        %v1795 = vld [vmem:[%s5 + $0x28] sm:$0xff]
        %v1796 = vld [vmem:[%s5 + $0x30] sm:$0xff]
        %v1797 = vld [vmem:[%s5 + $0x38] sm:$0xff]
        %v1798 = vld [vmem:[%s5 + $0x40] sm:$0xff]
        %v1799 = vld [vmem:[%s5 + $0x48] sm:$0xff]
        %v1800 = vld [vmem:[%s5 + $0x50] sm:$0xff]
        %v1801 = vld [vmem:[%s5 + $0x58] sm:$0xff]
        %v1802 = vld [vmem:[%s5 + $0x60] sm:$0xff]
        %v1803 = vld [vmem:[%s5 + $0x68] sm:$0xff]
        %v1804 = vld [vmem:[%s5 + $0x70] sm:$0xff]
        %v1805 = vld [vmem:[%s5 + $0x78] sm:$0xff]
        %v1806 = vld [vmem:[%s6] sm:$0x1]
        %v1808 = vlaneseq
        %v1809 = vshrl.u32 %v1808, 7
        %v1810 = vsub.s32 0, %v1809
        %v1811 = vrot.slane %v1806, %v1810
        %1813 = vmatprep.subr.mxu0 0.0
        %1814 = vmatpush1.msra.mxu0 %v1790
        %1815 = vmatprep.subr.mxu0 0.0
        %1816 = vmatpush1.msra.mxu0 %v1791
        %1817 = vmatprep.subr.mxu0 0.0
        %1818 = vmatpush1.msra.mxu0 %v1792
        %1819 = vmatprep.subr.mxu0 0.0
        %1820 = vmatpush1.msra.mxu0 %v1793
        %1821 = vmatprep.subr.mxu0 0.0
        %1822 = vmatpush1.msra.mxu0 %v1794
        %1823 = vmatprep.subr.mxu0 0.0
        %1824 = vmatpush1.msra.mxu0 %v1795
        %1825 = vmatprep.subr.mxu0 0.0
        %1826 = vmatpush1.msra.mxu0 %v1796
        %1827 = vmatprep.subr.mxu0 0.0
        %1828 = vmatpush1.msra.mxu0 %v1797
        %1829 = vmatprep.subr.mxu0 0.0
        %1830 = vmatpush1.msra.mxu0 %v1798
        %1831 = vmatprep.subr.mxu0 0.0
        %1832 = vmatpush1.msra.mxu0 %v1799
        %1833 = vmatprep.subr.mxu0 0.0
        %1834 = vmatpush1.msra.mxu0 %v1800
        %1835 = vmatprep.subr.mxu0 0.0
        %1836 = vmatpush1.msra.mxu0 %v1801
        %1837 = vmatprep.subr.mxu0 0.0
        %1838 = vmatpush1.msra.mxu0 %v1802
        %1839 = vmatprep.subr.mxu0 0.0
        %1840 = vmatpush1.msra.mxu0 %v1803
        %1841 = vmatprep.subr.mxu0 0.0
        %1842 = vmatpush1.msra.mxu0 %v1804
        %1843 = vmatprep.subr.mxu0 0.0
        %1844 = vmatpush1.msra.mxu0 %v1805
        %1845 = vmatprep.subr.mxu0 0.0
        %1846 = vmatpush1.msra.mxu0 0.0
        %1847 = vmatprep.subr.mxu0 0.0
        %1848 = vmatpush1.msra.mxu0 0.0
        %1849 = vmatprep.subr.mxu0 0.0
        %1850 = vmatpush1.msra.mxu0 0.0
        %1851 = vmatprep.subr.mxu0 0.0
        %1852 = vmatpush1.msra.mxu0 0.0
        %1853 = vmatprep.subr.mxu0 0.0
        %1854 = vmatpush1.msra.mxu0 0.0
        %1855 = vmatprep.subr.mxu0 0.0
        %1856 = vmatpush1.msra.mxu0 0.0
        %1857 = vmatprep.subr.mxu0 0.0
        %1858 = vmatpush1.msra.mxu0 0.0
        %1859 = vmatprep.subr.mxu0 0.0
        %1860 = vmatpush1.msra.mxu0 0.0
        %1861 = vmatprep.subr.mxu0 0.0
        %1862 = vmatpush1.msra.mxu0 0.0
        %1863 = vmatprep.subr.mxu0 0.0
        %1864 = vmatpush1.msra.mxu0 0.0
        %1865 = vmatprep.subr.mxu0 0.0
        %1866 = vmatpush1.msra.mxu0 0.0
        %1867 = vmatprep.subr.mxu0 0.0
        %1868 = vmatpush1.msra.mxu0 0.0
        %1869 = vmatprep.subr.mxu0 0.0
        %1870 = vmatpush1.msra.mxu0 0.0
        %1871 = vmatprep.subr.mxu0 0.0
        %1872 = vmatpush1.msra.mxu0 0.0
        %1873 = vmatprep.subr.mxu0 0.0
        %1874 = vmatpush1.msra.mxu0 0.0
        %1875 = vmatprep.subr.mxu0 0.0
        %1876 = vmatpush1.msra.mxu0 0.0
        %1877 = vmatprep.mubr.f32.mxu0 0.0
        %1878 = vmatmul.mubr.f32.gmra.mrb[0].mxu0 %v1789
        %v1879 = vpop.f32.mrb[0].mxu0
        %v1880 = vadd.f32 %v1811, %v1879
        %v1881 = vpop.f32.mrb[0].mxu0
        %1882 = vdwg.mxu0
        %1883 = vst [vmem:[%s421] sm:$0xff] %v1880
        %p1884 = scmp.lt.s32.totalorder %s20, 2
        %s1885 = scalar_select %p1884, %s20, 2
        %s1886 = smul.addr %s1885, 8
        %s1887 = scalar_lea.vmem %s7, %s1886
        // Predicated region
        $region80: #{_lambda_.1} parent=66 // pred_check
          %p1888 = pneg %p190
        $region81: #{_lambda_.1} parent=66 // pred_check_branch
          %1890 = sbr.rel (%p1888) target = $region83
        $region82: #{_lambda_.1} parent=66 // pred_region
          _
        $region83: #{_lambda_.1} parent=66 // pred_fallthru
          _
      $region67: #{_lambda_.1} parent=5 // pred_fallthru
        _
      %p1891 = scmp.le.s32.totalorder 2, %s15
      // Predicated region
      $region84: #{_lambda_.1} parent=5 // pred_check
        %p1892 = pneg %p1891
      $region85: #{_lambda_.1} parent=5 // pred_check_branch
        %1894 = sbr.rel (%p1892) target = $region87
      $region86: #{_lambda_.1} parent=5 // pred_region
        %s1895 = ssub.s32 %s15, 2
        // Predicated region
        $region88: #{_lambda_.1} parent=86 // pred_check
          %p1896 = pneg %p196
        $region89: #{_lambda_.1} parent=86 // pred_check_branch
          %1898 = sbr.rel (%p1896) target = $region91
        $region90: #{_lambda_.1} parent=86 // pred_region
          %p1899 = scmp.lt.s32.totalorder %s21, 2
          %s1900 = scalar_select %p1899, %s21, 2
          %s1901 = smul.addr %s1900, 8
          %s1902 = scalar_lea.vmem %s7, %s1901
        $region91: #{_lambda_.1} parent=86 // pred_fallthru
          _
      $region87: #{_lambda_.1} parent=5 // pred_fallthru
        _
    $region6: #{_lambda_.1} parent=1 // loop_footer
      %s19 = sadd.s32 1, %s15
    $region7: #{_lambda_.1} parent=1 // loop_footer_branch
      %14 = sbr.rel target = $region3
    $region8: #{_lambda_.1} parent=1 // loop_exit
      _
    %1903 = vsyncpa [#allocation4], 1
    %s1904 = scalar_lea.sflag [#allocation4], 1
    %1905 = vsyncpa %s1904, 1
    %1906 = vsyncpa [#allocation6], 1

</llo_original>
